<compile_context>
chip_gen: v6e
topology: v6e:2x2x1
jax: 0.10.0
libtpu: 0.0.40
codegen_flags: <defaults>
</compile_context>

<pallas_src>
import functools

import numpy as np
import jax
import jax.numpy as jnp
from jax.experimental import pallas as pl
from jax.experimental.pallas import tpu as pltpu

EPS = 1e-5  # PyTorch BatchNorm2d default eps


# ------------------------------ fused Pallas kernel ------------------------------
def _fused_upconv_kernel(x_ref, sk_ref,
                         tup_ref, bup_ref,
                         tsk_ref, bsk_ref,
                         t1a_ref, t1b_ref, b1_ref,
                         t2_ref, b2_ref,
                         o_ref,
                         updil, up_pad, sk_pad, y1_pad,
                         *, Hin, H, s, off, k_up, Bt):
    WC = o_ref.shape[-1]          # W * d_out (lane-dense, multiple of 128 at demo shape)
    WCs = sk_ref.shape[-1]        # W * d
    Kup = updil.shape[-1]         # Win * d_in
    M = Bt * H

    # ---- stage 1: up = ReLU(BN(ConvTranspose2d(x))) -> up_pad (H-reflect padded) ----
    # Build the H-dilated (W-compressed) lhs in scratch; W-dilation/pad is folded into
    # the Toeplitz offline, so the contraction is only Win*d_in wide.
    updil[...] = jnp.zeros_like(updil)
    for i in range(Hin):                                   # static, Hin row stores
        r = off + s * i
        updil[:, r:r + 1, :] = x_ref[:, i:i + 1, :]
    acc = jnp.zeros((M, WC), jnp.float32)
    for kh in range(k_up):                                 # static, k taps
        lhs = updil[:, kh:kh + H, :].reshape(M, Kup)
        acc = acc + jnp.dot(lhs, tup_ref[kh], preferred_element_type=jnp.float32)
    up = jnp.maximum(acc + bup_ref[...], 0.0).reshape(Bt, H, WC)
    up_pad[:, 1:H + 1, :] = up
    up_pad[:, 0:1, :] = up[:, 1:2, :]                      # reflect rows (H direction)
    up_pad[:, H + 1:H + 2, :] = up[:, H - 2:H - 1, :]

    # ---- stage 2: skip_o = ReLU(BN(Conv2d_1x1(skip))) -> sk_pad ----
    sk = jnp.maximum(
        jnp.dot(sk_ref[...].reshape(M, WCs), tsk_ref[0],
                preferred_element_type=jnp.float32) + bsk_ref[...], 0.0
    ).reshape(Bt, H, WCs)
    sk_pad[:, 1:H + 1, :] = sk
    sk_pad[:, 0:1, :] = sk[:, 1:2, :]
    sk_pad[:, H + 1:H + 2, :] = sk[:, H - 2:H - 1, :]

    # ---- stage 3: y1 = ReLU(BN(conv1(cat([up, skip_o])))) -> y1_pad ----
    # Channel concat is never materialized: split Toeplitz weights, two matmuls per tap.
    acc1 = jnp.zeros((M, WC), jnp.float32)
    for kh in range(3):
        acc1 = acc1 + jnp.dot(up_pad[:, kh:kh + H, :].reshape(M, WC), t1a_ref[kh],
                              preferred_element_type=jnp.float32)
        acc1 = acc1 + jnp.dot(sk_pad[:, kh:kh + H, :].reshape(M, WCs), t1b_ref[kh],
                              preferred_element_type=jnp.float32)
    y1 = jnp.maximum(acc1 + b1_ref[...], 0.0)
    y1_3d = y1.reshape(Bt, H, WC)
    y1_pad[:, 1:H + 1, :] = y1_3d
    y1_pad[:, 0:1, :] = y1_3d[:, 1:2, :]
    y1_pad[:, H + 1:H + 2, :] = y1_3d[:, H - 2:H - 1, :]

    # ---- stage 4: out = y1 + ReLU(BN(conv2(y1))) (residual fused) ----
    acc2 = jnp.zeros((M, WC), jnp.float32)
    for kh in range(3):
        acc2 = acc2 + jnp.dot(y1_pad[:, kh:kh + H, :].reshape(M, WC), t2_ref[kh],
                              preferred_element_type=jnp.float32)
    o_ref[...] = (y1 + jnp.maximum(acc2 + b2_ref[...], 0.0)).reshape(Bt, H, WC)


# --------------------- one-time weight preprocessing (numpy, hoisted) ---------------------
def _fold_bn_np(conv_b, bn):
    g, beta, mean, var = (np.asarray(a, np.float32) for a in bn)
    scale = g / np.sqrt(var + EPS)
    bias = (np.asarray(conv_b, np.float32) - mean) * scale + beta
    return scale, bias


def _toeplitz_deconv(w, win, wout, pad, stride):
    """ConvTranspose-as-conv row Toeplitz with the zero (dilated) columns compressed out.
    w: (k, k, cin, cout) flipped kernel.  Maps an undilated input row (win*cin) to an
    output row (wout*cout) for each kernel row kh."""
    khn, kwn, cin, cout = w.shape
    t = np.zeros((khn, win, cin, wout, cout), np.float32)
    for x in range(wout):
        for kw in range(kwn):
            q = x + kw - pad
            if q % stride == 0 and 0 <= q // stride < win:
                t[:, q // stride, :, x, :] += w[:, kw]
    return t.reshape(khn, win * cin, wout * cout)


def _toeplitz_reflect3(w, wdim):
    """3x3 conv row Toeplitz with the W-direction reflect padding folded in."""
    khn, kwn, cin, cout = w.shape
    t = np.zeros((khn, wdim, cin, wdim, cout), np.float32)
    for x in range(wdim):
        for kw in range(kwn):
            jp = x + kw                                 # column in the reflect-padded row
            src = 1 if jp == 0 else (wdim - 2 if jp == wdim + 1 else jp - 1)
            t[:, src, :, x, :] += w[:, kw]
    return t.reshape(khn, wdim * cin, wdim * cout)


def _toeplitz_1x1(wsk, wdim):
    cin, cout = wsk.shape
    t = np.zeros((1, wdim, cin, wdim, cout), np.float32)
    for x in range(wdim):
        t[0, x, :, x, :] = wsk
    return t.reshape(1, wdim * cin, wdim * cout)


def _scale_cols(t, scale, wdim):
    """Fold per-output-channel BN scale into the Toeplitz output columns."""
    return t * np.tile(scale, wdim)[None, None, :]


def preprocess_params(P, *, k, s, p, in_shape, skip_shape):
    """Hoisted, one-time transform of the PyTorch parameters into kernel operands."""
    _, d_in, Hin, Win = in_shape
    _, d, H, W = skip_shape
    d_out = np.asarray(P["up_w"]).shape[1]
    pad_up = k - 1 - p

    # up: ConvTranspose2d == stride-1 conv with flipped kernel on dilated input
    w_up = np.flip(np.asarray(P["up_w"], np.float32), (2, 3)).transpose(2, 3, 0, 1)
    sc, bi = _fold_bn_np(P["up_b"], P["up_bn"])
    t_up = _scale_cols(_toeplitz_deconv(w_up, Win, W, pad_up, s), sc, W)
    b_up = np.tile(bi, W)[None]

    # skip: 1x1 conv
    w_sk = np.asarray(P["sk_w"], np.float32)[:, :, 0, 0].T        # (cin, cout)
    sc, bi = _fold_bn_np(P["sk_b"], P["sk_bn"])
    t_sk = _scale_cols(_toeplitz_1x1(w_sk, W), sc, W)
    b_sk = np.tile(bi, W)[None]

    # conv1 over cat([up, skip]): split the input-channel dim into two Toeplitz sets
    w1 = np.asarray(P["c1_w"], np.float32).transpose(2, 3, 1, 0)  # (3,3,cin_total,cout)
    sc, bi = _fold_bn_np(P["c1_b"], P["c1_bn"])
    t1a = _scale_cols(_toeplitz_reflect3(w1[:, :, :d_out, :], W), sc, W)
    t1b = _scale_cols(_toeplitz_reflect3(w1[:, :, d_out:, :], W), sc, W)
    b1 = np.tile(bi, W)[None]

    # conv2
    w2 = np.asarray(P["c2_w"], np.float32).transpose(2, 3, 1, 0)
    sc, bi = _fold_bn_np(P["c2_b"], P["c2_bn"])
    t2 = _scale_cols(_toeplitz_reflect3(w2, W), sc, W)
    b2 = np.tile(bi, W)[None]

    pre = dict(t_up=t_up, b_up=b_up, t_sk=t_sk, b_sk=b_sk,
               t1a=t1a, t1b=t1b, b1=b1, t2=t2, b2=b2)
    return {kk: jnp.asarray(v) for kk, v in pre.items()}


# ----------------------------------- wrapper --------------------------------------
def _pick_btile(B, H, m_target=256):
    """Largest batch tile that keeps matmul M <= m_target and >=2 grid steps (v7x TCs)."""
    best = 1
    for t in range(1, B + 1):
        if B % t == 0 and t * H <= m_target and B // t >= 2:
            best = t
    return best


def upconv_block_apply(x, skip, pre, *, k, s, p):
    """x: (B, d_in, Hin, Win), skip: (B, d, H, W) NCHW f32 -> (B, d_out, H, W)."""
    B, d_in, Hin, Win = x.shape
    _, d, H, W = skip.shape
    d_out = pre["t_up"].shape[-1] // W
    assert H == (Hin - 1) * s - 2 * p + k and W == (Win - 1) * s - 2 * p + k

    x_flat = x.transpose(0, 2, 3, 1).reshape(B, Hin, Win * d_in)
    sk_flat = skip.transpose(0, 2, 3, 1).reshape(B, H, W * d)

    bt = _pick_btile(B, H)
    hp_up = (Hin - 1) * s + 1 + 2 * (k - 1 - p)            # dilated + padded rows

    # Static VMEM estimate (weights double-buffered + IO + scratch + margin).
    # NOTE: the resident Toeplitz is O(W^2); for large feature maps tile the output
    # (W*Cout) dim with an extra grid axis instead of growing this limit.
    w_bytes = 4 * sum(int(np.prod(v.shape)) for v in pre.values())
    io_bytes = 4 * bt * (Hin * Win * d_in + 2 * H * W * d_out + H * W * d)
    scr_bytes = 4 * bt * (hp_up * Win * d_in + (H + 2) * (2 * W * d_out + W * d))
    vmem_bytes = int(min(64 << 20, max(32 << 20,
                                       2 * (w_bytes + io_bytes) + scr_bytes + (4 << 20))))

    out_flat = pl.pallas_call(
        functools.partial(_fused_upconv_kernel, Hin=Hin, H=H, s=s,
                          off=k - 1 - p, k_up=k, Bt=bt),
        grid=(B // bt,),
        in_specs=[
            pl.BlockSpec((bt, Hin, Win * d_in), lambda b: (b, 0, 0)),
            pl.BlockSpec((bt, H, W * d), lambda b: (b, 0, 0)),
            pl.BlockSpec(pre["t_up"].shape, lambda b: (0, 0, 0)),
            pl.BlockSpec(pre["b_up"].shape, lambda b: (0, 0)),
            pl.BlockSpec(pre["t_sk"].shape, lambda b: (0, 0, 0)),
            pl.BlockSpec(pre["b_sk"].shape, lambda b: (0, 0)),
            pl.BlockSpec(pre["t1a"].shape, lambda b: (0, 0, 0)),
            pl.BlockSpec(pre["t1b"].shape, lambda b: (0, 0, 0)),
            pl.BlockSpec(pre["b1"].shape, lambda b: (0, 0)),
            pl.BlockSpec(pre["t2"].shape, lambda b: (0, 0, 0)),
            pl.BlockSpec(pre["b2"].shape, lambda b: (0, 0)),
        ],
        out_specs=pl.BlockSpec((bt, H, W * d_out), lambda b: (b, 0, 0)),
        out_shape=jax.ShapeDtypeStruct((B, H, W * d_out), jnp.float32),
        scratch_shapes=[
            pltpu.VMEM((bt, hp_up, Win * d_in), jnp.float32),   # H-dilated deconv input
            pltpu.VMEM((bt, H + 2, W * d_out), jnp.float32),    # up   (H reflect padded)
            pltpu.VMEM((bt, H + 2, W * d), jnp.float32),        # skip (H reflect padded)
            pltpu.VMEM((bt, H + 2, W * d_out), jnp.float32),    # y1   (H reflect padded)
        ],
        compiler_params=pltpu.CompilerParams(
            dimension_semantics=("parallel",),
            vmem_limit_bytes=vmem_bytes),
    )(x_flat, sk_flat, pre["t_up"], pre["b_up"], pre["t_sk"], pre["b_sk"],
      pre["t1a"], pre["t1b"], pre["b1"], pre["t2"], pre["b2"])

    # Kept only to match the module's NCHW interface; drop if the consumer takes NHWC.
    return out_flat.reshape(B, H, W, d_out).transpose(0, 3, 1, 2)


# --------------------------- pure-JAX reference ---------------------------------
def upconv_ref(x, skip, P, *, k, s, p):
    dn = ("NCHW", "OIHW", "NCHW")
    hp = jax.lax.Precision.HIGHEST

    def bn_relu(y, conv_b, bn_p):
        g, be, mu, var = bn_p
        sc = g / jnp.sqrt(var + EPS)
        bi = (conv_b - mu) * sc + be
        return jax.nn.relu(y * sc[None, :, None, None] + bi[None, :, None, None])

    w_conv = jnp.flip(P["up_w"], (2, 3)).transpose(1, 0, 2, 3)
    pad = k - 1 - p
    up = jax.lax.conv_general_dilated(x, w_conv, (1, 1), [(pad, pad), (pad, pad)],
                                      lhs_dilation=(s, s), dimension_numbers=dn,
                                      precision=hp)
    up = bn_relu(up, P["up_b"], P["up_bn"])

    sk = jax.lax.conv_general_dilated(skip, P["sk_w"], (1, 1), [(0, 0), (0, 0)],
                                      dimension_numbers=dn, precision=hp)
    sk = bn_relu(sk, P["sk_b"], P["sk_bn"])

    cat = jnp.concatenate([up, sk], axis=1)
    catp = jnp.pad(cat, ((0, 0), (0, 0), (1, 1), (1, 1)), mode="reflect")
    y1 = jax.lax.conv_general_dilated(catp, P["c1_w"], (1, 1), [(0, 0), (0, 0)],
                                      dimension_numbers=dn, precision=hp)
    y1 = bn_relu(y1, P["c1_b"], P["c1_bn"])

    y1p = jnp.pad(y1, ((0, 0), (0, 0), (1, 1), (1, 1)), mode="reflect")
    y2 = jax.lax.conv_general_dilated(y1p, P["c2_w"], (1, 1), [(0, 0), (0, 0)],
                                      dimension_numbers=dn, precision=hp)
    y2 = bn_relu(y2, P["c2_b"], P["c2_bn"])
    return y1 + y2


# ----------------------------------- main ----------------------------------------
if __name__ == "__main__":
    B, d_in, d_out, k, s, p = 2, 32, 16, 4, 2, 1
    Hin = Win = 8
    d = d_out                                        # d_skip=None -> d = d_out
    H = W = (Hin - 1) * s - 2 * p + k                # 16

    keys = iter(jax.random.split(jax.random.PRNGKey(0), 32))

    def nrm(shape, scale=0.1):
        return scale * jax.random.normal(next(keys), shape, jnp.float32)

    def bn_params(c):
        return (1.0 + 0.1 * jax.random.normal(next(keys), (c,), jnp.float32),   # gamma
                0.1 * jax.random.normal(next(keys), (c,), jnp.float32),          # beta
                0.1 * jax.random.normal(next(keys), (c,), jnp.float32),          # run. mean
                0.5 + jax.random.uniform(next(keys), (c,), jnp.float32))         # run. var

    x = jax.random.normal(next(keys), (B, d_in, Hin, Win), jnp.float32)
    skip = jax.random.normal(next(keys), (B, d, H, W), jnp.float32)

    P = dict(
        up_w=nrm((d_in, d_out, k, k)), up_b=nrm((d_out,)), up_bn=bn_params(d_out),
        sk_w=nrm((d, d, 1, 1)),        sk_b=nrm((d,)),     sk_bn=bn_params(d),
        c1_w=nrm((d_out, d_out + d, 3, 3)), c1_b=nrm((d_out,)), c1_bn=bn_params(d_out),
        c2_w=nrm((d_out, d_out, 3, 3)),     c2_b=nrm((d_out,)), c2_bn=bn_params(d_out),
    )

    # One-time weight preprocessing (Toeplitz + BN folding), hoisted out of the hot path.
    pre = preprocess_params(P, k=k, s=s, p=p, in_shape=x.shape, skip_shape=skip.shape)

    apply_fn = jax.jit(functools.partial(upconv_block_apply, k=k, s=s, p=p))
    out = jax.block_until_ready(apply_fn(x, skip, pre))

    ref = upconv_ref(x, skip, P, k=k, s=s, p=p)
    assert out.shape == (B, d_out, H, W), out.shape
    assert jnp.allclose(out, ref, atol=1e-3, rtol=1e-3), float(jnp.max(jnp.abs(out - ref)))

    print("KERNEL_OK")
</pallas_src>

<mosaic_0001>
module attributes {stable_mosaic.version = 11 : i64} {
  func.func @_fused_upconv_kernel(%arg0: i32, %arg1: memref<1x8x256xf32, #tpu.memory_space<vmem>>, %arg2: memref<1x16x256xf32, #tpu.memory_space<vmem>>, %arg3: memref<4x256x256xf32, #tpu.memory_space<vmem>>, %arg4: memref<1x256xf32, #tpu.memory_space<vmem>>, %arg5: memref<1x256x256xf32, #tpu.memory_space<vmem>>, %arg6: memref<1x256xf32, #tpu.memory_space<vmem>>, %arg7: memref<3x256x256xf32, #tpu.memory_space<vmem>>, %arg8: memref<3x256x256xf32, #tpu.memory_space<vmem>>, %arg9: memref<1x256xf32, #tpu.memory_space<vmem>>, %arg10: memref<3x256x256xf32, #tpu.memory_space<vmem>>, %arg11: memref<1x256xf32, #tpu.memory_space<vmem>>, %arg12: memref<1x16x256xf32, #tpu.memory_space<vmem>>, %arg13: memref<1x19x256xf32, #tpu.memory_space<vmem>>, %arg14: memref<1x18x256xf32, #tpu.memory_space<vmem>>, %arg15: memref<1x18x256xf32, #tpu.memory_space<vmem>>, %arg16: memref<1x18x256xf32, #tpu.memory_space<vmem>>) attributes {dimension_semantics = [#tpu.dimension_semantics<parallel>], iteration_bounds = array<i64: 2>, scalar_prefetch = 0 : i64, scratch_operands = 4 : i64, tpu.core_type = #tpu.core_type<tc>, window_params = [{transform_indices = @transform_0, window_bounds = array<i64: 1, 8, 256>}, {transform_indices = @transform_1, window_bounds = array<i64: 1, 16, 256>}, {pipeline_mode = #tpu.pipeline_mode<synchronous>, transform_indices = @transform_2, window_bounds = array<i64: 4, 256, 256>}, {pipeline_mode = #tpu.pipeline_mode<synchronous>, transform_indices = @transform_3, window_bounds = array<i64: 1, 256>}, {pipeline_mode = #tpu.pipeline_mode<synchronous>, transform_indices = @transform_4, window_bounds = array<i64: 1, 256, 256>}, {pipeline_mode = #tpu.pipeline_mode<synchronous>, transform_indices = @transform_5, window_bounds = array<i64: 1, 256>}, {pipeline_mode = #tpu.pipeline_mode<synchronous>, transform_indices = @transform_6, window_bounds = array<i64: 3, 256, 256>}, {pipeline_mode = #tpu.pipeline_mode<synchronous>, transform_indices = @transform_7, window_bounds = array<i64: 3, 256, 256>}, {pipeline_mode = #tpu.pipeline_mode<synchronous>, transform_indices = @transform_8, window_bounds = array<i64: 1, 256>}, {pipeline_mode = #tpu.pipeline_mode<synchronous>, transform_indices = @transform_9, window_bounds = array<i64: 3, 256, 256>}, {pipeline_mode = #tpu.pipeline_mode<synchronous>, transform_indices = @transform_10, window_bounds = array<i64: 1, 256>}, {transform_indices = @transform_11, window_bounds = array<i64: 1, 16, 256>}]} {
    %cst = arith.constant 0.000000e+00 : f32
    %0 = vector.broadcast %cst : f32 to vector<1x19x256xf32>
    %c0 = arith.constant 0 : index
    %c0_0 = arith.constant 0 : index
    %c0_1 = arith.constant 0 : index
    %1 = vector.load %arg13[%c0, %c0_0, %c0_1] : memref<1x19x256xf32, #tpu.memory_space<vmem>>, vector<1x19x256xf32>
    tpu.vector_store %arg13[%c0, %c0_0, %c0_1], %0 {strides = array<i32>} : memref<1x19x256xf32, #tpu.memory_space<vmem>>, vector<1x19x256xf32>,
    %c0_2 = arith.constant 0 : index
    %c0_3 = arith.constant 0 : index
    %c0_4 = arith.constant 0 : index
    %2 = vector.load %arg1[%c0_2, %c0_3, %c0_4] : memref<1x8x256xf32, #tpu.memory_space<vmem>>, vector<1x1x256xf32>
    %c0_5 = arith.constant 0 : index
    %c2 = arith.constant 2 : index
    %c0_6 = arith.constant 0 : index
    %3 = vector.load %arg13[%c0_5, %c2, %c0_6] : memref<1x19x256xf32, #tpu.memory_space<vmem>>, vector<1x1x256xf32>
    tpu.vector_store %arg13[%c0_5, %c2, %c0_6], %2 {strides = array<i32>} : memref<1x19x256xf32, #tpu.memory_space<vmem>>, vector<1x1x256xf32>,
    %c0_7 = arith.constant 0 : index
    %c1 = arith.constant 1 : index
    %c0_8 = arith.constant 0 : index
    %4 = vector.load %arg1[%c0_7, %c1, %c0_8] : memref<1x8x256xf32, #tpu.memory_space<vmem>>, vector<1x1x256xf32>
    %c0_9 = arith.constant 0 : index
    %c4 = arith.constant 4 : index
    %c0_10 = arith.constant 0 : index
    %5 = vector.load %arg13[%c0_9, %c4, %c0_10] : memref<1x19x256xf32, #tpu.memory_space<vmem>>, vector<1x1x256xf32>
    tpu.vector_store %arg13[%c0_9, %c4, %c0_10], %4 {strides = array<i32>} : memref<1x19x256xf32, #tpu.memory_space<vmem>>, vector<1x1x256xf32>,
    %c0_11 = arith.constant 0 : index
    %c2_12 = arith.constant 2 : index
    %c0_13 = arith.constant 0 : index
    %6 = vector.load %arg1[%c0_11, %c2_12, %c0_13] : memref<1x8x256xf32, #tpu.memory_space<vmem>>, vector<1x1x256xf32>
    %c0_14 = arith.constant 0 : index
    %c6 = arith.constant 6 : index
    %c0_15 = arith.constant 0 : index
    %7 = vector.load %arg13[%c0_14, %c6, %c0_15] : memref<1x19x256xf32, #tpu.memory_space<vmem>>, vector<1x1x256xf32>
    tpu.vector_store %arg13[%c0_14, %c6, %c0_15], %6 {strides = array<i32>} : memref<1x19x256xf32, #tpu.memory_space<vmem>>, vector<1x1x256xf32>,
    %c0_16 = arith.constant 0 : index
    %c3 = arith.constant 3 : index
    %c0_17 = arith.constant 0 : index
    %8 = vector.load %arg1[%c0_16, %c3, %c0_17] : memref<1x8x256xf32, #tpu.memory_space<vmem>>, vector<1x1x256xf32>
    %c0_18 = arith.constant 0 : index
    %c8 = arith.constant 8 : index
    %c0_19 = arith.constant 0 : index
    %9 = vector.load %arg13[%c0_18, %c8, %c0_19] : memref<1x19x256xf32, #tpu.memory_space<vmem>>, vector<1x1x256xf32>
    tpu.vector_store %arg13[%c0_18, %c8, %c0_19], %8 {strides = array<i32>} : memref<1x19x256xf32, #tpu.memory_space<vmem>>, vector<1x1x256xf32>,
    %c0_20 = arith.constant 0 : index
    %c4_21 = arith.constant 4 : index
    %c0_22 = arith.constant 0 : index
    %10 = vector.load %arg1[%c0_20, %c4_21, %c0_22] : memref<1x8x256xf32, #tpu.memory_space<vmem>>, vector<1x1x256xf32>
    %c0_23 = arith.constant 0 : index
    %c10 = arith.constant 10 : index
    %c0_24 = arith.constant 0 : index
    %11 = vector.load %arg13[%c0_23, %c10, %c0_24] : memref<1x19x256xf32, #tpu.memory_space<vmem>>, vector<1x1x256xf32>
    tpu.vector_store %arg13[%c0_23, %c10, %c0_24], %10 {strides = array<i32>} : memref<1x19x256xf32, #tpu.memory_space<vmem>>, vector<1x1x256xf32>,
    %c0_25 = arith.constant 0 : index
    %c5 = arith.constant 5 : index
    %c0_26 = arith.constant 0 : index
    %12 = vector.load %arg1[%c0_25, %c5, %c0_26] : memref<1x8x256xf32, #tpu.memory_space<vmem>>, vector<1x1x256xf32>
    %c0_27 = arith.constant 0 : index
    %c12 = arith.constant 12 : index
    %c0_28 = arith.constant 0 : index
    %13 = vector.load %arg13[%c0_27, %c12, %c0_28] : memref<1x19x256xf32, #tpu.memory_space<vmem>>, vector<1x1x256xf32>
    tpu.vector_store %arg13[%c0_27, %c12, %c0_28], %12 {strides = array<i32>} : memref<1x19x256xf32, #tpu.memory_space<vmem>>, vector<1x1x256xf32>,
    %c0_29 = arith.constant 0 : index
    %c6_30 = arith.constant 6 : index
    %c0_31 = arith.constant 0 : index
    %14 = vector.load %arg1[%c0_29, %c6_30, %c0_31] : memref<1x8x256xf32, #tpu.memory_space<vmem>>, vector<1x1x256xf32>
    %c0_32 = arith.constant 0 : index
    %c14 = arith.constant 14 : index
    %c0_33 = arith.constant 0 : index
    %15 = vector.load %arg13[%c0_32, %c14, %c0_33] : memref<1x19x256xf32, #tpu.memory_space<vmem>>, vector<1x1x256xf32>
    tpu.vector_store %arg13[%c0_32, %c14, %c0_33], %14 {strides = array<i32>} : memref<1x19x256xf32, #tpu.memory_space<vmem>>, vector<1x1x256xf32>,
    %c0_34 = arith.constant 0 : index
    %c7 = arith.constant 7 : index
    %c0_35 = arith.constant 0 : index
    %16 = vector.load %arg1[%c0_34, %c7, %c0_35] : memref<1x8x256xf32, #tpu.memory_space<vmem>>, vector<1x1x256xf32>
    %c0_36 = arith.constant 0 : index
    %c16 = arith.constant 16 : index
    %c0_37 = arith.constant 0 : index
    %17 = vector.load %arg13[%c0_36, %c16, %c0_37] : memref<1x19x256xf32, #tpu.memory_space<vmem>>, vector<1x1x256xf32>
    tpu.vector_store %arg13[%c0_36, %c16, %c0_37], %16 {strides = array<i32>} : memref<1x19x256xf32, #tpu.memory_space<vmem>>, vector<1x1x256xf32>,
    %cst_38 = arith.constant 0.000000e+00 : f32
    %18 = vector.broadcast %cst_38 : f32 to vector<16x256xf32>
    %c0_39 = arith.constant 0 : index
    %c0_40 = arith.constant 0 : index
    %c0_41 = arith.constant 0 : index
    %19 = vector.load %arg13[%c0_39, %c0_40, %c0_41] : memref<1x19x256xf32, #tpu.memory_space<vmem>>, vector<1x16x256xf32>
    %20 = vector.shape_cast %19 : vector<1x16x256xf32> to vector<16x256xf32>
    %c0_42 = arith.constant 0 : index
    %c0_43 = arith.constant 0 : index
    %c0_44 = arith.constant 0 : index
    %21 = vector.load %arg3[%c0_42, %c0_43, %c0_44] : memref<4x256x256xf32, #tpu.memory_space<vmem>>, vector<1x256x256xf32>
    %22 = vector.shape_cast %21 : vector<1x256x256xf32> to vector<256x256xf32>
    %cst_45 = arith.constant dense<0.000000e+00> : vector<16x256xf32>
    %23 = tpu.matmul %20, %22, %cst_45 {dimension_numbers = #tpu.dot_dimension_numbers<[1], [0], [0], [1], [0, 0, 1, 1], [], []>} : vector<16x256xf32>, vector<256x256xf32>, vector<16x256xf32> -> vector<16x256xf32>
    %24 = arith.addf %18, %23 : vector<16x256xf32>
    %c0_46 = arith.constant 0 : index
    %c1_47 = arith.constant 1 : index
    %c0_48 = arith.constant 0 : index
    %25 = vector.load %arg13[%c0_46, %c1_47, %c0_48] : memref<1x19x256xf32, #tpu.memory_space<vmem>>, vector<1x16x256xf32>
    %26 = vector.shape_cast %25 : vector<1x16x256xf32> to vector<16x256xf32>
    %c1_49 = arith.constant 1 : index
    %c0_50 = arith.constant 0 : index
    %c0_51 = arith.constant 0 : index
    %27 = vector.load %arg3[%c1_49, %c0_50, %c0_51] : memref<4x256x256xf32, #tpu.memory_space<vmem>>, vector<1x256x256xf32>
    %28 = vector.shape_cast %27 : vector<1x256x256xf32> to vector<256x256xf32>
    %cst_52 = arith.constant dense<0.000000e+00> : vector<16x256xf32>
    %29 = tpu.matmul %26, %28, %cst_52 {dimension_numbers = #tpu.dot_dimension_numbers<[1], [0], [0], [1], [0, 0, 1, 1], [], []>} : vector<16x256xf32>, vector<256x256xf32>, vector<16x256xf32> -> vector<16x256xf32>
    %30 = arith.addf %24, %29 : vector<16x256xf32>
    %c0_53 = arith.constant 0 : index
    %c2_54 = arith.constant 2 : index
    %c0_55 = arith.constant 0 : index
    %31 = vector.load %arg13[%c0_53, %c2_54, %c0_55] : memref<1x19x256xf32, #tpu.memory_space<vmem>>, vector<1x16x256xf32>
    %32 = vector.shape_cast %31 : vector<1x16x256xf32> to vector<16x256xf32>
    %c2_56 = arith.constant 2 : index
    %c0_57 = arith.constant 0 : index
    %c0_58 = arith.constant 0 : index
    %33 = vector.load %arg3[%c2_56, %c0_57, %c0_58] : memref<4x256x256xf32, #tpu.memory_space<vmem>>, vector<1x256x256xf32>
    %34 = vector.shape_cast %33 : vector<1x256x256xf32> to vector<256x256xf32>
    %cst_59 = arith.constant dense<0.000000e+00> : vector<16x256xf32>
    %35 = tpu.matmul %32, %34, %cst_59 {dimension_numbers = #tpu.dot_dimension_numbers<[1], [0], [0], [1], [0, 0, 1, 1], [], []>} : vector<16x256xf32>, vector<256x256xf32>, vector<16x256xf32> -> vector<16x256xf32>
    %36 = arith.addf %30, %35 : vector<16x256xf32>
    %c0_60 = arith.constant 0 : index
    %c3_61 = arith.constant 3 : index
    %c0_62 = arith.constant 0 : index
    %37 = vector.load %arg13[%c0_60, %c3_61, %c0_62] : memref<1x19x256xf32, #tpu.memory_space<vmem>>, vector<1x16x256xf32>
    %38 = vector.shape_cast %37 : vector<1x16x256xf32> to vector<16x256xf32>
    %c3_63 = arith.constant 3 : index
    %c0_64 = arith.constant 0 : index
    %c0_65 = arith.constant 0 : index
    %39 = vector.load %arg3[%c3_63, %c0_64, %c0_65] : memref<4x256x256xf32, #tpu.memory_space<vmem>>, vector<1x256x256xf32>
    %40 = vector.shape_cast %39 : vector<1x256x256xf32> to vector<256x256xf32>
    %cst_66 = arith.constant dense<0.000000e+00> : vector<16x256xf32>
    %41 = tpu.matmul %38, %40, %cst_66 {dimension_numbers = #tpu.dot_dimension_numbers<[1], [0], [0], [1], [0, 0, 1, 1], [], []>} : vector<16x256xf32>, vector<256x256xf32>, vector<16x256xf32> -> vector<16x256xf32>
    %42 = arith.addf %36, %41 : vector<16x256xf32>
    %c0_67 = arith.constant 0 : index
    %c0_68 = arith.constant 0 : index
    %43 = vector.load %arg4[%c0_67, %c0_68] : memref<1x256xf32, #tpu.memory_space<vmem>>, vector<1x256xf32>
    %44 = vector.broadcast %43 : vector<1x256xf32> to vector<16x256xf32>
    %45 = arith.addf %42, %44 : vector<16x256xf32>
    %cst_69 = arith.constant 0.000000e+00 : f32
    %46 = vector.broadcast %cst_69 : f32 to vector<16x256xf32>
    %47 = arith.maximumf %45, %46 : vector<16x256xf32>
    %48 = vector.shape_cast %47 : vector<16x256xf32> to vector<1x16x256xf32>
    %c0_70 = arith.constant 0 : index
    %c1_71 = arith.constant 1 : index
    %c0_72 = arith.constant 0 : index
    %49 = vector.load %arg14[%c0_70, %c1_71, %c0_72] : memref<1x18x256xf32, #tpu.memory_space<vmem>>, vector<1x16x256xf32>
    tpu.vector_store %arg14[%c0_70, %c1_71, %c0_72], %48 {strides = array<i32>} : memref<1x18x256xf32, #tpu.memory_space<vmem>>, vector<1x16x256xf32>,
    %50 = vector.extract_strided_slice %48 {offsets = [0, 1, 0], sizes = [1, 1, 256], strides = [1, 1, 1]} : vector<1x16x256xf32> to vector<1x1x256xf32>
    %c0_73 = arith.constant 0 : index
    %c0_74 = arith.constant 0 : index
    %c0_75 = arith.constant 0 : index
    %51 = vector.load %arg14[%c0_73, %c0_74, %c0_75] : memref<1x18x256xf32, #tpu.memory_space<vmem>>, vector<1x1x256xf32>
    tpu.vector_store %arg14[%c0_73, %c0_74, %c0_75], %50 {strides = array<i32>} : memref<1x18x256xf32, #tpu.memory_space<vmem>>, vector<1x1x256xf32>,
    %52 = vector.extract_strided_slice %48 {offsets = [0, 14, 0], sizes = [1, 1, 256], strides = [1, 1, 1]} : vector<1x16x256xf32> to vector<1x1x256xf32>
    %c0_76 = arith.constant 0 : index
    %c17 = arith.constant 17 : index
    %c0_77 = arith.constant 0 : index
    %53 = vector.load %arg14[%c0_76, %c17, %c0_77] : memref<1x18x256xf32, #tpu.memory_space<vmem>>, vector<1x1x256xf32>
    tpu.vector_store %arg14[%c0_76, %c17, %c0_77], %52 {strides = array<i32>} : memref<1x18x256xf32, #tpu.memory_space<vmem>>, vector<1x1x256xf32>,
    %c0_78 = arith.constant 0 : index
    %c0_79 = arith.constant 0 : index
    %c0_80 = arith.constant 0 : index
    %54 = vector.load %arg2[%c0_78, %c0_79, %c0_80] : memref<1x16x256xf32, #tpu.memory_space<vmem>>, vector<1x16x256xf32>
    %55 = vector.shape_cast %54 : vector<1x16x256xf32> to vector<16x256xf32>
    %c0_81 = arith.constant 0 : index
    %c0_82 = arith.constant 0 : index
    %c0_83 = arith.constant 0 : index
    %56 = vector.load %arg5[%c0_81, %c0_82, %c0_83] : memref<1x256x256xf32, #tpu.memory_space<vmem>>, vector<1x256x256xf32>
    %57 = vector.shape_cast %56 : vector<1x256x256xf32> to vector<256x256xf32>
    %cst_84 = arith.constant dense<0.000000e+00> : vector<16x256xf32>
    %58 = tpu.matmul %55, %57, %cst_84 {dimension_numbers = #tpu.dot_dimension_numbers<[1], [0], [0], [1], [0, 0, 1, 1], [], []>} : vector<16x256xf32>, vector<256x256xf32>, vector<16x256xf32> -> vector<16x256xf32>
    %c0_85 = arith.constant 0 : index
    %c0_86 = arith.constant 0 : index
    %59 = vector.load %arg6[%c0_85, %c0_86] : memref<1x256xf32, #tpu.memory_space<vmem>>, vector<1x256xf32>
    %60 = vector.broadcast %59 : vector<1x256xf32> to vector<16x256xf32>
    %61 = arith.addf %58, %60 : vector<16x256xf32>
    %cst_87 = arith.constant 0.000000e+00 : f32
    %62 = vector.broadcast %cst_87 : f32 to vector<16x256xf32>
    %63 = arith.maximumf %61, %62 : vector<16x256xf32>
    %64 = vector.shape_cast %63 : vector<16x256xf32> to vector<1x16x256xf32>
    %c0_88 = arith.constant 0 : index
    %c1_89 = arith.constant 1 : index
    %c0_90 = arith.constant 0 : index
    %65 = vector.load %arg15[%c0_88, %c1_89, %c0_90] : memref<1x18x256xf32, #tpu.memory_space<vmem>>, vector<1x16x256xf32>
    tpu.vector_store %arg15[%c0_88, %c1_89, %c0_90], %64 {strides = array<i32>} : memref<1x18x256xf32, #tpu.memory_space<vmem>>, vector<1x16x256xf32>,
    %66 = vector.extract_strided_slice %64 {offsets = [0, 1, 0], sizes = [1, 1, 256], strides = [1, 1, 1]} : vector<1x16x256xf32> to vector<1x1x256xf32>
    %c0_91 = arith.constant 0 : index
    %c0_92 = arith.constant 0 : index
    %c0_93 = arith.constant 0 : index
    %67 = vector.load %arg15[%c0_91, %c0_92, %c0_93] : memref<1x18x256xf32, #tpu.memory_space<vmem>>, vector<1x1x256xf32>
    tpu.vector_store %arg15[%c0_91, %c0_92, %c0_93], %66 {strides = array<i32>} : memref<1x18x256xf32, #tpu.memory_space<vmem>>, vector<1x1x256xf32>,
    %68 = vector.extract_strided_slice %64 {offsets = [0, 14, 0], sizes = [1, 1, 256], strides = [1, 1, 1]} : vector<1x16x256xf32> to vector<1x1x256xf32>
    %c0_94 = arith.constant 0 : index
    %c17_95 = arith.constant 17 : index
    %c0_96 = arith.constant 0 : index
    %69 = vector.load %arg15[%c0_94, %c17_95, %c0_96] : memref<1x18x256xf32, #tpu.memory_space<vmem>>, vector<1x1x256xf32>
    tpu.vector_store %arg15[%c0_94, %c17_95, %c0_96], %68 {strides = array<i32>} : memref<1x18x256xf32, #tpu.memory_space<vmem>>, vector<1x1x256xf32>,
    %cst_97 = arith.constant 0.000000e+00 : f32
    %70 = vector.broadcast %cst_97 : f32 to vector<16x256xf32>
    %c0_98 = arith.constant 0 : index
    %c0_99 = arith.constant 0 : index
    %c0_100 = arith.constant 0 : index
    %71 = vector.load %arg14[%c0_98, %c0_99, %c0_100] : memref<1x18x256xf32, #tpu.memory_space<vmem>>, vector<1x16x256xf32>
    %72 = vector.shape_cast %71 : vector<1x16x256xf32> to vector<16x256xf32>
    %c0_101 = arith.constant 0 : index
    %c0_102 = arith.constant 0 : index
    %c0_103 = arith.constant 0 : index
    %73 = vector.load %arg7[%c0_101, %c0_102, %c0_103] : memref<3x256x256xf32, #tpu.memory_space<vmem>>, vector<1x256x256xf32>
    %74 = vector.shape_cast %73 : vector<1x256x256xf32> to vector<256x256xf32>
    %cst_104 = arith.constant dense<0.000000e+00> : vector<16x256xf32>
    %75 = tpu.matmul %72, %74, %cst_104 {dimension_numbers = #tpu.dot_dimension_numbers<[1], [0], [0], [1], [0, 0, 1, 1], [], []>} : vector<16x256xf32>, vector<256x256xf32>, vector<16x256xf32> -> vector<16x256xf32>
    %76 = arith.addf %70, %75 : vector<16x256xf32>
    %c0_105 = arith.constant 0 : index
    %c0_106 = arith.constant 0 : index
    %c0_107 = arith.constant 0 : index
    %77 = vector.load %arg15[%c0_105, %c0_106, %c0_107] : memref<1x18x256xf32, #tpu.memory_space<vmem>>, vector<1x16x256xf32>
    %78 = vector.shape_cast %77 : vector<1x16x256xf32> to vector<16x256xf32>
    %c0_108 = arith.constant 0 : index
    %c0_109 = arith.constant 0 : index
    %c0_110 = arith.constant 0 : index
    %79 = vector.load %arg8[%c0_108, %c0_109, %c0_110] : memref<3x256x256xf32, #tpu.memory_space<vmem>>, vector<1x256x256xf32>
    %80 = vector.shape_cast %79 : vector<1x256x256xf32> to vector<256x256xf32>
    %cst_111 = arith.constant dense<0.000000e+00> : vector<16x256xf32>
    %81 = tpu.matmul %78, %80, %cst_111 {dimension_numbers = #tpu.dot_dimension_numbers<[1], [0], [0], [1], [0, 0, 1, 1], [], []>} : vector<16x256xf32>, vector<256x256xf32>, vector<16x256xf32> -> vector<16x256xf32>
    %82 = arith.addf %76, %81 : vector<16x256xf32>
    %c0_112 = arith.constant 0 : index
    %c1_113 = arith.constant 1 : index
    %c0_114 = arith.constant 0 : index
    %83 = vector.load %arg14[%c0_112, %c1_113, %c0_114] : memref<1x18x256xf32, #tpu.memory_space<vmem>>, vector<1x16x256xf32>
    %84 = vector.shape_cast %83 : vector<1x16x256xf32> to vector<16x256xf32>
    %c1_115 = arith.constant 1 : index
    %c0_116 = arith.constant 0 : index
    %c0_117 = arith.constant 0 : index
    %85 = vector.load %arg7[%c1_115, %c0_116, %c0_117] : memref<3x256x256xf32, #tpu.memory_space<vmem>>, vector<1x256x256xf32>
    %86 = vector.shape_cast %85 : vector<1x256x256xf32> to vector<256x256xf32>
    %cst_118 = arith.constant dense<0.000000e+00> : vector<16x256xf32>
    %87 = tpu.matmul %84, %86, %cst_118 {dimension_numbers = #tpu.dot_dimension_numbers<[1], [0], [0], [1], [0, 0, 1, 1], [], []>} : vector<16x256xf32>, vector<256x256xf32>, vector<16x256xf32> -> vector<16x256xf32>
    %88 = arith.addf %82, %87 : vector<16x256xf32>
    %c0_119 = arith.constant 0 : index
    %c1_120 = arith.constant 1 : index
    %c0_121 = arith.constant 0 : index
    %89 = vector.load %arg15[%c0_119, %c1_120, %c0_121] : memref<1x18x256xf32, #tpu.memory_space<vmem>>, vector<1x16x256xf32>
    %90 = vector.shape_cast %89 : vector<1x16x256xf32> to vector<16x256xf32>
    %c1_122 = arith.constant 1 : index
    %c0_123 = arith.constant 0 : index
    %c0_124 = arith.constant 0 : index
    %91 = vector.load %arg8[%c1_122, %c0_123, %c0_124] : memref<3x256x256xf32, #tpu.memory_space<vmem>>, vector<1x256x256xf32>
    %92 = vector.shape_cast %91 : vector<1x256x256xf32> to vector<256x256xf32>
    %cst_125 = arith.constant dense<0.000000e+00> : vector<16x256xf32>
    %93 = tpu.matmul %90, %92, %cst_125 {dimension_numbers = #tpu.dot_dimension_numbers<[1], [0], [0], [1], [0, 0, 1, 1], [], []>} : vector<16x256xf32>, vector<256x256xf32>, vector<16x256xf32> -> vector<16x256xf32>
    %94 = arith.addf %88, %93 : vector<16x256xf32>
    %c0_126 = arith.constant 0 : index
    %c2_127 = arith.constant 2 : index
    %c0_128 = arith.constant 0 : index
    %95 = vector.load %arg14[%c0_126, %c2_127, %c0_128] : memref<1x18x256xf32, #tpu.memory_space<vmem>>, vector<1x16x256xf32>
    %96 = vector.shape_cast %95 : vector<1x16x256xf32> to vector<16x256xf32>
    %c2_129 = arith.constant 2 : index
    %c0_130 = arith.constant 0 : index
    %c0_131 = arith.constant 0 : index
    %97 = vector.load %arg7[%c2_129, %c0_130, %c0_131] : memref<3x256x256xf32, #tpu.memory_space<vmem>>, vector<1x256x256xf32>
    %98 = vector.shape_cast %97 : vector<1x256x256xf32> to vector<256x256xf32>
    %cst_132 = arith.constant dense<0.000000e+00> : vector<16x256xf32>
    %99 = tpu.matmul %96, %98, %cst_132 {dimension_numbers = #tpu.dot_dimension_numbers<[1], [0], [0], [1], [0, 0, 1, 1], [], []>} : vector<16x256xf32>, vector<256x256xf32>, vector<16x256xf32> -> vector<16x256xf32>
    %100 = arith.addf %94, %99 : vector<16x256xf32>
    %c0_133 = arith.constant 0 : index
    %c2_134 = arith.constant 2 : index
    %c0_135 = arith.constant 0 : index
    %101 = vector.load %arg15[%c0_133, %c2_134, %c0_135] : memref<1x18x256xf32, #tpu.memory_space<vmem>>, vector<1x16x256xf32>
    %102 = vector.shape_cast %101 : vector<1x16x256xf32> to vector<16x256xf32>
    %c2_136 = arith.constant 2 : index
    %c0_137 = arith.constant 0 : index
    %c0_138 = arith.constant 0 : index
    %103 = vector.load %arg8[%c2_136, %c0_137, %c0_138] : memref<3x256x256xf32, #tpu.memory_space<vmem>>, vector<1x256x256xf32>
    %104 = vector.shape_cast %103 : vector<1x256x256xf32> to vector<256x256xf32>
    %cst_139 = arith.constant dense<0.000000e+00> : vector<16x256xf32>
    %105 = tpu.matmul %102, %104, %cst_139 {dimension_numbers = #tpu.dot_dimension_numbers<[1], [0], [0], [1], [0, 0, 1, 1], [], []>} : vector<16x256xf32>, vector<256x256xf32>, vector<16x256xf32> -> vector<16x256xf32>
    %106 = arith.addf %100, %105 : vector<16x256xf32>
    %c0_140 = arith.constant 0 : index
    %c0_141 = arith.constant 0 : index
    %107 = vector.load %arg9[%c0_140, %c0_141] : memref<1x256xf32, #tpu.memory_space<vmem>>, vector<1x256xf32>
    %108 = vector.broadcast %107 : vector<1x256xf32> to vector<16x256xf32>
    %109 = arith.addf %106, %108 : vector<16x256xf32>
    %cst_142 = arith.constant 0.000000e+00 : f32
    %110 = vector.broadcast %cst_142 : f32 to vector<16x256xf32>
    %111 = arith.maximumf %109, %110 : vector<16x256xf32>
    %112 = vector.shape_cast %111 : vector<16x256xf32> to vector<1x16x256xf32>
    %c0_143 = arith.constant 0 : index
    %c1_144 = arith.constant 1 : index
    %c0_145 = arith.constant 0 : index
    %113 = vector.load %arg16[%c0_143, %c1_144, %c0_145] : memref<1x18x256xf32, #tpu.memory_space<vmem>>, vector<1x16x256xf32>
    tpu.vector_store %arg16[%c0_143, %c1_144, %c0_145], %112 {strides = array<i32>} : memref<1x18x256xf32, #tpu.memory_space<vmem>>, vector<1x16x256xf32>,
    %114 = vector.extract_strided_slice %112 {offsets = [0, 1, 0], sizes = [1, 1, 256], strides = [1, 1, 1]} : vector<1x16x256xf32> to vector<1x1x256xf32>
    %c0_146 = arith.constant 0 : index
    %c0_147 = arith.constant 0 : index
    %c0_148 = arith.constant 0 : index
    %115 = vector.load %arg16[%c0_146, %c0_147, %c0_148] : memref<1x18x256xf32, #tpu.memory_space<vmem>>, vector<1x1x256xf32>
    tpu.vector_store %arg16[%c0_146, %c0_147, %c0_148], %114 {strides = array<i32>} : memref<1x18x256xf32, #tpu.memory_space<vmem>>, vector<1x1x256xf32>,
    %116 = vector.extract_strided_slice %112 {offsets = [0, 14, 0], sizes = [1, 1, 256], strides = [1, 1, 1]} : vector<1x16x256xf32> to vector<1x1x256xf32>
    %c0_149 = arith.constant 0 : index
    %c17_150 = arith.constant 17 : index
    %c0_151 = arith.constant 0 : index
    %117 = vector.load %arg16[%c0_149, %c17_150, %c0_151] : memref<1x18x256xf32, #tpu.memory_space<vmem>>, vector<1x1x256xf32>
    tpu.vector_store %arg16[%c0_149, %c17_150, %c0_151], %116 {strides = array<i32>} : memref<1x18x256xf32, #tpu.memory_space<vmem>>, vector<1x1x256xf32>,
    %cst_152 = arith.constant 0.000000e+00 : f32
    %118 = vector.broadcast %cst_152 : f32 to vector<16x256xf32>
    %c0_153 = arith.constant 0 : index
    %c0_154 = arith.constant 0 : index
    %c0_155 = arith.constant 0 : index
    %119 = vector.load %arg16[%c0_153, %c0_154, %c0_155] : memref<1x18x256xf32, #tpu.memory_space<vmem>>, vector<1x16x256xf32>
    %120 = vector.shape_cast %119 : vector<1x16x256xf32> to vector<16x256xf32>
    %c0_156 = arith.constant 0 : index
    %c0_157 = arith.constant 0 : index
    %c0_158 = arith.constant 0 : index
    %121 = vector.load %arg10[%c0_156, %c0_157, %c0_158] : memref<3x256x256xf32, #tpu.memory_space<vmem>>, vector<1x256x256xf32>
    %122 = vector.shape_cast %121 : vector<1x256x256xf32> to vector<256x256xf32>
    %cst_159 = arith.constant dense<0.000000e+00> : vector<16x256xf32>
    %123 = tpu.matmul %120, %122, %cst_159 {dimension_numbers = #tpu.dot_dimension_numbers<[1], [0], [0], [1], [0, 0, 1, 1], [], []>} : vector<16x256xf32>, vector<256x256xf32>, vector<16x256xf32> -> vector<16x256xf32>
    %124 = arith.addf %118, %123 : vector<16x256xf32>
    %c0_160 = arith.constant 0 : index
    %c1_161 = arith.constant 1 : index
    %c0_162 = arith.constant 0 : index
    %125 = vector.load %arg16[%c0_160, %c1_161, %c0_162] : memref<1x18x256xf32, #tpu.memory_space<vmem>>, vector<1x16x256xf32>
    %126 = vector.shape_cast %125 : vector<1x16x256xf32> to vector<16x256xf32>
    %c1_163 = arith.constant 1 : index
    %c0_164 = arith.constant 0 : index
    %c0_165 = arith.constant 0 : index
    %127 = vector.load %arg10[%c1_163, %c0_164, %c0_165] : memref<3x256x256xf32, #tpu.memory_space<vmem>>, vector<1x256x256xf32>
    %128 = vector.shape_cast %127 : vector<1x256x256xf32> to vector<256x256xf32>
    %cst_166 = arith.constant dense<0.000000e+00> : vector<16x256xf32>
    %129 = tpu.matmul %126, %128, %cst_166 {dimension_numbers = #tpu.dot_dimension_numbers<[1], [0], [0], [1], [0, 0, 1, 1], [], []>} : vector<16x256xf32>, vector<256x256xf32>, vector<16x256xf32> -> vector<16x256xf32>
    %130 = arith.addf %124, %129 : vector<16x256xf32>
    %c0_167 = arith.constant 0 : index
    %c2_168 = arith.constant 2 : index
    %c0_169 = arith.constant 0 : index
    %131 = vector.load %arg16[%c0_167, %c2_168, %c0_169] : memref<1x18x256xf32, #tpu.memory_space<vmem>>, vector<1x16x256xf32>
    %132 = vector.shape_cast %131 : vector<1x16x256xf32> to vector<16x256xf32>
    %c2_170 = arith.constant 2 : index
    %c0_171 = arith.constant 0 : index
    %c0_172 = arith.constant 0 : index
    %133 = vector.load %arg10[%c2_170, %c0_171, %c0_172] : memref<3x256x256xf32, #tpu.memory_space<vmem>>, vector<1x256x256xf32>
    %134 = vector.shape_cast %133 : vector<1x256x256xf32> to vector<256x256xf32>
    %cst_173 = arith.constant dense<0.000000e+00> : vector<16x256xf32>
    %135 = tpu.matmul %132, %134, %cst_173 {dimension_numbers = #tpu.dot_dimension_numbers<[1], [0], [0], [1], [0, 0, 1, 1], [], []>} : vector<16x256xf32>, vector<256x256xf32>, vector<16x256xf32> -> vector<16x256xf32>
    %136 = arith.addf %130, %135 : vector<16x256xf32>
    %c0_174 = arith.constant 0 : index
    %c0_175 = arith.constant 0 : index
    %137 = vector.load %arg11[%c0_174, %c0_175] : memref<1x256xf32, #tpu.memory_space<vmem>>, vector<1x256xf32>
    %138 = vector.broadcast %137 : vector<1x256xf32> to vector<16x256xf32>
    %139 = arith.addf %136, %138 : vector<16x256xf32>
    %cst_176 = arith.constant 0.000000e+00 : f32
    %140 = vector.broadcast %cst_176 : f32 to vector<16x256xf32>
    %141 = arith.maximumf %139, %140 : vector<16x256xf32>
    %142 = arith.addf %111, %141 : vector<16x256xf32>
    %143 = vector.shape_cast %142 : vector<16x256xf32> to vector<1x16x256xf32>
    %c0_177 = arith.constant 0 : index
    %c0_178 = arith.constant 0 : index
    %c0_179 = arith.constant 0 : index
    %144 = vector.load %arg12[%c0_177, %c0_178, %c0_179] : memref<1x16x256xf32, #tpu.memory_space<vmem>>, vector<1x16x256xf32>
    tpu.vector_store %arg12[%c0_177, %c0_178, %c0_179], %143 {strides = array<i32>} : memref<1x16x256xf32, #tpu.memory_space<vmem>>, vector<1x16x256xf32>,
    return
  }
  func.func @transform_0(%arg0: i32) -> (i32, i32, i32) {
    %c0_i32 = arith.constant 0 : i32
    %c0_i32_0 = arith.constant 0 : i32
    %c0_i32_1 = arith.constant 0 : i32
    return %arg0, %c0_i32, %c0_i32_0 : i32, i32, i32
  }
  func.func @transform_1(%arg0: i32) -> (i32, i32, i32) {
    %c0_i32 = arith.constant 0 : i32
    %c0_i32_0 = arith.constant 0 : i32
    %c0_i32_1 = arith.constant 0 : i32
    return %arg0, %c0_i32, %c0_i32_0 : i32, i32, i32
  }
  func.func @transform_2(%arg0: i32) -> (i32, i32, i32) {
    %c0_i32 = arith.constant 0 : i32
    %c0_i32_0 = arith.constant 0 : i32
    %c0_i32_1 = arith.constant 0 : i32
    %c0_i32_2 = arith.constant 0 : i32
    return %c0_i32, %c0_i32_0, %c0_i32_1 : i32, i32, i32
  }
  func.func @transform_3(%arg0: i32) -> (i32, i32) {
    %c0_i32 = arith.constant 0 : i32
    %c0_i32_0 = arith.constant 0 : i32
    %c0_i32_1 = arith.constant 0 : i32
    return %c0_i32, %c0_i32_0 : i32, i32
  }
  func.func @transform_4(%arg0: i32) -> (i32, i32, i32) {
    %c0_i32 = arith.constant 0 : i32
    %c0_i32_0 = arith.constant 0 : i32
    %c0_i32_1 = arith.constant 0 : i32
    %c0_i32_2 = arith.constant 0 : i32
    return %c0_i32, %c0_i32_0, %c0_i32_1 : i32, i32, i32
  }
  func.func @transform_5(%arg0: i32) -> (i32, i32) {
    %c0_i32 = arith.constant 0 : i32
    %c0_i32_0 = arith.constant 0 : i32
    %c0_i32_1 = arith.constant 0 : i32
    return %c0_i32, %c0_i32_0 : i32, i32
  }
  func.func @transform_6(%arg0: i32) -> (i32, i32, i32) {
    %c0_i32 = arith.constant 0 : i32
    %c0_i32_0 = arith.constant 0 : i32
    %c0_i32_1 = arith.constant 0 : i32
    %c0_i32_2 = arith.constant 0 : i32
    return %c0_i32, %c0_i32_0, %c0_i32_1 : i32, i32, i32
  }
  func.func @transform_7(%arg0: i32) -> (i32, i32, i32) {
    %c0_i32 = arith.constant 0 : i32
    %c0_i32_0 = arith.constant 0 : i32
    %c0_i32_1 = arith.constant 0 : i32
    %c0_i32_2 = arith.constant 0 : i32
    return %c0_i32, %c0_i32_0, %c0_i32_1 : i32, i32, i32
  }
  func.func @transform_8(%arg0: i32) -> (i32, i32) {
    %c0_i32 = arith.constant 0 : i32
    %c0_i32_0 = arith.constant 0 : i32
    %c0_i32_1 = arith.constant 0 : i32
    return %c0_i32, %c0_i32_0 : i32, i32
  }
  func.func @transform_9(%arg0: i32) -> (i32, i32, i32) {
    %c0_i32 = arith.constant 0 : i32
    %c0_i32_0 = arith.constant 0 : i32
    %c0_i32_1 = arith.constant 0 : i32
    %c0_i32_2 = arith.constant 0 : i32
    return %c0_i32, %c0_i32_0, %c0_i32_1 : i32, i32, i32
  }
  func.func @transform_10(%arg0: i32) -> (i32, i32) {
    %c0_i32 = arith.constant 0 : i32
    %c0_i32_0 = arith.constant 0 : i32
    %c0_i32_1 = arith.constant 0 : i32
    return %c0_i32, %c0_i32_0 : i32, i32
  }
  func.func @transform_11(%arg0: i32) -> (i32, i32, i32) {
    %c0_i32 = arith.constant 0 : i32
    %c0_i32_0 = arith.constant 0 : i32
    %c0_i32_1 = arith.constant 0 : i32
    return %arg0, %c0_i32, %c0_i32_0 : i32, i32, i32
  }
}

</mosaic_0001>

<llo_original>
// kernel: upconv_block_apply.1
$region0: #{upconv_block_apply.1}
  #allocation0 [shape = 'u32[]', space=smem, size = 0x4, offset = 0x4, fixed_abs, tag = 'smem constant byte address 0x4 - core index']
  #allocation1 [shape = 'u32[144,128]{1,0:T(1,128)}', space=vmem, size = 0x12000, scoped, tag = 'internal scratch']
  #allocation2 [shape = 'f32[1,19,256]{2,1,0:T(8,128)}', space=vmem, size = 0x6000, scoped, tag = 'scratch operand']
  #allocation3 [shape = 'f32[1,18,256]{2,1,0:T(8,128)}', space=vmem, size = 0x6000, scoped, tag = 'scratch operand']
  #allocation4 [shape = 'f32[1,18,256]{2,1,0:T(8,128)}', space=vmem, size = 0x6000, scoped, tag = 'scratch operand']
  #allocation5 [shape = 'f32[1,18,256]{2,1,0:T(8,128)}', space=vmem, size = 0x6000, scoped, tag = 'scratch operand']
  %s0 = inlined_call_operand.vmem [shape: f32[2,8,256], index: 0, kind: input, shape index: {}]
  %s1 = inlined_call_operand.vmem [shape: f32[2,16,256], index: 1, kind: input, shape index: {}]
  %s2 = inlined_call_operand.hbm [shape: f32[4,256,256], index: 2, kind: input, shape index: {}]
  %s3 = inlined_call_operand.vmem [shape: f32[1,256], index: 3, kind: input, shape index: {}]
  %s4 = inlined_call_operand.hbm [shape: f32[1,256,256], index: 4, kind: input, shape index: {}]
  %s5 = inlined_call_operand.vmem [shape: f32[1,256], index: 5, kind: input, shape index: {}]
  %s6 = inlined_call_operand.vmem [shape: f32[3,256,256], index: 6, kind: input, shape index: {}]
  %s7 = inlined_call_operand.hbm [shape: f32[3,256,256], index: 7, kind: input, shape index: {}]
  %s8 = inlined_call_operand.vmem [shape: f32[1,256], index: 8, kind: input, shape index: {}]
  %s9 = inlined_call_operand.hbm [shape: f32[3,256,256], index: 9, kind: input, shape index: {}]
  %s10 = inlined_call_operand.vmem [shape: f32[1,256], index: 10, kind: input, shape index: {}]
  %s11 = inlined_call_operand.vmem [shape: f32[2,16,256], index: 11, kind: output, shape index: {}]
  %s12 = sld [smem:[#allocation0]]
  $region93: #{upconv_block_apply.1} parent=0
    _
  %s14 = ssub.s32 1, %s12
  %s15 = scalar_select 0, %s14, %s12
  $region1: #{upconv_block_apply.1} parent=0
    #allocation6 [shape = 'u8[1048576]{0}', space=vmem, size = 0x100000, scoped, tag = 'input window, operand 2, single buffered']
    #allocation7 [shape = 's32[2]{0}', space=sflag, size = 0x8, scoped, tag = 'scoped memory for upconv_block_apply.1']
    #allocation8 [shape = 'u8[262144]{0}', space=vmem, size = 0x40000, scoped, tag = 'input window, operand 4, single buffered']
    #allocation9 [shape = 's32[1]{0}', space=sflag, size = 0x4, scoped, tag = 'scoped memory for upconv_block_apply.1']
    #allocation10 [shape = 'u8[786432]{0}', space=vmem, size = 0xc0000, scoped, tag = 'input window, operand 7, single buffered']
    #allocation11 [shape = 'u8[786432]{0}', space=vmem, size = 0xc0000, scoped, tag = 'input window, operand 9, single buffered']
    #allocation12 [shape = 's32[1]{0}', space=sflag, size = 0x4, scoped, tag = 'scoped memory for upconv_block_apply.1']
    %16 = vsyncpa [#allocation7], 0
    %17 = vsyncpa [#allocation9], 0
    %18 = vsyncpa [#allocation12], 0
    loop: start=0, step=1, limit=4
    $region2: #{upconv_block_apply.1} parent=1 // loop_pre_header
      _
    $region3: #{upconv_block_apply.1} parent=1 // loop_header
      %s20 = sphi 0, %s24
      %p21 = scmp.ge.s32.totalorder %s20, 4
      %s30 = sphi 0, %s32
      %s33 = sphi 0, %s30
      %s34 = sphi 0, %s33
      %s50 = sphi 0, %s34
      %s56 = sphi 0, %s58
      %s59 = sphi 0, %s56
      %s60 = sphi 0, %s59
      %s76 = sphi 0, %s60
      %s80 = sphi 0, %s80
      %s82 = sphi 0, %s80
      %s83 = sphi 0, %s82
      %s97 = sphi 0, %s83
      %s101 = sphi 0, %s101
      %s103 = sphi 0, %s101
      %s104 = sphi 0, %s103
      %s118 = sphi 0, %s104
      %s122 = sphi 0, %s122
      %s124 = sphi 0, %s122
      %s125 = sphi 0, %s124
      %s139 = sphi 0, %s125
      %s143 = sphi 0, %s143
      %s145 = sphi 0, %s143
      %s146 = sphi 0, %s145
      %s160 = sphi 0, %s146
      %s164 = sphi 0, %s164
      %s166 = sphi 0, %s164
      %s167 = sphi 0, %s166
      %s181 = sphi 0, %s167
      %s185 = sphi 0, %s185
      %s187 = sphi 0, %s185
      %s188 = sphi 0, %s187
      %s202 = sphi 0, %s188
      %s206 = sphi 0, %s206
      %s208 = sphi 0, %s206
      %s209 = sphi 0, %s208
      %s223 = sphi 0, %s209
      %s227 = sphi 0, %s227
      %s229 = sphi 0, %s227
      %s230 = sphi 0, %s229
      %s244 = sphi 0, %s230
      %s248 = sphi 0, %s248
      %s250 = sphi 0, %s248
      %s251 = sphi 0, %s250
      %s265 = sphi 0, %s251
      %s271 = sphi 0, %s273
      %s274 = sphi 0, %s271
      %s275 = sphi 0, %s274
      %s291 = sphi 0, %s275
    $region4: #{upconv_block_apply.1} parent=1 // loop_header_branch
      %23 = sbr.rel (%p21) target = $region8
    $region5: #{upconv_block_apply.1} parent=1 // loop_body
      %s25 = ssub.s32 %s20, 1
      %s26 = ssub.s32 %s20, 2
      %s27 = sadd.s32 %s20, 1
      %s28 = ssub.s32 %s20, %s27
      %p29 = scmp.eq.s32.totalorder %s28, 0
      %s31 = sadd.s32 %s30, 1
      %s32 = scalar_select %p29, %s30, %s31
      %p35 = pneg %p29
      %p36 = scmp.eq.s32.totalorder %s20, 1
      %p37 = por %p35, %p36
      %p38 = scmp.ne.s32.totalorder %s30, %s33
      %p39 = scmp.eq.s32.totalorder %s20, 0
      %p40 = por %p38, %p39
      %p41 = scmp.ne.s32.totalorder %s30, %s33
      %p42 = scmp.eq.s32.totalorder %s25, 1
      %p43 = por %p41, %p42
      %p44 = scmp.ne.s32.totalorder %s33, %s34
      %p45 = scmp.eq.s32.totalorder %s25, 0
      %p46 = por %p44, %p45
      %p47 = scmp.ne.s32.totalorder %s33, %s34
      %p48 = scmp.eq.s32.totalorder %s26, 1
      %p49 = por %p47, %p48
      %p51 = scmp.ne.s32.totalorder %s34, %s50
      %p52 = scmp.eq.s32.totalorder %s26, 0
      %p53 = por %p51, %p52
      %s54 = ssub.s32 %s20, %s27
      %p55 = scmp.eq.s32.totalorder %s54, 0
      %s57 = sadd.s32 %s56, 1
      %s58 = scalar_select %p55, %s56, %s57
      %p61 = pneg %p55
      %p62 = scmp.eq.s32.totalorder %s20, 1
      %p63 = por %p61, %p62
      %p64 = scmp.ne.s32.totalorder %s56, %s59
      %p65 = scmp.eq.s32.totalorder %s20, 0
      %p66 = por %p64, %p65
      %p67 = scmp.ne.s32.totalorder %s56, %s59
      %p68 = scmp.eq.s32.totalorder %s25, 1
      %p69 = por %p67, %p68
      %p70 = scmp.ne.s32.totalorder %s59, %s60
      %p71 = scmp.eq.s32.totalorder %s25, 0
      %p72 = por %p70, %p71
      %p73 = scmp.ne.s32.totalorder %s59, %s60
      %p74 = scmp.eq.s32.totalorder %s26, 1
      %p75 = por %p73, %p74
      %p77 = scmp.ne.s32.totalorder %s60, %s76
      %p78 = scmp.eq.s32.totalorder %s26, 0
      %p79 = por %p77, %p78
      %s81 = sadd.s32 %s80, 1
      %p84 = scmp.eq.s32.totalorder %s20, 1
      %p85 = scmp.ne.s32.totalorder %s80, %s82
      %p86 = scmp.eq.s32.totalorder %s20, 0
      %p87 = por %p85, %p86
      %p88 = scmp.ne.s32.totalorder %s80, %s82
      %p89 = scmp.eq.s32.totalorder %s25, 1
      %p90 = por %p88, %p89
      %p91 = scmp.ne.s32.totalorder %s82, %s83
      %p92 = scmp.eq.s32.totalorder %s25, 0
      %p93 = por %p91, %p92
      %p94 = scmp.ne.s32.totalorder %s82, %s83
      %p95 = scmp.eq.s32.totalorder %s26, 1
      %p96 = por %p94, %p95
      %p98 = scmp.ne.s32.totalorder %s83, %s97
      %p99 = scmp.eq.s32.totalorder %s26, 0
      %p100 = por %p98, %p99
      %s102 = sadd.s32 %s101, 1
      %p105 = scmp.eq.s32.totalorder %s20, 1
      %p106 = scmp.ne.s32.totalorder %s101, %s103
      %p107 = scmp.eq.s32.totalorder %s20, 0
      %p108 = por %p106, %p107
      %p109 = scmp.ne.s32.totalorder %s101, %s103
      %p110 = scmp.eq.s32.totalorder %s25, 1
      %p111 = por %p109, %p110
      %p112 = scmp.ne.s32.totalorder %s103, %s104
      %p113 = scmp.eq.s32.totalorder %s25, 0
      %p114 = por %p112, %p113
      %p115 = scmp.ne.s32.totalorder %s103, %s104
      %p116 = scmp.eq.s32.totalorder %s26, 1
      %p117 = por %p115, %p116
      %p119 = scmp.ne.s32.totalorder %s104, %s118
      %p120 = scmp.eq.s32.totalorder %s26, 0
      %p121 = por %p119, %p120
      %s123 = sadd.s32 %s122, 1
      %p126 = scmp.eq.s32.totalorder %s20, 1
      %p127 = scmp.ne.s32.totalorder %s122, %s124
      %p128 = scmp.eq.s32.totalorder %s20, 0
      %p129 = por %p127, %p128
      %p130 = scmp.ne.s32.totalorder %s122, %s124
      %p131 = scmp.eq.s32.totalorder %s25, 1
      %p132 = por %p130, %p131
      %p133 = scmp.ne.s32.totalorder %s124, %s125
      %p134 = scmp.eq.s32.totalorder %s25, 0
      %p135 = por %p133, %p134
      %p136 = scmp.ne.s32.totalorder %s124, %s125
      %p137 = scmp.eq.s32.totalorder %s26, 1
      %p138 = por %p136, %p137
      %p140 = scmp.ne.s32.totalorder %s125, %s139
      %p141 = scmp.eq.s32.totalorder %s26, 0
      %p142 = por %p140, %p141
      %s144 = sadd.s32 %s143, 1
      %p147 = scmp.eq.s32.totalorder %s20, 1
      %p148 = scmp.ne.s32.totalorder %s143, %s145
      %p149 = scmp.eq.s32.totalorder %s20, 0
      %p150 = por %p148, %p149
      %p151 = scmp.ne.s32.totalorder %s143, %s145
      %p152 = scmp.eq.s32.totalorder %s25, 1
      %p153 = por %p151, %p152
      %p154 = scmp.ne.s32.totalorder %s145, %s146
      %p155 = scmp.eq.s32.totalorder %s25, 0
      %p156 = por %p154, %p155
      %p157 = scmp.ne.s32.totalorder %s145, %s146
      %p158 = scmp.eq.s32.totalorder %s26, 1
      %p159 = por %p157, %p158
      %p161 = scmp.ne.s32.totalorder %s146, %s160
      %p162 = scmp.eq.s32.totalorder %s26, 0
      %p163 = por %p161, %p162
      %s165 = sadd.s32 %s164, 1
      %p168 = scmp.eq.s32.totalorder %s20, 1
      %p169 = scmp.ne.s32.totalorder %s164, %s166
      %p170 = scmp.eq.s32.totalorder %s20, 0
      %p171 = por %p169, %p170
      %p172 = scmp.ne.s32.totalorder %s164, %s166
      %p173 = scmp.eq.s32.totalorder %s25, 1
      %p174 = por %p172, %p173
      %p175 = scmp.ne.s32.totalorder %s166, %s167
      %p176 = scmp.eq.s32.totalorder %s25, 0
      %p177 = por %p175, %p176
      %p178 = scmp.ne.s32.totalorder %s166, %s167
      %p179 = scmp.eq.s32.totalorder %s26, 1
      %p180 = por %p178, %p179
      %p182 = scmp.ne.s32.totalorder %s167, %s181
      %p183 = scmp.eq.s32.totalorder %s26, 0
      %p184 = por %p182, %p183
      %s186 = sadd.s32 %s185, 1
      %p189 = scmp.eq.s32.totalorder %s20, 1
      %p190 = scmp.ne.s32.totalorder %s185, %s187
      %p191 = scmp.eq.s32.totalorder %s20, 0
      %p192 = por %p190, %p191
      %p193 = scmp.ne.s32.totalorder %s185, %s187
      %p194 = scmp.eq.s32.totalorder %s25, 1
      %p195 = por %p193, %p194
      %p196 = scmp.ne.s32.totalorder %s187, %s188
      %p197 = scmp.eq.s32.totalorder %s25, 0
      %p198 = por %p196, %p197
      %p199 = scmp.ne.s32.totalorder %s187, %s188
      %p200 = scmp.eq.s32.totalorder %s26, 1
      %p201 = por %p199, %p200
      %p203 = scmp.ne.s32.totalorder %s188, %s202
      %p204 = scmp.eq.s32.totalorder %s26, 0
      %p205 = por %p203, %p204
      %s207 = sadd.s32 %s206, 1
      %p210 = scmp.eq.s32.totalorder %s20, 1
      %p211 = scmp.ne.s32.totalorder %s206, %s208
      %p212 = scmp.eq.s32.totalorder %s20, 0
      %p213 = por %p211, %p212
      %p214 = scmp.ne.s32.totalorder %s206, %s208
      %p215 = scmp.eq.s32.totalorder %s25, 1
      %p216 = por %p214, %p215
      %p217 = scmp.ne.s32.totalorder %s208, %s209
      %p218 = scmp.eq.s32.totalorder %s25, 0
      %p219 = por %p217, %p218
      %p220 = scmp.ne.s32.totalorder %s208, %s209
      %p221 = scmp.eq.s32.totalorder %s26, 1
      %p222 = por %p220, %p221
      %p224 = scmp.ne.s32.totalorder %s209, %s223
      %p225 = scmp.eq.s32.totalorder %s26, 0
      %p226 = por %p224, %p225
      %s228 = sadd.s32 %s227, 1
      %p231 = scmp.eq.s32.totalorder %s20, 1
      %p232 = scmp.ne.s32.totalorder %s227, %s229
      %p233 = scmp.eq.s32.totalorder %s20, 0
      %p234 = por %p232, %p233
      %p235 = scmp.ne.s32.totalorder %s227, %s229
      %p236 = scmp.eq.s32.totalorder %s25, 1
      %p237 = por %p235, %p236
      %p238 = scmp.ne.s32.totalorder %s229, %s230
      %p239 = scmp.eq.s32.totalorder %s25, 0
      %p240 = por %p238, %p239
      %p241 = scmp.ne.s32.totalorder %s229, %s230
      %p242 = scmp.eq.s32.totalorder %s26, 1
      %p243 = por %p241, %p242
      %p245 = scmp.ne.s32.totalorder %s230, %s244
      %p246 = scmp.eq.s32.totalorder %s26, 0
      %p247 = por %p245, %p246
      %s249 = sadd.s32 %s248, 1
      %p252 = scmp.eq.s32.totalorder %s20, 1
      %p253 = scmp.ne.s32.totalorder %s248, %s250
      %p254 = scmp.eq.s32.totalorder %s20, 0
      %p255 = por %p253, %p254
      %p256 = scmp.ne.s32.totalorder %s248, %s250
      %p257 = scmp.eq.s32.totalorder %s25, 1
      %p258 = por %p256, %p257
      %p259 = scmp.ne.s32.totalorder %s250, %s251
      %p260 = scmp.eq.s32.totalorder %s25, 0
      %p261 = por %p259, %p260
      %p262 = scmp.ne.s32.totalorder %s250, %s251
      %p263 = scmp.eq.s32.totalorder %s26, 1
      %p264 = por %p262, %p263
      %p266 = scmp.ne.s32.totalorder %s251, %s265
      %p267 = scmp.eq.s32.totalorder %s26, 0
      %p268 = por %p266, %p267
      %s269 = ssub.s32 %s20, %s27
      %p270 = scmp.eq.s32.totalorder %s269, 0
      %s272 = sadd.s32 %s271, 1
      %s273 = scalar_select %p270, %s271, %s272
      %p276 = pneg %p270
      %p277 = scmp.eq.s32.totalorder %s20, 1
      %p278 = por %p276, %p277
      %p279 = scmp.ne.s32.totalorder %s271, %s274
      %p280 = scmp.eq.s32.totalorder %s20, 0
      %p281 = por %p279, %p280
      %p282 = scmp.ne.s32.totalorder %s271, %s274
      %p283 = scmp.eq.s32.totalorder %s25, 1
      %p284 = por %p282, %p283
      %p285 = scmp.ne.s32.totalorder %s274, %s275
      %p286 = scmp.eq.s32.totalorder %s25, 0
      %p287 = por %p285, %p286
      %p288 = scmp.ne.s32.totalorder %s274, %s275
      %p289 = scmp.eq.s32.totalorder %s26, 1
      %p290 = por %p288, %p289
      %p292 = scmp.ne.s32.totalorder %s275, %s291
      %p293 = scmp.eq.s32.totalorder %s26, 0
      %p294 = por %p292, %p293
      %p295 = scmp.le.s32.totalorder 1, %s20
      %p296 = scmp.lt.s32.totalorder %s20, 3
      %p297 = pnand %p295, %p296
      %p298 = pneg %p297
      // Predicated region
      $region9: #{upconv_block_apply.1} parent=5 // pred_check
        _
      $region10: #{upconv_block_apply.1} parent=5 // pred_check_branch
        %300 = sbr.rel (%p297) target = $region12
      $region11: #{upconv_block_apply.1} parent=5 // pred_region
        %s301 = ssub.s32 %s20, 1
        // Predicated region
        $region13: #{upconv_block_apply.1} parent=11 // pred_check
          %p302 = pneg %p93
        $region14: #{upconv_block_apply.1} parent=11 // pred_check_branch
          %304 = sbr.rel (%p302) target = $region16
        $region15: #{upconv_block_apply.1} parent=11 // pred_region
          %s306 = ssub.s32 32768, 32768
          %307 = vsyncadd [#allocation7], %s306
          %s308 = sshll.u32 [#allocation6], 4
          %s309 = int_to_ptr.vmem [resolvable:$true] %s308
          %314 = dma.hbm_to_vmem [thread:$0]  %s2, 32768, %s309, [#allocation7], 256, 256, 16
        $region16: #{upconv_block_apply.1} parent=11 // pred_fallthru
          _
        // Predicated region
        $region17: #{upconv_block_apply.1} parent=11 // pred_check
          %p315 = pneg %p114
        $region18: #{upconv_block_apply.1} parent=11 // pred_check_branch
          %317 = sbr.rel (%p315) target = $region20
        $region19: #{upconv_block_apply.1} parent=11 // pred_region
          _
        $region20: #{upconv_block_apply.1} parent=11 // pred_fallthru
          _
        // Predicated region
        $region21: #{upconv_block_apply.1} parent=11 // pred_check
          %p318 = pneg %p135
        $region22: #{upconv_block_apply.1} parent=11 // pred_check_branch
          %320 = sbr.rel (%p318) target = $region24
        $region23: #{upconv_block_apply.1} parent=11 // pred_region
          %s322 = ssub.s32 8192, 8192
          %323 = vsyncadd [#allocation9], %s322
          %s324 = sshll.u32 [#allocation8], 4
          %s325 = int_to_ptr.vmem [resolvable:$true] %s324
          %330 = dma.hbm_to_vmem [thread:$0]  %s4, 8192, %s325, [#allocation9], 256, 256, 16
        $region24: #{upconv_block_apply.1} parent=11 // pred_fallthru
          _
        // Predicated region
        $region25: #{upconv_block_apply.1} parent=11 // pred_check
          %p331 = pneg %p156
        $region26: #{upconv_block_apply.1} parent=11 // pred_check_branch
          %333 = sbr.rel (%p331) target = $region28
        $region27: #{upconv_block_apply.1} parent=11 // pred_region
          _
        $region28: #{upconv_block_apply.1} parent=11 // pred_fallthru
          _
        // Predicated region
        $region29: #{upconv_block_apply.1} parent=11 // pred_check
          %p334 = pneg %p177
        $region30: #{upconv_block_apply.1} parent=11 // pred_check_branch
          %336 = sbr.rel (%p334) target = $region32
        $region31: #{upconv_block_apply.1} parent=11 // pred_region
          _
        $region32: #{upconv_block_apply.1} parent=11 // pred_fallthru
          _
        // Predicated region
        $region33: #{upconv_block_apply.1} parent=11 // pred_check
          %p337 = pneg %p198
        $region34: #{upconv_block_apply.1} parent=11 // pred_check_branch
          %339 = sbr.rel (%p337) target = $region36
        $region35: #{upconv_block_apply.1} parent=11 // pred_region
          %s341 = ssub.s32 24576, 24576
          %342 = vsyncadd [#allocation9], %s341
          %s343 = sshll.u32 [#allocation10], 4
          %s344 = int_to_ptr.vmem [resolvable:$true] %s343
          %349 = dma.hbm_to_vmem [thread:$0]  %s7, 24576, %s344, [#allocation9], 256, 256, 16
        $region36: #{upconv_block_apply.1} parent=11 // pred_fallthru
          _
        // Predicated region
        $region37: #{upconv_block_apply.1} parent=11 // pred_check
          %p350 = pneg %p219
        $region38: #{upconv_block_apply.1} parent=11 // pred_check_branch
          %352 = sbr.rel (%p350) target = $region40
        $region39: #{upconv_block_apply.1} parent=11 // pred_region
          _
        $region40: #{upconv_block_apply.1} parent=11 // pred_fallthru
          _
        // Predicated region
        $region41: #{upconv_block_apply.1} parent=11 // pred_check
          %p353 = pneg %p240
        $region42: #{upconv_block_apply.1} parent=11 // pred_check_branch
          %355 = sbr.rel (%p353) target = $region44
        $region43: #{upconv_block_apply.1} parent=11 // pred_region
          %s357 = ssub.s32 24576, 24576
          %358 = vsyncadd [#allocation12], %s357
          %s359 = sshll.u32 [#allocation11], 4
          %s360 = int_to_ptr.vmem [resolvable:$true] %s359
          %365 = dma.hbm_to_vmem [thread:$0]  %s9, 24576, %s360, [#allocation12], 256, 256, 16
        $region44: #{upconv_block_apply.1} parent=11 // pred_fallthru
          _
        // Predicated region
        $region45: #{upconv_block_apply.1} parent=11 // pred_check
          %p366 = pneg %p261
        $region46: #{upconv_block_apply.1} parent=11 // pred_check_branch
          %368 = sbr.rel (%p366) target = $region48
        $region47: #{upconv_block_apply.1} parent=11 // pred_region
          _
        $region48: #{upconv_block_apply.1} parent=11 // pred_fallthru
          _
      $region12: #{upconv_block_apply.1} parent=5 // pred_fallthru
        _
      %p369 = scmp.lt.s32.totalorder %s20, 2
      // Predicated region
      $region49: #{upconv_block_apply.1} parent=5 // pred_check
        %p370 = pneg %p369
      $region50: #{upconv_block_apply.1} parent=5 // pred_check_branch
        %372 = sbr.rel (%p370) target = $region52
      $region51: #{upconv_block_apply.1} parent=5 // pred_region
        // Predicated region
        $region53: #{upconv_block_apply.1} parent=51 // pred_check
          %p373 = pneg %p40
        $region54: #{upconv_block_apply.1} parent=51 // pred_check_branch
          %375 = sbr.rel (%p373) target = $region56
        $region55: #{upconv_block_apply.1} parent=51 // pred_region
          %p376 = scmp.lt.s32.totalorder %s20, 1
          %s377 = scalar_select %p376, %s20, 1
          %s378 = smul.addr %s377, 2
          %s379 = smul.addr %s378, 8
          %s380 = scalar_lea.vmem %s0, %s379
        $region56: #{upconv_block_apply.1} parent=51 // pred_fallthru
          _
        // Predicated region
        $region57: #{upconv_block_apply.1} parent=51 // pred_check
          %p381 = pneg %p66
        $region58: #{upconv_block_apply.1} parent=51 // pred_check_branch
          %383 = sbr.rel (%p381) target = $region60
        $region59: #{upconv_block_apply.1} parent=51 // pred_region
          %p384 = scmp.lt.s32.totalorder %s20, 1
          %s385 = scalar_select %p384, %s20, 1
          %s386 = smul.addr %s385, 4
          %s387 = smul.addr %s386, 8
          %s388 = scalar_lea.vmem %s1, %s387
        $region60: #{upconv_block_apply.1} parent=51 // pred_fallthru
          _
      $region52: #{upconv_block_apply.1} parent=5 // pred_fallthru
        _
      %p389 = scmp.le.s32.totalorder 1, %s20
      %p390 = scmp.lt.s32.totalorder %s20, 3
      %p391 = pnand %p389, %p390
      %p392 = pneg %p391
      // Predicated region
      $region61: #{upconv_block_apply.1} parent=5 // pred_check
        _
      $region62: #{upconv_block_apply.1} parent=5 // pred_check_branch
        %394 = sbr.rel (%p391) target = $region64
      $region63: #{upconv_block_apply.1} parent=5 // pred_region
        %s395 = ssub.s32 %s20, 1
        // Predicated region
        $region65: #{upconv_block_apply.1} parent=63 // pred_check
          %p396 = pneg %p93
        $region66: #{upconv_block_apply.1} parent=63 // pred_check_branch
          %398 = sbr.rel (%p396) target = $region68
        $region67: #{upconv_block_apply.1} parent=63 // pred_region
          %399 = dma.done [#allocation7], 32768
        $region68: #{upconv_block_apply.1} parent=63 // pred_fallthru
          _
        // Predicated region
        $region69: #{upconv_block_apply.1} parent=63 // pred_check
          %p400 = pneg %p135
        $region70: #{upconv_block_apply.1} parent=63 // pred_check_branch
          %402 = sbr.rel (%p400) target = $region72
        $region71: #{upconv_block_apply.1} parent=63 // pred_region
          %403 = dma.done [#allocation9], 8192
        $region72: #{upconv_block_apply.1} parent=63 // pred_fallthru
          _
        // Predicated region
        $region73: #{upconv_block_apply.1} parent=63 // pred_check
          %p404 = pneg %p198
        $region74: #{upconv_block_apply.1} parent=63 // pred_check_branch
          %406 = sbr.rel (%p404) target = $region76
        $region75: #{upconv_block_apply.1} parent=63 // pred_region
          %407 = dma.done [#allocation9], 24576
        $region76: #{upconv_block_apply.1} parent=63 // pred_fallthru
          _
        // Predicated region
        $region77: #{upconv_block_apply.1} parent=63 // pred_check
          %p408 = pneg %p240
        $region78: #{upconv_block_apply.1} parent=63 // pred_check_branch
          %410 = sbr.rel (%p408) target = $region80
        $region79: #{upconv_block_apply.1} parent=63 // pred_region
          %411 = dma.done [#allocation12], 24576
        $region80: #{upconv_block_apply.1} parent=63 // pred_fallthru
          _
        %p412 = scmp.lt.s32.totalorder %s25, 1
        %s413 = scalar_select %p412, %s25, 1
        %s414 = smul.addr %s413, 2
        %s415 = smul.addr %s414, 8
        %s416 = scalar_lea.vmem %s0, %s415
        %p417 = pneg %p46
        %p418 = pneg %p43
        %p419 = scmp.lt.s32.totalorder %s25, 1
        %s420 = scalar_select %p419, %s25, 1
        %s421 = smul.addr %s420, 4
        %s422 = smul.addr %s421, 8
        %s423 = scalar_lea.vmem %s1, %s422
        %p424 = pneg %p72
        %p425 = pneg %p69
        %p426 = pneg %p93
        %p427 = pneg %p90
        %p428 = pneg %p114
        %p429 = pneg %p111
        %p430 = pneg %p135
        %p431 = pneg %p132
        %p432 = pneg %p156
        %p433 = pneg %p153
        %p434 = pneg %p177
        %p435 = pneg %p174
        %p436 = pneg %p198
        %p437 = pneg %p195
        %p438 = pneg %p219
        %p439 = pneg %p216
        %p440 = pneg %p240
        %p441 = pneg %p237
        %p442 = pneg %p261
        %p443 = pneg %p258
        %p444 = pneg %p287
        %p445 = pneg %p284
        %p446 = scmp.lt.s32.totalorder %s25, 1
        %s447 = scalar_select %p446, %s25, 1
        %s448 = smul.addr %s447, 4
        %s449 = smul.addr %s448, 8
        %s450 = scalar_lea.vmem %s11, %s449
        %p451 = scmp.lt.s32.totalorder %s25, 1
        %s452 = scalar_select %p451, %s25, 1
        %s453 = smul.addr %s452, 2
        %s454 = smul.addr %s453, 8
        %s455 = scalar_lea.vmem %s0, %s454
        %p456 = scmp.lt.s32.totalorder %s25, 1
        %s457 = scalar_select %p456, %s25, 1
        %s458 = smul.addr %s457, 4
        %s459 = smul.addr %s458, 8
        %s460 = scalar_lea.vmem %s1, %s459
        %p461 = scmp.lt.s32.totalorder %s25, 1
        %s462 = scalar_select %p461, %s25, 1
        %s463 = smul.addr %s462, 4
        %s464 = smul.addr %s463, 8
        %s465 = scalar_lea.vmem %s11, %s464
        %466 = vst [vmem:[#allocation2] sm:$0xff] 0.0
        %467 = vst [vmem:[#allocation2 + $0x8] sm:$0xff] 0.0
        %468 = vst [vmem:[#allocation2 + $0x10] sm:$0xff] 0.0
        %469 = vst [vmem:[#allocation2 + $0x18] sm:$0xff] 0.0
        %470 = vst [vmem:[#allocation2 + $0x20] sm:$0x7] 0.0
        %471 = vst [vmem:[#allocation2 + $0x28] sm:$0x7] 0.0
        %v472 = vld [vmem:[%s455] ss:$8 sm:$0x3]
        %v473 = vlaneseq
        %vm474 = vcmp.ge.s32.totalorder %v473, 0
        %vm475 = vcmp.lt.s32.totalorder %v473, 256
        %vm476 = vmand %vm474, %vm475
        %s477 = scalar_lea.vmem [#allocation2], 2
        %478 = vst.msk [vmem:[%s477] ss:$8 sm:$0x3] %vm476, %v472
        %479 = vst.msk [vmem:[%s477] ss:$8 sm:$0x0] %vm476, %v472
        %s480 = scalar_lea.vmem %s455, 1
        %v481 = vld [vmem:[%s480] ss:$8 sm:$0x3]
        %s482 = scalar_lea.vmem [#allocation2], 4
        %483 = vst.msk [vmem:[%s482] ss:$8 sm:$0x3] %vm476, %v481
        %484 = vst.msk [vmem:[%s482] ss:$8 sm:$0x0] %vm476, %v481
        %s485 = scalar_lea.vmem %s455, 2
        %v486 = vld [vmem:[%s485] ss:$8 sm:$0x3]
        %s487 = scalar_lea.vmem [#allocation2], 6
        %488 = vst.msk [vmem:[%s487] ss:$8 sm:$0x3] %vm476, %v486
        %489 = vst.msk [vmem:[%s487] ss:$8 sm:$0x0] %vm476, %v486
        %s490 = scalar_lea.vmem %s455, 3
        %v491 = vld [vmem:[%s490] ss:$8 sm:$0x3]
        %s492 = scalar_lea.vmem [#allocation2], 16
        %493 = vst.msk [vmem:[%s492] ss:$8 sm:$0x3] %vm476, %v491
        %494 = vst.msk [vmem:[%s492] ss:$8 sm:$0x0] %vm476, %v491
        %s495 = scalar_lea.vmem %s455, 4
        %v496 = vld [vmem:[%s495] ss:$8 sm:$0x3]
        %s497 = scalar_lea.vmem [#allocation2], 18
        %498 = vst.msk [vmem:[%s497] ss:$8 sm:$0x3] %vm476, %v496
        %499 = vst.msk [vmem:[%s497] ss:$8 sm:$0x0] %vm476, %v496
        %s500 = scalar_lea.vmem %s455, 5
        %v501 = vld [vmem:[%s500] ss:$8 sm:$0x3]
        %s502 = scalar_lea.vmem [#allocation2], 20
        %503 = vst.msk [vmem:[%s502] ss:$8 sm:$0x3] %vm476, %v501
        %504 = vst.msk [vmem:[%s502] ss:$8 sm:$0x0] %vm476, %v501
        %s505 = scalar_lea.vmem %s455, 6
        %v506 = vld [vmem:[%s505] ss:$8 sm:$0x3]
        %s507 = scalar_lea.vmem [#allocation2], 22
        %508 = vst.msk [vmem:[%s507] ss:$8 sm:$0x3] %vm476, %v506
        %509 = vst.msk [vmem:[%s507] ss:$8 sm:$0x0] %vm476, %v506
        %s510 = scalar_lea.vmem %s455, 7
        %v511 = vld [vmem:[%s510] ss:$8 sm:$0x3]
        %s512 = scalar_lea.vmem [#allocation2], 32
        %513 = vst.msk [vmem:[%s512] ss:$8 sm:$0x3] %vm476, %v511
        %514 = vst.msk [vmem:[%s512] ss:$8 sm:$0x0] %vm476, %v511
        %v515 = vld [vmem:[#allocation2] sm:$0xff]
        %v516 = vld [vmem:[#allocation2 + $0x8] sm:$0xff]
        %v517 = vld [vmem:[#allocation2 + $0x10] sm:$0xff]
        %v518 = vld [vmem:[#allocation2 + $0x18] sm:$0xff]
        %v519 = vld [vmem:[#allocation6] sm:$0xff]
        %v520 = vld [vmem:[#allocation6 + $0x8] sm:$0xff]
        %v521 = vld [vmem:[#allocation6 + $0x10] sm:$0xff]
        %v522 = vld [vmem:[#allocation6 + $0x18] sm:$0xff]
        %v523 = vld [vmem:[#allocation6 + $0x20] sm:$0xff]
        %v524 = vld [vmem:[#allocation6 + $0x28] sm:$0xff]
        %v525 = vld [vmem:[#allocation6 + $0x30] sm:$0xff]
        %v526 = vld [vmem:[#allocation6 + $0x38] sm:$0xff]
        %v527 = vld [vmem:[#allocation6 + $0x40] sm:$0xff]
        %v528 = vld [vmem:[#allocation6 + $0x48] sm:$0xff]
        %v529 = vld [vmem:[#allocation6 + $0x50] sm:$0xff]
        %v530 = vld [vmem:[#allocation6 + $0x58] sm:$0xff]
        %v531 = vld [vmem:[#allocation6 + $0x60] sm:$0xff]
        %v532 = vld [vmem:[#allocation6 + $0x68] sm:$0xff]
        %v533 = vld [vmem:[#allocation6 + $0x70] sm:$0xff]
        %v534 = vld [vmem:[#allocation6 + $0x78] sm:$0xff]
        %v535 = vld [vmem:[#allocation6 + $0x80] sm:$0xff]
        %v536 = vld [vmem:[#allocation6 + $0x88] sm:$0xff]
        %v537 = vld [vmem:[#allocation6 + $0x90] sm:$0xff]
        %v538 = vld [vmem:[#allocation6 + $0x98] sm:$0xff]
        %v539 = vld [vmem:[#allocation6 + $0xa0] sm:$0xff]
        %v540 = vld [vmem:[#allocation6 + $0xa8] sm:$0xff]
        %v541 = vld [vmem:[#allocation6 + $0xb0] sm:$0xff]
        %v542 = vld [vmem:[#allocation6 + $0xb8] sm:$0xff]
        %v543 = vld [vmem:[#allocation6 + $0xc0] sm:$0xff]
        %v544 = vld [vmem:[#allocation6 + $0xc8] sm:$0xff]
        %v545 = vld [vmem:[#allocation6 + $0xd0] sm:$0xff]
        %v546 = vld [vmem:[#allocation6 + $0xd8] sm:$0xff]
        %v547 = vld [vmem:[#allocation6 + $0xe0] sm:$0xff]
        %v548 = vld [vmem:[#allocation6 + $0xe8] sm:$0xff]
        %v549 = vld [vmem:[#allocation6 + $0xf0] sm:$0xff]
        %v550 = vld [vmem:[#allocation6 + $0xf8] sm:$0xff]
        %v551 = vld [vmem:[#allocation6 + $0x100] sm:$0xff]
        %v552 = vld [vmem:[#allocation6 + $0x108] sm:$0xff]
        %v553 = vld [vmem:[#allocation6 + $0x110] sm:$0xff]
        %v554 = vld [vmem:[#allocation6 + $0x118] sm:$0xff]
        %v555 = vld [vmem:[#allocation6 + $0x120] sm:$0xff]
        %v556 = vld [vmem:[#allocation6 + $0x128] sm:$0xff]
        %v557 = vld [vmem:[#allocation6 + $0x130] sm:$0xff]
        %v558 = vld [vmem:[#allocation6 + $0x138] sm:$0xff]
        %v559 = vld [vmem:[#allocation6 + $0x140] sm:$0xff]
        %v560 = vld [vmem:[#allocation6 + $0x148] sm:$0xff]
        %v561 = vld [vmem:[#allocation6 + $0x150] sm:$0xff]
        %v562 = vld [vmem:[#allocation6 + $0x158] sm:$0xff]
        %v563 = vld [vmem:[#allocation6 + $0x160] sm:$0xff]
        %v564 = vld [vmem:[#allocation6 + $0x168] sm:$0xff]
        %v565 = vld [vmem:[#allocation6 + $0x170] sm:$0xff]
        %v566 = vld [vmem:[#allocation6 + $0x178] sm:$0xff]
        %v567 = vld [vmem:[#allocation6 + $0x180] sm:$0xff]
        %v568 = vld [vmem:[#allocation6 + $0x188] sm:$0xff]
        %v569 = vld [vmem:[#allocation6 + $0x190] sm:$0xff]
        %v570 = vld [vmem:[#allocation6 + $0x198] sm:$0xff]
        %v571 = vld [vmem:[#allocation6 + $0x1a0] sm:$0xff]
        %v572 = vld [vmem:[#allocation6 + $0x1a8] sm:$0xff]
        %v573 = vld [vmem:[#allocation6 + $0x1b0] sm:$0xff]
        %v574 = vld [vmem:[#allocation6 + $0x1b8] sm:$0xff]
        %v575 = vld [vmem:[#allocation6 + $0x1c0] sm:$0xff]
        %v576 = vld [vmem:[#allocation6 + $0x1c8] sm:$0xff]
        %v577 = vld [vmem:[#allocation6 + $0x1d0] sm:$0xff]
        %v578 = vld [vmem:[#allocation6 + $0x1d8] sm:$0xff]
        %v579 = vld [vmem:[#allocation6 + $0x1e0] sm:$0xff]
        %v580 = vld [vmem:[#allocation6 + $0x1e8] sm:$0xff]
        %v581 = vld [vmem:[#allocation6 + $0x1f0] sm:$0xff]
        %v582 = vld [vmem:[#allocation6 + $0x1f8] sm:$0xff]
        %v583 = vld [vmem:[#allocation2] sm:$0xfe]
        %v584 = vld [vmem:[#allocation2 + $0x8] sm:$0xfe]
        %v585 = vld [vmem:[#allocation2 + $0x20] sm:$0x1]
        %v586 = vld [vmem:[#allocation2 + $0x28] sm:$0x1]
        %s587 = scalar_lea.vmem [#allocation6], 512
        %v588 = vld [vmem:[%s587] sm:$0xff]
        %v589 = vld [vmem:[%s587 + $0x8] sm:$0xff]
        %v590 = vld [vmem:[%s587 + $0x10] sm:$0xff]
        %v591 = vld [vmem:[%s587 + $0x18] sm:$0xff]
        %v592 = vld [vmem:[%s587 + $0x20] sm:$0xff]
        %v593 = vld [vmem:[%s587 + $0x28] sm:$0xff]
        %v594 = vld [vmem:[%s587 + $0x30] sm:$0xff]
        %v595 = vld [vmem:[%s587 + $0x38] sm:$0xff]
        %v596 = vld [vmem:[%s587 + $0x40] sm:$0xff]
        %v597 = vld [vmem:[%s587 + $0x48] sm:$0xff]
        %v598 = vld [vmem:[%s587 + $0x50] sm:$0xff]
        %v599 = vld [vmem:[%s587 + $0x58] sm:$0xff]
        %v600 = vld [vmem:[%s587 + $0x60] sm:$0xff]
        %v601 = vld [vmem:[%s587 + $0x68] sm:$0xff]
        %v602 = vld [vmem:[%s587 + $0x70] sm:$0xff]
        %v603 = vld [vmem:[%s587 + $0x78] sm:$0xff]
        %v604 = vld [vmem:[%s587 + $0x80] sm:$0xff]
        %v605 = vld [vmem:[%s587 + $0x88] sm:$0xff]
        %v606 = vld [vmem:[%s587 + $0x90] sm:$0xff]
        %v607 = vld [vmem:[%s587 + $0x98] sm:$0xff]
        %v608 = vld [vmem:[%s587 + $0xa0] sm:$0xff]
        %v609 = vld [vmem:[%s587 + $0xa8] sm:$0xff]
        %v610 = vld [vmem:[%s587 + $0xb0] sm:$0xff]
        %v611 = vld [vmem:[%s587 + $0xb8] sm:$0xff]
        %v612 = vld [vmem:[%s587 + $0xc0] sm:$0xff]
        %v613 = vld [vmem:[%s587 + $0xc8] sm:$0xff]
        %v614 = vld [vmem:[%s587 + $0xd0] sm:$0xff]
        %v615 = vld [vmem:[%s587 + $0xd8] sm:$0xff]
        %v616 = vld [vmem:[%s587 + $0xe0] sm:$0xff]
        %v617 = vld [vmem:[%s587 + $0xe8] sm:$0xff]
        %v618 = vld [vmem:[%s587 + $0xf0] sm:$0xff]
        %v619 = vld [vmem:[%s587 + $0xf8] sm:$0xff]
        %v620 = vld [vmem:[%s587 + $0x100] sm:$0xff]
        %v621 = vld [vmem:[%s587 + $0x108] sm:$0xff]
        %v622 = vld [vmem:[%s587 + $0x110] sm:$0xff]
        %v623 = vld [vmem:[%s587 + $0x118] sm:$0xff]
        %v624 = vld [vmem:[%s587 + $0x120] sm:$0xff]
        %v625 = vld [vmem:[%s587 + $0x128] sm:$0xff]
        %v626 = vld [vmem:[%s587 + $0x130] sm:$0xff]
        %v627 = vld [vmem:[%s587 + $0x138] sm:$0xff]
        %v628 = vld [vmem:[%s587 + $0x140] sm:$0xff]
        %v629 = vld [vmem:[%s587 + $0x148] sm:$0xff]
        %v630 = vld [vmem:[%s587 + $0x150] sm:$0xff]
        %v631 = vld [vmem:[%s587 + $0x158] sm:$0xff]
        %v632 = vld [vmem:[%s587 + $0x160] sm:$0xff]
        %v633 = vld [vmem:[%s587 + $0x168] sm:$0xff]
        %v634 = vld [vmem:[%s587 + $0x170] sm:$0xff]
        %v635 = vld [vmem:[%s587 + $0x178] sm:$0xff]
        %v636 = vld [vmem:[%s587 + $0x180] sm:$0xff]
        %v637 = vld [vmem:[%s587 + $0x188] sm:$0xff]
        %v638 = vld [vmem:[%s587 + $0x190] sm:$0xff]
        %v639 = vld [vmem:[%s587 + $0x198] sm:$0xff]
        %v640 = vld [vmem:[%s587 + $0x1a0] sm:$0xff]
        %v641 = vld [vmem:[%s587 + $0x1a8] sm:$0xff]
        %v642 = vld [vmem:[%s587 + $0x1b0] sm:$0xff]
        %v643 = vld [vmem:[%s587 + $0x1b8] sm:$0xff]
        %v644 = vld [vmem:[%s587 + $0x1c0] sm:$0xff]
        %v645 = vld [vmem:[%s587 + $0x1c8] sm:$0xff]
        %v646 = vld [vmem:[%s587 + $0x1d0] sm:$0xff]
        %v647 = vld [vmem:[%s587 + $0x1d8] sm:$0xff]
        %v648 = vld [vmem:[%s587 + $0x1e0] sm:$0xff]
        %v649 = vld [vmem:[%s587 + $0x1e8] sm:$0xff]
        %v650 = vld [vmem:[%s587 + $0x1f0] sm:$0xff]
        %v651 = vld [vmem:[%s587 + $0x1f8] sm:$0xff]
        %vm658 = vcmask 1046528
        %v659 = vrot.slane %v583, 1
        %v660 = vrot.slane %v517, 1
        %v661 = vsel %vm658, %v659, %v660
        %v662 = vrot.slane %v584, 1
        %v663 = vrot.slane %v518, 1
        %v664 = vsel %vm658, %v662, %v663
        %v665 = vrot.slane %v585, 1
        %v666 = vsel %vm658, %v660, %v665
        %v667 = vrot.slane %v586, 1
        %v668 = vsel %vm658, %v663, %v667
        %673 = vmatprep.subr.mxu0 %v619
        %674 = vmatpush1.msra.mxu0 %v618
        %675 = vmatprep.subr.mxu0 %v617
        %676 = vmatpush1.msra.mxu0 %v616
        %677 = vmatprep.subr.mxu0 %v615
        %678 = vmatpush1.msra.mxu0 %v614
        %679 = vmatprep.subr.mxu0 %v613
        %680 = vmatpush1.msra.mxu0 %v612
        %681 = vmatprep.subr.mxu0 %v611
        %682 = vmatpush1.msra.mxu0 %v610
        %683 = vmatprep.subr.mxu0 %v609
        %684 = vmatpush1.msra.mxu0 %v608
        %685 = vmatprep.subr.mxu0 %v607
        %686 = vmatpush1.msra.mxu0 %v606
        %687 = vmatprep.subr.mxu0 %v605
        %688 = vmatpush1.msra.mxu0 %v604
        %689 = vmatprep.subr.mxu0 %v603
        %690 = vmatpush1.msra.mxu0 %v602
        %691 = vmatprep.subr.mxu0 %v601
        %692 = vmatpush1.msra.mxu0 %v600
        %693 = vmatprep.subr.mxu0 %v599
        %694 = vmatpush1.msra.mxu0 %v598
        %695 = vmatprep.subr.mxu0 %v597
        %696 = vmatpush1.msra.mxu0 %v596
        %697 = vmatprep.subr.mxu0 %v595
        %698 = vmatpush1.msra.mxu0 %v594
        %699 = vmatprep.subr.mxu0 %v593
        %700 = vmatpush1.msra.mxu0 %v592
        %701 = vmatprep.subr.mxu0 %v591
        %702 = vmatpush1.msra.mxu0 %v590
        %703 = vmatprep.subr.mxu0 %v589
        %704 = vmatpush1.msra.mxu0 %v588
        %705 = vmatprep.subr.mxu0 %v651
        %706 = vmatpush2.msra.mxu0 %v650
        %707 = vmatprep.subr.mxu0 %v649
        %708 = vmatpush2.msra.mxu0 %v648
        %709 = vmatprep.subr.mxu0 %v647
        %710 = vmatpush2.msra.mxu0 %v646
        %711 = vmatprep.subr.mxu0 %v645
        %712 = vmatpush2.msra.mxu0 %v644
        %713 = vmatprep.subr.mxu0 %v643
        %714 = vmatpush2.msra.mxu0 %v642
        %715 = vmatprep.subr.mxu0 %v641
        %716 = vmatpush2.msra.mxu0 %v640
        %717 = vmatprep.subr.mxu0 %v639
        %718 = vmatpush2.msra.mxu0 %v638
        %719 = vmatprep.subr.mxu0 %v637
        %720 = vmatpush2.msra.mxu0 %v636
        %721 = vmatprep.subr.mxu0 %v635
        %722 = vmatpush2.msra.mxu0 %v634
        %723 = vmatprep.subr.mxu0 %v633
        %724 = vmatpush2.msra.mxu0 %v632
        %725 = vmatprep.subr.mxu0 %v631
        %726 = vmatpush2.msra.mxu0 %v630
        %727 = vmatprep.subr.mxu0 %v629
        %728 = vmatpush2.msra.mxu0 %v628
        %729 = vmatprep.subr.mxu0 %v627
        %730 = vmatpush2.msra.mxu0 %v626
        %731 = vmatprep.subr.mxu0 %v625
        %732 = vmatpush2.msra.mxu0 %v624
        %733 = vmatprep.subr.mxu0 %v623
        %734 = vmatpush2.msra.mxu0 %v622
        %735 = vmatprep.subr.mxu0 %v621
        %736 = vmatpush2.msra.mxu0 %v620
        %737 = vmatprep.mubr.f32.mxu0 %v664
        %738 = vmatmul.mubr.f32.gmra.mxu0 %v661
        %v739 = vpop.f32.mrf.mxu0
        %v740 = vadd.f32 0.0, %v739
        %v741 = vpop.f32.mrf.mxu0
        %v742 = vadd.f32 0.0, %v741
        %743 = vmatprep.mubr.f32.mxu0 %v668
        %744 = vmatmul.mubr.f32.gmra.mxu0 %v666
        %v745 = vpop.f32.mrf.mxu0
        %v746 = vadd.f32 0.0, %v745
        %v747 = vpop.f32.mrf.mxu0
        %v748 = vadd.f32 0.0, %v747
        %749 = vdwg.mxu0
        %750 = vmatprep.subr.mxu0 %v550
        %751 = vmatpush1.msra.mxu0 %v549
        %752 = vmatprep.subr.mxu0 %v548
        %753 = vmatpush1.msra.mxu0 %v547
        %754 = vmatprep.subr.mxu0 %v546
        %755 = vmatpush1.msra.mxu0 %v545
        %756 = vmatprep.subr.mxu0 %v544
        %757 = vmatpush1.msra.mxu0 %v543
        %758 = vmatprep.subr.mxu0 %v542
        %759 = vmatpush1.msra.mxu0 %v541
        %760 = vmatprep.subr.mxu0 %v540
        %761 = vmatpush1.msra.mxu0 %v539
        %762 = vmatprep.subr.mxu0 %v538
        %763 = vmatpush1.msra.mxu0 %v537
        %764 = vmatprep.subr.mxu0 %v536
        %765 = vmatpush1.msra.mxu0 %v535
        %766 = vmatprep.subr.mxu0 %v534
        %767 = vmatpush1.msra.mxu0 %v533
        %768 = vmatprep.subr.mxu0 %v532
        %769 = vmatpush1.msra.mxu0 %v531
        %770 = vmatprep.subr.mxu0 %v530
        %771 = vmatpush1.msra.mxu0 %v529
        %772 = vmatprep.subr.mxu0 %v528
        %773 = vmatpush1.msra.mxu0 %v527
        %774 = vmatprep.subr.mxu0 %v526
        %775 = vmatpush1.msra.mxu0 %v525
        %776 = vmatprep.subr.mxu0 %v524
        %777 = vmatpush1.msra.mxu0 %v523
        %778 = vmatprep.subr.mxu0 %v522
        %779 = vmatpush1.msra.mxu0 %v521
        %780 = vmatprep.subr.mxu0 %v520
        %781 = vmatpush1.msra.mxu0 %v519
        %782 = vmatprep.subr.mxu0 %v582
        %783 = vmatpush2.msra.mxu0 %v581
        %784 = vmatprep.subr.mxu0 %v580
        %785 = vmatpush2.msra.mxu0 %v579
        %786 = vmatprep.subr.mxu0 %v578
        %787 = vmatpush2.msra.mxu0 %v577
        %788 = vmatprep.subr.mxu0 %v576
        %789 = vmatpush2.msra.mxu0 %v575
        %790 = vmatprep.subr.mxu0 %v574
        %791 = vmatpush2.msra.mxu0 %v573
        %792 = vmatprep.subr.mxu0 %v572
        %793 = vmatpush2.msra.mxu0 %v571
        %794 = vmatprep.subr.mxu0 %v570
        %795 = vmatpush2.msra.mxu0 %v569
        %796 = vmatprep.subr.mxu0 %v568
        %797 = vmatpush2.msra.mxu0 %v567
        %798 = vmatprep.subr.mxu0 %v566
        %799 = vmatpush2.msra.mxu0 %v565
        %800 = vmatprep.subr.mxu0 %v564
        %801 = vmatpush2.msra.mxu0 %v563
        %802 = vmatprep.subr.mxu0 %v562
        %803 = vmatpush2.msra.mxu0 %v561
        %804 = vmatprep.subr.mxu0 %v560
        %805 = vmatpush2.msra.mxu0 %v559
        %806 = vmatprep.subr.mxu0 %v558
        %807 = vmatpush2.msra.mxu0 %v557
        %808 = vmatprep.subr.mxu0 %v556
        %809 = vmatpush2.msra.mxu0 %v555
        %810 = vmatprep.subr.mxu0 %v554
        %811 = vmatpush2.msra.mxu0 %v553
        %812 = vmatprep.subr.mxu0 %v552
        %813 = vmatpush2.msra.mxu0 %v551
        %814 = vmatprep.mubr.f32.mxu0 %v516
        %815 = vmatmul.mubr.f32.gmra.mxu0 %v515
        %v816 = vpop.f32.mrf.mxu0
        %v817 = vadd.f32 %v740, %v816
        %v818 = vpop.f32.mrf.mxu0
        %v819 = vadd.f32 %v742, %v818
        %820 = vmatprep.mubr.f32.mxu0 %v518
        %821 = vmatmul.mubr.f32.gmra.mxu0 %v517
        %v822 = vpop.f32.mrf.mxu0
        %v823 = vadd.f32 %v746, %v822
        %v824 = vpop.f32.mrf.mxu0
        %v825 = vadd.f32 %v748, %v824
        %826 = vdwg.mxu0
        %v827 = vld [vmem:[#allocation2] sm:$0xfc]
        %v828 = vld [vmem:[#allocation2 + $0x8] sm:$0xfc]
        %v829 = vld [vmem:[#allocation2 + $0x20] sm:$0x3]
        %v830 = vld [vmem:[#allocation2 + $0x28] sm:$0x3]
        %s831 = scalar_lea.vmem [#allocation6], 1024
        %v832 = vld [vmem:[%s831] sm:$0xff]
        %v833 = vld [vmem:[%s831 + $0x8] sm:$0xff]
        %v834 = vld [vmem:[%s831 + $0x10] sm:$0xff]
        %v835 = vld [vmem:[%s831 + $0x18] sm:$0xff]
        %v836 = vld [vmem:[%s831 + $0x20] sm:$0xff]
        %v837 = vld [vmem:[%s831 + $0x28] sm:$0xff]
        %v838 = vld [vmem:[%s831 + $0x30] sm:$0xff]
        %v839 = vld [vmem:[%s831 + $0x38] sm:$0xff]
        %v840 = vld [vmem:[%s831 + $0x40] sm:$0xff]
        %v841 = vld [vmem:[%s831 + $0x48] sm:$0xff]
        %v842 = vld [vmem:[%s831 + $0x50] sm:$0xff]
        %v843 = vld [vmem:[%s831 + $0x58] sm:$0xff]
        %v844 = vld [vmem:[%s831 + $0x60] sm:$0xff]
        %v845 = vld [vmem:[%s831 + $0x68] sm:$0xff]
        %v846 = vld [vmem:[%s831 + $0x70] sm:$0xff]
        %v847 = vld [vmem:[%s831 + $0x78] sm:$0xff]
        %v848 = vld [vmem:[%s831 + $0x80] sm:$0xff]
        %v849 = vld [vmem:[%s831 + $0x88] sm:$0xff]
        %v850 = vld [vmem:[%s831 + $0x90] sm:$0xff]
        %v851 = vld [vmem:[%s831 + $0x98] sm:$0xff]
        %v852 = vld [vmem:[%s831 + $0xa0] sm:$0xff]
        %v853 = vld [vmem:[%s831 + $0xa8] sm:$0xff]
        %v854 = vld [vmem:[%s831 + $0xb0] sm:$0xff]
        %v855 = vld [vmem:[%s831 + $0xb8] sm:$0xff]
        %v856 = vld [vmem:[%s831 + $0xc0] sm:$0xff]
        %v857 = vld [vmem:[%s831 + $0xc8] sm:$0xff]
        %v858 = vld [vmem:[%s831 + $0xd0] sm:$0xff]
        %v859 = vld [vmem:[%s831 + $0xd8] sm:$0xff]
        %v860 = vld [vmem:[%s831 + $0xe0] sm:$0xff]
        %v861 = vld [vmem:[%s831 + $0xe8] sm:$0xff]
        %v862 = vld [vmem:[%s831 + $0xf0] sm:$0xff]
        %v863 = vld [vmem:[%s831 + $0xf8] sm:$0xff]
        %v864 = vld [vmem:[%s831 + $0x100] sm:$0xff]
        %v865 = vld [vmem:[%s831 + $0x108] sm:$0xff]
        %v866 = vld [vmem:[%s831 + $0x110] sm:$0xff]
        %v867 = vld [vmem:[%s831 + $0x118] sm:$0xff]
        %v868 = vld [vmem:[%s831 + $0x120] sm:$0xff]
        %v869 = vld [vmem:[%s831 + $0x128] sm:$0xff]
        %v870 = vld [vmem:[%s831 + $0x130] sm:$0xff]
        %v871 = vld [vmem:[%s831 + $0x138] sm:$0xff]
        %v872 = vld [vmem:[%s831 + $0x140] sm:$0xff]
        %v873 = vld [vmem:[%s831 + $0x148] sm:$0xff]
        %v874 = vld [vmem:[%s831 + $0x150] sm:$0xff]
        %v875 = vld [vmem:[%s831 + $0x158] sm:$0xff]
        %v876 = vld [vmem:[%s831 + $0x160] sm:$0xff]
        %v877 = vld [vmem:[%s831 + $0x168] sm:$0xff]
        %v878 = vld [vmem:[%s831 + $0x170] sm:$0xff]
        %v879 = vld [vmem:[%s831 + $0x178] sm:$0xff]
        %v880 = vld [vmem:[%s831 + $0x180] sm:$0xff]
        %v881 = vld [vmem:[%s831 + $0x188] sm:$0xff]
        %v882 = vld [vmem:[%s831 + $0x190] sm:$0xff]
        %v883 = vld [vmem:[%s831 + $0x198] sm:$0xff]
        %v884 = vld [vmem:[%s831 + $0x1a0] sm:$0xff]
        %v885 = vld [vmem:[%s831 + $0x1a8] sm:$0xff]
        %v886 = vld [vmem:[%s831 + $0x1b0] sm:$0xff]
        %v887 = vld [vmem:[%s831 + $0x1b8] sm:$0xff]
        %v888 = vld [vmem:[%s831 + $0x1c0] sm:$0xff]
        %v889 = vld [vmem:[%s831 + $0x1c8] sm:$0xff]
        %v890 = vld [vmem:[%s831 + $0x1d0] sm:$0xff]
        %v891 = vld [vmem:[%s831 + $0x1d8] sm:$0xff]
        %v892 = vld [vmem:[%s831 + $0x1e0] sm:$0xff]
        %v893 = vld [vmem:[%s831 + $0x1e8] sm:$0xff]
        %v894 = vld [vmem:[%s831 + $0x1f0] sm:$0xff]
        %v895 = vld [vmem:[%s831 + $0x1f8] sm:$0xff]
        %vm900 = vcmask 1045504
        %v901 = vrot.slane %v827, 2
        %v902 = vrot.slane %v517, 2
        %v903 = vsel %vm900, %v901, %v902
        %v904 = vrot.slane %v828, 2
        %v905 = vrot.slane %v518, 2
        %v906 = vsel %vm900, %v904, %v905
        %v907 = vrot.slane %v829, 2
        %v908 = vsel %vm900, %v902, %v907
        %v909 = vrot.slane %v830, 2
        %v910 = vsel %vm900, %v905, %v909
        %915 = vmatprep.subr.mxu0 %v863
        %916 = vmatpush1.msra.mxu0 %v862
        %917 = vmatprep.subr.mxu0 %v861
        %918 = vmatpush1.msra.mxu0 %v860
        %919 = vmatprep.subr.mxu0 %v859
        %920 = vmatpush1.msra.mxu0 %v858
        %921 = vmatprep.subr.mxu0 %v857
        %922 = vmatpush1.msra.mxu0 %v856
        %923 = vmatprep.subr.mxu0 %v855
        %924 = vmatpush1.msra.mxu0 %v854
        %925 = vmatprep.subr.mxu0 %v853
        %926 = vmatpush1.msra.mxu0 %v852
        %927 = vmatprep.subr.mxu0 %v851
        %928 = vmatpush1.msra.mxu0 %v850
        %929 = vmatprep.subr.mxu0 %v849
        %930 = vmatpush1.msra.mxu0 %v848
        %931 = vmatprep.subr.mxu0 %v847
        %932 = vmatpush1.msra.mxu0 %v846
        %933 = vmatprep.subr.mxu0 %v845
        %934 = vmatpush1.msra.mxu0 %v844
        %935 = vmatprep.subr.mxu0 %v843
        %936 = vmatpush1.msra.mxu0 %v842
        %937 = vmatprep.subr.mxu0 %v841
        %938 = vmatpush1.msra.mxu0 %v840
        %939 = vmatprep.subr.mxu0 %v839
        %940 = vmatpush1.msra.mxu0 %v838
        %941 = vmatprep.subr.mxu0 %v837
        %942 = vmatpush1.msra.mxu0 %v836
        %943 = vmatprep.subr.mxu0 %v835
        %944 = vmatpush1.msra.mxu0 %v834
        %945 = vmatprep.subr.mxu0 %v833
        %946 = vmatpush1.msra.mxu0 %v832
        %947 = vmatprep.subr.mxu0 %v895
        %948 = vmatpush2.msra.mxu0 %v894
        %949 = vmatprep.subr.mxu0 %v893
        %950 = vmatpush2.msra.mxu0 %v892
        %951 = vmatprep.subr.mxu0 %v891
        %952 = vmatpush2.msra.mxu0 %v890
        %953 = vmatprep.subr.mxu0 %v889
        %954 = vmatpush2.msra.mxu0 %v888
        %955 = vmatprep.subr.mxu0 %v887
        %956 = vmatpush2.msra.mxu0 %v886
        %957 = vmatprep.subr.mxu0 %v885
        %958 = vmatpush2.msra.mxu0 %v884
        %959 = vmatprep.subr.mxu0 %v883
        %960 = vmatpush2.msra.mxu0 %v882
        %961 = vmatprep.subr.mxu0 %v881
        %962 = vmatpush2.msra.mxu0 %v880
        %963 = vmatprep.subr.mxu0 %v879
        %964 = vmatpush2.msra.mxu0 %v878
        %965 = vmatprep.subr.mxu0 %v877
        %966 = vmatpush2.msra.mxu0 %v876
        %967 = vmatprep.subr.mxu0 %v875
        %968 = vmatpush2.msra.mxu0 %v874
        %969 = vmatprep.subr.mxu0 %v873
        %970 = vmatpush2.msra.mxu0 %v872
        %971 = vmatprep.subr.mxu0 %v871
        %972 = vmatpush2.msra.mxu0 %v870
        %973 = vmatprep.subr.mxu0 %v869
        %974 = vmatpush2.msra.mxu0 %v868
        %975 = vmatprep.subr.mxu0 %v867
        %976 = vmatpush2.msra.mxu0 %v866
        %977 = vmatprep.subr.mxu0 %v865
        %978 = vmatpush2.msra.mxu0 %v864
        %979 = vmatprep.mubr.f32.mxu0 %v906
        %980 = vmatmul.mubr.f32.gmra.mxu0 %v903
        %v981 = vpop.f32.mrf.mxu0
        %v982 = vadd.f32 0.0, %v981
        %v983 = vpop.f32.mrf.mxu0
        %v984 = vadd.f32 0.0, %v983
        %985 = vmatprep.mubr.f32.mxu0 %v910
        %986 = vmatmul.mubr.f32.gmra.mxu0 %v908
        %v987 = vpop.f32.mrf.mxu0
        %v988 = vadd.f32 0.0, %v987
        %v989 = vpop.f32.mrf.mxu0
        %v990 = vadd.f32 0.0, %v989
        %991 = vdwg.mxu0
        %v992 = vadd.f32 %v817, %v982
        %v993 = vadd.f32 %v819, %v984
        %v994 = vadd.f32 %v823, %v988
        %v995 = vadd.f32 %v825, %v990
        %v996 = vld [vmem:[#allocation2] sm:$0xf8]
        %v997 = vld [vmem:[#allocation2 + $0x8] sm:$0xf8]
        %v998 = vld [vmem:[#allocation2 + $0x20] sm:$0x7]
        %v999 = vld [vmem:[#allocation2 + $0x28] sm:$0x7]
        %s1000 = scalar_lea.vmem [#allocation6], 1536
        %v1001 = vld [vmem:[%s1000] sm:$0xff]
        %v1002 = vld [vmem:[%s1000 + $0x8] sm:$0xff]
        %v1003 = vld [vmem:[%s1000 + $0x10] sm:$0xff]
        %v1004 = vld [vmem:[%s1000 + $0x18] sm:$0xff]
        %v1005 = vld [vmem:[%s1000 + $0x20] sm:$0xff]
        %v1006 = vld [vmem:[%s1000 + $0x28] sm:$0xff]
        %v1007 = vld [vmem:[%s1000 + $0x30] sm:$0xff]
        %v1008 = vld [vmem:[%s1000 + $0x38] sm:$0xff]
        %v1009 = vld [vmem:[%s1000 + $0x40] sm:$0xff]
        %v1010 = vld [vmem:[%s1000 + $0x48] sm:$0xff]
        %v1011 = vld [vmem:[%s1000 + $0x50] sm:$0xff]
        %v1012 = vld [vmem:[%s1000 + $0x58] sm:$0xff]
        %v1013 = vld [vmem:[%s1000 + $0x60] sm:$0xff]
        %v1014 = vld [vmem:[%s1000 + $0x68] sm:$0xff]
        %v1015 = vld [vmem:[%s1000 + $0x70] sm:$0xff]
        %v1016 = vld [vmem:[%s1000 + $0x78] sm:$0xff]
        %v1017 = vld [vmem:[%s1000 + $0x80] sm:$0xff]
        %v1018 = vld [vmem:[%s1000 + $0x88] sm:$0xff]
        %v1019 = vld [vmem:[%s1000 + $0x90] sm:$0xff]
        %v1020 = vld [vmem:[%s1000 + $0x98] sm:$0xff]
        %v1021 = vld [vmem:[%s1000 + $0xa0] sm:$0xff]
        %v1022 = vld [vmem:[%s1000 + $0xa8] sm:$0xff]
        %v1023 = vld [vmem:[%s1000 + $0xb0] sm:$0xff]
        %v1024 = vld [vmem:[%s1000 + $0xb8] sm:$0xff]
        %v1025 = vld [vmem:[%s1000 + $0xc0] sm:$0xff]
        %v1026 = vld [vmem:[%s1000 + $0xc8] sm:$0xff]
        %v1027 = vld [vmem:[%s1000 + $0xd0] sm:$0xff]
        %v1028 = vld [vmem:[%s1000 + $0xd8] sm:$0xff]
        %v1029 = vld [vmem:[%s1000 + $0xe0] sm:$0xff]
        %v1030 = vld [vmem:[%s1000 + $0xe8] sm:$0xff]
        %v1031 = vld [vmem:[%s1000 + $0xf0] sm:$0xff]
        %v1032 = vld [vmem:[%s1000 + $0xf8] sm:$0xff]
        %v1033 = vld [vmem:[%s1000 + $0x100] sm:$0xff]
        %v1034 = vld [vmem:[%s1000 + $0x108] sm:$0xff]
        %v1035 = vld [vmem:[%s1000 + $0x110] sm:$0xff]
        %v1036 = vld [vmem:[%s1000 + $0x118] sm:$0xff]
        %v1037 = vld [vmem:[%s1000 + $0x120] sm:$0xff]
        %v1038 = vld [vmem:[%s1000 + $0x128] sm:$0xff]
        %v1039 = vld [vmem:[%s1000 + $0x130] sm:$0xff]
        %v1040 = vld [vmem:[%s1000 + $0x138] sm:$0xff]
        %v1041 = vld [vmem:[%s1000 + $0x140] sm:$0xff]
        %v1042 = vld [vmem:[%s1000 + $0x148] sm:$0xff]
        %v1043 = vld [vmem:[%s1000 + $0x150] sm:$0xff]
        %v1044 = vld [vmem:[%s1000 + $0x158] sm:$0xff]
        %v1045 = vld [vmem:[%s1000 + $0x160] sm:$0xff]
        %v1046 = vld [vmem:[%s1000 + $0x168] sm:$0xff]
        %v1047 = vld [vmem:[%s1000 + $0x170] sm:$0xff]
        %v1048 = vld [vmem:[%s1000 + $0x178] sm:$0xff]
        %v1049 = vld [vmem:[%s1000 + $0x180] sm:$0xff]
        %v1050 = vld [vmem:[%s1000 + $0x188] sm:$0xff]
        %v1051 = vld [vmem:[%s1000 + $0x190] sm:$0xff]
        %v1052 = vld [vmem:[%s1000 + $0x198] sm:$0xff]
        %v1053 = vld [vmem:[%s1000 + $0x1a0] sm:$0xff]
        %v1054 = vld [vmem:[%s1000 + $0x1a8] sm:$0xff]
        %v1055 = vld [vmem:[%s1000 + $0x1b0] sm:$0xff]
        %v1056 = vld [vmem:[%s1000 + $0x1b8] sm:$0xff]
        %v1057 = vld [vmem:[%s1000 + $0x1c0] sm:$0xff]
        %v1058 = vld [vmem:[%s1000 + $0x1c8] sm:$0xff]
        %v1059 = vld [vmem:[%s1000 + $0x1d0] sm:$0xff]
        %v1060 = vld [vmem:[%s1000 + $0x1d8] sm:$0xff]
        %v1061 = vld [vmem:[%s1000 + $0x1e0] sm:$0xff]
        %v1062 = vld [vmem:[%s1000 + $0x1e8] sm:$0xff]
        %v1063 = vld [vmem:[%s1000 + $0x1f0] sm:$0xff]
        %v1064 = vld [vmem:[%s1000 + $0x1f8] sm:$0xff]
        %vm1069 = vcmask 1044480
        %v1070 = vrot.slane %v996, 3
        %v1071 = vrot.slane %v517, 3
        %v1072 = vsel %vm1069, %v1070, %v1071
        %v1073 = vrot.slane %v997, 3
        %v1074 = vrot.slane %v518, 3
        %v1075 = vsel %vm1069, %v1073, %v1074
        %v1076 = vrot.slane %v998, 3
        %v1077 = vsel %vm1069, %v1071, %v1076
        %v1078 = vrot.slane %v999, 3
        %v1079 = vsel %vm1069, %v1074, %v1078
        %1084 = vmatprep.subr.mxu0 %v1032
        %1085 = vmatpush1.msra.mxu0 %v1031
        %1086 = vmatprep.subr.mxu0 %v1030
        %1087 = vmatpush1.msra.mxu0 %v1029
        %1088 = vmatprep.subr.mxu0 %v1028
        %1089 = vmatpush1.msra.mxu0 %v1027
        %1090 = vmatprep.subr.mxu0 %v1026
        %1091 = vmatpush1.msra.mxu0 %v1025
        %1092 = vmatprep.subr.mxu0 %v1024
        %1093 = vmatpush1.msra.mxu0 %v1023
        %1094 = vmatprep.subr.mxu0 %v1022
        %1095 = vmatpush1.msra.mxu0 %v1021
        %1096 = vmatprep.subr.mxu0 %v1020
        %1097 = vmatpush1.msra.mxu0 %v1019
        %1098 = vmatprep.subr.mxu0 %v1018
        %1099 = vmatpush1.msra.mxu0 %v1017
        %1100 = vmatprep.subr.mxu0 %v1016
        %1101 = vmatpush1.msra.mxu0 %v1015
        %1102 = vmatprep.subr.mxu0 %v1014
        %1103 = vmatpush1.msra.mxu0 %v1013
        %1104 = vmatprep.subr.mxu0 %v1012
        %1105 = vmatpush1.msra.mxu0 %v1011
        %1106 = vmatprep.subr.mxu0 %v1010
        %1107 = vmatpush1.msra.mxu0 %v1009
        %1108 = vmatprep.subr.mxu0 %v1008
        %1109 = vmatpush1.msra.mxu0 %v1007
        %1110 = vmatprep.subr.mxu0 %v1006
        %1111 = vmatpush1.msra.mxu0 %v1005
        %1112 = vmatprep.subr.mxu0 %v1004
        %1113 = vmatpush1.msra.mxu0 %v1003
        %1114 = vmatprep.subr.mxu0 %v1002
        %1115 = vmatpush1.msra.mxu0 %v1001
        %1116 = vmatprep.subr.mxu0 %v1064
        %1117 = vmatpush2.msra.mxu0 %v1063
        %1118 = vmatprep.subr.mxu0 %v1062
        %1119 = vmatpush2.msra.mxu0 %v1061
        %1120 = vmatprep.subr.mxu0 %v1060
        %1121 = vmatpush2.msra.mxu0 %v1059
        %1122 = vmatprep.subr.mxu0 %v1058
        %1123 = vmatpush2.msra.mxu0 %v1057
        %1124 = vmatprep.subr.mxu0 %v1056
        %1125 = vmatpush2.msra.mxu0 %v1055
        %1126 = vmatprep.subr.mxu0 %v1054
        %1127 = vmatpush2.msra.mxu0 %v1053
        %1128 = vmatprep.subr.mxu0 %v1052
        %1129 = vmatpush2.msra.mxu0 %v1051
        %1130 = vmatprep.subr.mxu0 %v1050
        %1131 = vmatpush2.msra.mxu0 %v1049
        %1132 = vmatprep.subr.mxu0 %v1048
        %1133 = vmatpush2.msra.mxu0 %v1047
        %1134 = vmatprep.subr.mxu0 %v1046
        %1135 = vmatpush2.msra.mxu0 %v1045
        %1136 = vmatprep.subr.mxu0 %v1044
        %1137 = vmatpush2.msra.mxu0 %v1043
        %1138 = vmatprep.subr.mxu0 %v1042
        %1139 = vmatpush2.msra.mxu0 %v1041
        %1140 = vmatprep.subr.mxu0 %v1040
        %1141 = vmatpush2.msra.mxu0 %v1039
        %1142 = vmatprep.subr.mxu0 %v1038
        %1143 = vmatpush2.msra.mxu0 %v1037
        %1144 = vmatprep.subr.mxu0 %v1036
        %1145 = vmatpush2.msra.mxu0 %v1035
        %1146 = vmatprep.subr.mxu0 %v1034
        %1147 = vmatpush2.msra.mxu0 %v1033
        %1148 = vmatprep.mubr.f32.mxu0 %v1075
        %1149 = vmatmul.mubr.f32.gmra.mxu0 %v1072
        %v1150 = vpop.f32.mrf.mxu0
        %v1151 = vadd.f32 0.0, %v1150
        %v1152 = vpop.f32.mrf.mxu0
        %v1153 = vadd.f32 0.0, %v1152
        %1154 = vmatprep.mubr.f32.mxu0 %v1079
        %1155 = vmatmul.mubr.f32.gmra.mxu0 %v1077
        %v1156 = vpop.f32.mrf.mxu0
        %v1157 = vadd.f32 0.0, %v1156
        %v1158 = vpop.f32.mrf.mxu0
        %v1159 = vadd.f32 0.0, %v1158
        %1160 = vdwg.mxu0
        %v1161 = vadd.f32 %v992, %v1151
        %v1162 = vadd.f32 %v993, %v1153
        %v1163 = vadd.f32 %v994, %v1157
        %v1164 = vadd.f32 %v995, %v1159
        %v1165 = vld [vmem:[%s3] sm:$0x3]
        %v1167 = vlaneseq
        %v1168 = vshrl.u32 %v1167, 7
        %v1169 = vsub.s32 0, %v1168
        %v1170 = vrot.slane %v1165, %v1169
        %v1171 = vlaneseq
        %v1172 = vshrl.u32 %v1171, 7
        %v1173 = vsub.s32 1, %v1172
        %v1174 = vrot.slane %v1165, %v1173
        %v1177 = vadd.f32 %v1161, %v1170
        %v1178 = vadd.f32 %v1162, %v1174
        %v1179 = vadd.f32 %v1163, %v1170
        %v1180 = vadd.f32 %v1164, %v1174
        %v1181 = vmax.f32 %v1177, 0.0
        %v1182 = vmax.f32 %v1178, 0.0
        %v1183 = vmax.f32 %v1179, 0.0
        %v1184 = vmax.f32 %v1180, 0.0
        %vm1189 = vcmask 1040384
        %v1190 = vrot.slane %v1181, 7
        %v1191 = vrot.slane %v1182, 7
        %v1192 = vrot.slane %v1183, 7
        %v1193 = vsel %vm1189, %v1190, %v1192
        %v1194 = vrot.slane %v1184, 7
        %v1195 = vsel %vm1189, %v1191, %v1194
        %1202 = vst [vmem:[#allocation3] sm:$0xfe] %v1190
        %1203 = vst [vmem:[#allocation3 + $0x8] sm:$0xfe] %v1191
        %1204 = vst [vmem:[#allocation3 + $0x10] sm:$0xff] %v1193
        %1205 = vst [vmem:[#allocation3 + $0x18] sm:$0xff] %v1195
        %1206 = vst [vmem:[#allocation3 + $0x20] sm:$0x1] %v1192
        %1207 = vst [vmem:[#allocation3 + $0x28] sm:$0x1] %v1194
        %v1208 = vcombine.low %v1181, %v1182
        %v1210 = vunpack.c.l.s4 1966171168
        %v1211 = vunpack.c.0.s8 %v1210
        %v1212 = vlaneseq
        %v1213 = vshrl.u32 %v1212, 7
        %v1214 = vsub.s32 %v1211, %v1213
        %v1215 = vrot.slane %v1208, %v1214
        %v1216 = vcombine.high %v1215, %v1215
        %v1218 = vunpack.c.l.s4 1966171168
        %v1219 = vunpack.c.0.s8 %v1218
        %v1220 = vlaneseq
        %v1221 = vshrl.u32 %v1220, 7
        %v1222 = vsub.s32 %v1219, %v1221
        %v1223 = vrot.slane %v1216, %v1222
        %1225 = vst.msk [vmem:[#allocation3] ss:$8 sm:$0x3] %vm476, %v1223
        %1226 = vst.msk [vmem:[#allocation3] ss:$8 sm:$0x0] %vm476, %v1223
        %v1227 = vcombine.high %v1183, %v1184
        %v1229 = vunpack.c.l.s4 1966171168
        %v1230 = vunpack.c.0.s8 %v1229
        %v1231 = vlaneseq
        %v1232 = vshrl.u32 %v1231, 7
        %v1233 = vsub.s32 %v1230, %v1232
        %v1234 = vrot.slane %v1227, %v1233
        %v1236 = vunpack.c.l.s4 1966171168
        %v1237 = vunpack.c.0.s8 %v1236
        %v1238 = vlaneseq
        %v1239 = vshrl.u32 %v1238, 7
        %v1240 = vsub.s32 %v1237, %v1239
        %v1241 = vrot.slane %v1234, %v1240
        %v1242 = vcombine.high %v1241, %v1241
        %s1244 = scalar_lea.vmem [#allocation3], 33
        %1245 = vst.msk [vmem:[%s1244] ss:$8 sm:$0x3] %vm476, %v1242
        %1246 = vst.msk [vmem:[%s1244] ss:$8 sm:$0x0] %vm476, %v1242
        %v1247 = vld [vmem:[%s460] sm:$0xff]
        %v1248 = vld [vmem:[%s460 + $0x8] sm:$0xff]
        %v1249 = vld [vmem:[%s460 + $0x10] sm:$0xff]
        %v1250 = vld [vmem:[%s460 + $0x18] sm:$0xff]
        %v1251 = vld [vmem:[#allocation8] sm:$0xff]
        %v1252 = vld [vmem:[#allocation8 + $0x8] sm:$0xff]
        %v1253 = vld [vmem:[#allocation8 + $0x10] sm:$0xff]
        %v1254 = vld [vmem:[#allocation8 + $0x18] sm:$0xff]
        %v1255 = vld [vmem:[#allocation8 + $0x20] sm:$0xff]
        %v1256 = vld [vmem:[#allocation8 + $0x28] sm:$0xff]
        %v1257 = vld [vmem:[#allocation8 + $0x30] sm:$0xff]
        %v1258 = vld [vmem:[#allocation8 + $0x38] sm:$0xff]
        %v1259 = vld [vmem:[#allocation8 + $0x40] sm:$0xff]
        %v1260 = vld [vmem:[#allocation8 + $0x48] sm:$0xff]
        %v1261 = vld [vmem:[#allocation8 + $0x50] sm:$0xff]
        %v1262 = vld [vmem:[#allocation8 + $0x58] sm:$0xff]
        %v1263 = vld [vmem:[#allocation8 + $0x60] sm:$0xff]
        %v1264 = vld [vmem:[#allocation8 + $0x68] sm:$0xff]
        %v1265 = vld [vmem:[#allocation8 + $0x70] sm:$0xff]
        %v1266 = vld [vmem:[#allocation8 + $0x78] sm:$0xff]
        %v1267 = vld [vmem:[#allocation8 + $0x80] sm:$0xff]
        %v1268 = vld [vmem:[#allocation8 + $0x88] sm:$0xff]
        %v1269 = vld [vmem:[#allocation8 + $0x90] sm:$0xff]
        %v1270 = vld [vmem:[#allocation8 + $0x98] sm:$0xff]
        %v1271 = vld [vmem:[#allocation8 + $0xa0] sm:$0xff]
        %v1272 = vld [vmem:[#allocation8 + $0xa8] sm:$0xff]
        %v1273 = vld [vmem:[#allocation8 + $0xb0] sm:$0xff]
        %v1274 = vld [vmem:[#allocation8 + $0xb8] sm:$0xff]
        %v1275 = vld [vmem:[#allocation8 + $0xc0] sm:$0xff]
        %v1276 = vld [vmem:[#allocation8 + $0xc8] sm:$0xff]
        %v1277 = vld [vmem:[#allocation8 + $0xd0] sm:$0xff]
        %v1278 = vld [vmem:[#allocation8 + $0xd8] sm:$0xff]
        %v1279 = vld [vmem:[#allocation8 + $0xe0] sm:$0xff]
        %v1280 = vld [vmem:[#allocation8 + $0xe8] sm:$0xff]
        %v1281 = vld [vmem:[#allocation8 + $0xf0] sm:$0xff]
        %v1282 = vld [vmem:[#allocation8 + $0xf8] sm:$0xff]
        %v1283 = vld [vmem:[#allocation8 + $0x100] sm:$0xff]
        %v1284 = vld [vmem:[#allocation8 + $0x108] sm:$0xff]
        %v1285 = vld [vmem:[#allocation8 + $0x110] sm:$0xff]
        %v1286 = vld [vmem:[#allocation8 + $0x118] sm:$0xff]
        %v1287 = vld [vmem:[#allocation8 + $0x120] sm:$0xff]
        %v1288 = vld [vmem:[#allocation8 + $0x128] sm:$0xff]
        %v1289 = vld [vmem:[#allocation8 + $0x130] sm:$0xff]
        %v1290 = vld [vmem:[#allocation8 + $0x138] sm:$0xff]
        %v1291 = vld [vmem:[#allocation8 + $0x140] sm:$0xff]
        %v1292 = vld [vmem:[#allocation8 + $0x148] sm:$0xff]
        %v1293 = vld [vmem:[#allocation8 + $0x150] sm:$0xff]
        %v1294 = vld [vmem:[#allocation8 + $0x158] sm:$0xff]
        %v1295 = vld [vmem:[#allocation8 + $0x160] sm:$0xff]
        %v1296 = vld [vmem:[#allocation8 + $0x168] sm:$0xff]
        %v1297 = vld [vmem:[#allocation8 + $0x170] sm:$0xff]
        %v1298 = vld [vmem:[#allocation8 + $0x178] sm:$0xff]
        %v1299 = vld [vmem:[#allocation8 + $0x180] sm:$0xff]
        %v1300 = vld [vmem:[#allocation8 + $0x188] sm:$0xff]
        %v1301 = vld [vmem:[#allocation8 + $0x190] sm:$0xff]
        %v1302 = vld [vmem:[#allocation8 + $0x198] sm:$0xff]
        %v1303 = vld [vmem:[#allocation8 + $0x1a0] sm:$0xff]
        %v1304 = vld [vmem:[#allocation8 + $0x1a8] sm:$0xff]
        %v1305 = vld [vmem:[#allocation8 + $0x1b0] sm:$0xff]
        %v1306 = vld [vmem:[#allocation8 + $0x1b8] sm:$0xff]
        %v1307 = vld [vmem:[#allocation8 + $0x1c0] sm:$0xff]
        %v1308 = vld [vmem:[#allocation8 + $0x1c8] sm:$0xff]
        %v1309 = vld [vmem:[#allocation8 + $0x1d0] sm:$0xff]
        %v1310 = vld [vmem:[#allocation8 + $0x1d8] sm:$0xff]
        %v1311 = vld [vmem:[#allocation8 + $0x1e0] sm:$0xff]
        %v1312 = vld [vmem:[#allocation8 + $0x1e8] sm:$0xff]
        %v1313 = vld [vmem:[#allocation8 + $0x1f0] sm:$0xff]
        %v1314 = vld [vmem:[#allocation8 + $0x1f8] sm:$0xff]
        %v1315 = vld [vmem:[%s5] sm:$0x3]
        %v1317 = vlaneseq
        %v1318 = vshrl.u32 %v1317, 7
        %v1319 = vsub.s32 0, %v1318
        %v1320 = vrot.slane %v1315, %v1319
        %v1321 = vlaneseq
        %v1322 = vshrl.u32 %v1321, 7
        %v1323 = vsub.s32 1, %v1322
        %v1324 = vrot.slane %v1315, %v1323
        %1327 = vmatprep.subr.mxu0 %v1282
        %1328 = vmatpush1.msra.mxu0 %v1281
        %1329 = vmatprep.subr.mxu0 %v1280
        %1330 = vmatpush1.msra.mxu0 %v1279
        %1331 = vmatprep.subr.mxu0 %v1278
        %1332 = vmatpush1.msra.mxu0 %v1277
        %1333 = vmatprep.subr.mxu0 %v1276
        %1334 = vmatpush1.msra.mxu0 %v1275
        %1335 = vmatprep.subr.mxu0 %v1274
        %1336 = vmatpush1.msra.mxu0 %v1273
        %1337 = vmatprep.subr.mxu0 %v1272
        %1338 = vmatpush1.msra.mxu0 %v1271
        %1339 = vmatprep.subr.mxu0 %v1270
        %1340 = vmatpush1.msra.mxu0 %v1269
        %1341 = vmatprep.subr.mxu0 %v1268
        %1342 = vmatpush1.msra.mxu0 %v1267
        %1343 = vmatprep.subr.mxu0 %v1266
        %1344 = vmatpush1.msra.mxu0 %v1265
        %1345 = vmatprep.subr.mxu0 %v1264
        %1346 = vmatpush1.msra.mxu0 %v1263
        %1347 = vmatprep.subr.mxu0 %v1262
        %1348 = vmatpush1.msra.mxu0 %v1261
        %1349 = vmatprep.subr.mxu0 %v1260
        %1350 = vmatpush1.msra.mxu0 %v1259
        %1351 = vmatprep.subr.mxu0 %v1258
        %1352 = vmatpush1.msra.mxu0 %v1257
        %1353 = vmatprep.subr.mxu0 %v1256
        %1354 = vmatpush1.msra.mxu0 %v1255
        %1355 = vmatprep.subr.mxu0 %v1254
        %1356 = vmatpush1.msra.mxu0 %v1253
        %1357 = vmatprep.subr.mxu0 %v1252
        %1358 = vmatpush1.msra.mxu0 %v1251
        %1359 = vmatprep.subr.mxu0 %v1314
        %1360 = vmatpush2.msra.mxu0 %v1313
        %1361 = vmatprep.subr.mxu0 %v1312
        %1362 = vmatpush2.msra.mxu0 %v1311
        %1363 = vmatprep.subr.mxu0 %v1310
        %1364 = vmatpush2.msra.mxu0 %v1309
        %1365 = vmatprep.subr.mxu0 %v1308
        %1366 = vmatpush2.msra.mxu0 %v1307
        %1367 = vmatprep.subr.mxu0 %v1306
        %1368 = vmatpush2.msra.mxu0 %v1305
        %1369 = vmatprep.subr.mxu0 %v1304
        %1370 = vmatpush2.msra.mxu0 %v1303
        %1371 = vmatprep.subr.mxu0 %v1302
        %1372 = vmatpush2.msra.mxu0 %v1301
        %1373 = vmatprep.subr.mxu0 %v1300
        %1374 = vmatpush2.msra.mxu0 %v1299
        %1375 = vmatprep.subr.mxu0 %v1298
        %1376 = vmatpush2.msra.mxu0 %v1297
        %1377 = vmatprep.subr.mxu0 %v1296
        %1378 = vmatpush2.msra.mxu0 %v1295
        %1379 = vmatprep.subr.mxu0 %v1294
        %1380 = vmatpush2.msra.mxu0 %v1293
        %1381 = vmatprep.subr.mxu0 %v1292
        %1382 = vmatpush2.msra.mxu0 %v1291
        %1383 = vmatprep.subr.mxu0 %v1290
        %1384 = vmatpush2.msra.mxu0 %v1289
        %1385 = vmatprep.subr.mxu0 %v1288
        %1386 = vmatpush2.msra.mxu0 %v1287
        %1387 = vmatprep.subr.mxu0 %v1286
        %1388 = vmatpush2.msra.mxu0 %v1285
        %1389 = vmatprep.subr.mxu0 %v1284
        %1390 = vmatpush2.msra.mxu0 %v1283
        %1391 = vmatprep.mubr.f32.mxu0 %v1248
        %1392 = vmatmul.mubr.f32.gmra.mxu0 %v1247
        %v1393 = vpop.f32.mrf.mxu0
        %v1394 = vadd.f32 %v1320, %v1393
        %v1395 = vpop.f32.mrf.mxu0
        %v1396 = vadd.f32 %v1324, %v1395
        %1397 = vmatprep.mubr.f32.mxu0 %v1250
        %1398 = vmatmul.mubr.f32.gmra.mxu0 %v1249
        %v1399 = vpop.f32.mrf.mxu0
        %v1400 = vadd.f32 %v1320, %v1399
        %v1401 = vpop.f32.mrf.mxu0
        %v1402 = vadd.f32 %v1324, %v1401
        %1403 = vdwg.mxu0
        %v1404 = vmax.f32 %v1394, 0.0
        %v1405 = vmax.f32 %v1396, 0.0
        %v1406 = vmax.f32 %v1400, 0.0
        %v1407 = vmax.f32 %v1402, 0.0
        %v1412 = vrot.slane %v1404, 7
        %v1413 = vrot.slane %v1405, 7
        %v1414 = vrot.slane %v1406, 7
        %v1415 = vsel %vm1189, %v1412, %v1414
        %v1416 = vrot.slane %v1407, 7
        %v1417 = vsel %vm1189, %v1413, %v1416
        %1424 = vst [vmem:[#allocation4] sm:$0xfe] %v1412
        %1425 = vst [vmem:[#allocation4 + $0x8] sm:$0xfe] %v1413
        %1426 = vst [vmem:[#allocation4 + $0x10] sm:$0xff] %v1415
        %1427 = vst [vmem:[#allocation4 + $0x18] sm:$0xff] %v1417
        %1428 = vst [vmem:[#allocation4 + $0x20] sm:$0x1] %v1414
        %1429 = vst [vmem:[#allocation4 + $0x28] sm:$0x1] %v1416
        %v1430 = vcombine.low %v1404, %v1405
        %v1432 = vunpack.c.l.s4 1966171168
        %v1433 = vunpack.c.0.s8 %v1432
        %v1434 = vlaneseq
        %v1435 = vshrl.u32 %v1434, 7
        %v1436 = vsub.s32 %v1433, %v1435
        %v1437 = vrot.slane %v1430, %v1436
        %v1438 = vcombine.high %v1437, %v1437
        %v1440 = vunpack.c.l.s4 1966171168
        %v1441 = vunpack.c.0.s8 %v1440
        %v1442 = vlaneseq
        %v1443 = vshrl.u32 %v1442, 7
        %v1444 = vsub.s32 %v1441, %v1443
        %v1445 = vrot.slane %v1438, %v1444
        %1447 = vst.msk [vmem:[#allocation4] ss:$8 sm:$0x3] %vm476, %v1445
        %1448 = vst.msk [vmem:[#allocation4] ss:$8 sm:$0x0] %vm476, %v1445
        %v1449 = vcombine.high %v1406, %v1407
        %v1451 = vunpack.c.l.s4 1966171168
        %v1452 = vunpack.c.0.s8 %v1451
        %v1453 = vlaneseq
        %v1454 = vshrl.u32 %v1453, 7
        %v1455 = vsub.s32 %v1452, %v1454
        %v1456 = vrot.slane %v1449, %v1455
        %v1458 = vunpack.c.l.s4 1966171168
        %v1459 = vunpack.c.0.s8 %v1458
        %v1460 = vlaneseq
        %v1461 = vshrl.u32 %v1460, 7
        %v1462 = vsub.s32 %v1459, %v1461
        %v1463 = vrot.slane %v1456, %v1462
        %v1464 = vcombine.high %v1463, %v1463
        %s1466 = scalar_lea.vmem [#allocation4], 33
        %1467 = vst.msk [vmem:[%s1466] ss:$8 sm:$0x3] %vm476, %v1464
        %1468 = vst.msk [vmem:[%s1466] ss:$8 sm:$0x0] %vm476, %v1464
        %v1469 = vld [vmem:[#allocation3] sm:$0xff]
        %v1470 = vld [vmem:[#allocation3 + $0x8] sm:$0xff]
        %v1471 = vld [vmem:[#allocation3 + $0x10] sm:$0xff]
        %v1472 = vld [vmem:[#allocation3 + $0x18] sm:$0xff]
        %v1473 = vld [vmem:[%s6] sm:$0xff]
        %v1474 = vld [vmem:[%s6 + $0x8] sm:$0xff]
        %v1475 = vld [vmem:[%s6 + $0x10] sm:$0xff]
        %v1476 = vld [vmem:[%s6 + $0x18] sm:$0xff]
        %v1477 = vld [vmem:[%s6 + $0x20] sm:$0xff]
        %v1478 = vld [vmem:[%s6 + $0x28] sm:$0xff]
        %v1479 = vld [vmem:[%s6 + $0x30] sm:$0xff]
        %v1480 = vld [vmem:[%s6 + $0x38] sm:$0xff]
        %v1481 = vld [vmem:[%s6 + $0x40] sm:$0xff]
        %v1482 = vld [vmem:[%s6 + $0x48] sm:$0xff]
        %v1483 = vld [vmem:[%s6 + $0x50] sm:$0xff]
        %v1484 = vld [vmem:[%s6 + $0x58] sm:$0xff]
        %v1485 = vld [vmem:[%s6 + $0x60] sm:$0xff]
        %v1486 = vld [vmem:[%s6 + $0x68] sm:$0xff]
        %v1487 = vld [vmem:[%s6 + $0x70] sm:$0xff]
        %v1488 = vld [vmem:[%s6 + $0x78] sm:$0xff]
        %v1489 = vld [vmem:[%s6 + $0x80] sm:$0xff]
        %v1490 = vld [vmem:[%s6 + $0x88] sm:$0xff]
        %v1491 = vld [vmem:[%s6 + $0x90] sm:$0xff]
        %v1492 = vld [vmem:[%s6 + $0x98] sm:$0xff]
        %v1493 = vld [vmem:[%s6 + $0xa0] sm:$0xff]
        %v1494 = vld [vmem:[%s6 + $0xa8] sm:$0xff]
        %v1495 = vld [vmem:[%s6 + $0xb0] sm:$0xff]
        %v1496 = vld [vmem:[%s6 + $0xb8] sm:$0xff]
        %v1497 = vld [vmem:[%s6 + $0xc0] sm:$0xff]
        %v1498 = vld [vmem:[%s6 + $0xc8] sm:$0xff]
        %v1499 = vld [vmem:[%s6 + $0xd0] sm:$0xff]
        %v1500 = vld [vmem:[%s6 + $0xd8] sm:$0xff]
        %v1501 = vld [vmem:[%s6 + $0xe0] sm:$0xff]
        %v1502 = vld [vmem:[%s6 + $0xe8] sm:$0xff]
        %v1503 = vld [vmem:[%s6 + $0xf0] sm:$0xff]
        %v1504 = vld [vmem:[%s6 + $0xf8] sm:$0xff]
        %v1505 = vld [vmem:[%s6 + $0x100] sm:$0xff]
        %v1506 = vld [vmem:[%s6 + $0x108] sm:$0xff]
        %v1507 = vld [vmem:[%s6 + $0x110] sm:$0xff]
        %v1508 = vld [vmem:[%s6 + $0x118] sm:$0xff]
        %v1509 = vld [vmem:[%s6 + $0x120] sm:$0xff]
        %v1510 = vld [vmem:[%s6 + $0x128] sm:$0xff]
        %v1511 = vld [vmem:[%s6 + $0x130] sm:$0xff]
        %v1512 = vld [vmem:[%s6 + $0x138] sm:$0xff]
        %v1513 = vld [vmem:[%s6 + $0x140] sm:$0xff]
        %v1514 = vld [vmem:[%s6 + $0x148] sm:$0xff]
        %v1515 = vld [vmem:[%s6 + $0x150] sm:$0xff]
        %v1516 = vld [vmem:[%s6 + $0x158] sm:$0xff]
        %v1517 = vld [vmem:[%s6 + $0x160] sm:$0xff]
        %v1518 = vld [vmem:[%s6 + $0x168] sm:$0xff]
        %v1519 = vld [vmem:[%s6 + $0x170] sm:$0xff]
        %v1520 = vld [vmem:[%s6 + $0x178] sm:$0xff]
        %v1521 = vld [vmem:[%s6 + $0x180] sm:$0xff]
        %v1522 = vld [vmem:[%s6 + $0x188] sm:$0xff]
        %v1523 = vld [vmem:[%s6 + $0x190] sm:$0xff]
        %v1524 = vld [vmem:[%s6 + $0x198] sm:$0xff]
        %v1525 = vld [vmem:[%s6 + $0x1a0] sm:$0xff]
        %v1526 = vld [vmem:[%s6 + $0x1a8] sm:$0xff]
        %v1527 = vld [vmem:[%s6 + $0x1b0] sm:$0xff]
        %v1528 = vld [vmem:[%s6 + $0x1b8] sm:$0xff]
        %v1529 = vld [vmem:[%s6 + $0x1c0] sm:$0xff]
        %v1530 = vld [vmem:[%s6 + $0x1c8] sm:$0xff]
        %v1531 = vld [vmem:[%s6 + $0x1d0] sm:$0xff]
        %v1532 = vld [vmem:[%s6 + $0x1d8] sm:$0xff]
        %v1533 = vld [vmem:[%s6 + $0x1e0] sm:$0xff]
        %v1534 = vld [vmem:[%s6 + $0x1e8] sm:$0xff]
        %v1535 = vld [vmem:[%s6 + $0x1f0] sm:$0xff]
        %v1536 = vld [vmem:[%s6 + $0x1f8] sm:$0xff]
        %v1537 = vld [vmem:[#allocation4] sm:$0xff]
        %v1538 = vld [vmem:[#allocation4 + $0x8] sm:$0xff]
        %v1539 = vld [vmem:[#allocation4 + $0x10] sm:$0xff]
        %v1540 = vld [vmem:[#allocation4 + $0x18] sm:$0xff]
        %v1541 = vld [vmem:[#allocation10] sm:$0xff]
        %v1542 = vld [vmem:[#allocation10 + $0x8] sm:$0xff]
        %v1543 = vld [vmem:[#allocation10 + $0x10] sm:$0xff]
        %v1544 = vld [vmem:[#allocation10 + $0x18] sm:$0xff]
        %v1545 = vld [vmem:[#allocation10 + $0x20] sm:$0xff]
        %v1546 = vld [vmem:[#allocation10 + $0x28] sm:$0xff]
        %v1547 = vld [vmem:[#allocation10 + $0x30] sm:$0xff]
        %v1548 = vld [vmem:[#allocation10 + $0x38] sm:$0xff]
        %v1549 = vld [vmem:[#allocation10 + $0x40] sm:$0xff]
        %v1550 = vld [vmem:[#allocation10 + $0x48] sm:$0xff]
        %v1551 = vld [vmem:[#allocation10 + $0x50] sm:$0xff]
        %v1552 = vld [vmem:[#allocation10 + $0x58] sm:$0xff]
        %v1553 = vld [vmem:[#allocation10 + $0x60] sm:$0xff]
        %v1554 = vld [vmem:[#allocation10 + $0x68] sm:$0xff]
        %v1555 = vld [vmem:[#allocation10 + $0x70] sm:$0xff]
        %v1556 = vld [vmem:[#allocation10 + $0x78] sm:$0xff]
        %v1557 = vld [vmem:[#allocation10 + $0x80] sm:$0xff]
        %v1558 = vld [vmem:[#allocation10 + $0x88] sm:$0xff]
        %v1559 = vld [vmem:[#allocation10 + $0x90] sm:$0xff]
        %v1560 = vld [vmem:[#allocation10 + $0x98] sm:$0xff]
        %v1561 = vld [vmem:[#allocation10 + $0xa0] sm:$0xff]
        %v1562 = vld [vmem:[#allocation10 + $0xa8] sm:$0xff]
        %v1563 = vld [vmem:[#allocation10 + $0xb0] sm:$0xff]
        %v1564 = vld [vmem:[#allocation10 + $0xb8] sm:$0xff]
        %v1565 = vld [vmem:[#allocation10 + $0xc0] sm:$0xff]
        %v1566 = vld [vmem:[#allocation10 + $0xc8] sm:$0xff]
        %v1567 = vld [vmem:[#allocation10 + $0xd0] sm:$0xff]
        %v1568 = vld [vmem:[#allocation10 + $0xd8] sm:$0xff]
        %v1569 = vld [vmem:[#allocation10 + $0xe0] sm:$0xff]
        %v1570 = vld [vmem:[#allocation10 + $0xe8] sm:$0xff]
        %v1571 = vld [vmem:[#allocation10 + $0xf0] sm:$0xff]
        %v1572 = vld [vmem:[#allocation10 + $0xf8] sm:$0xff]
        %v1573 = vld [vmem:[#allocation10 + $0x100] sm:$0xff]
        %v1574 = vld [vmem:[#allocation10 + $0x108] sm:$0xff]
        %v1575 = vld [vmem:[#allocation10 + $0x110] sm:$0xff]
        %v1576 = vld [vmem:[#allocation10 + $0x118] sm:$0xff]
        %v1577 = vld [vmem:[#allocation10 + $0x120] sm:$0xff]
        %v1578 = vld [vmem:[#allocation10 + $0x128] sm:$0xff]
        %v1579 = vld [vmem:[#allocation10 + $0x130] sm:$0xff]
        %v1580 = vld [vmem:[#allocation10 + $0x138] sm:$0xff]
        %v1581 = vld [vmem:[#allocation10 + $0x140] sm:$0xff]
        %v1582 = vld [vmem:[#allocation10 + $0x148] sm:$0xff]
        %v1583 = vld [vmem:[#allocation10 + $0x150] sm:$0xff]
        %v1584 = vld [vmem:[#allocation10 + $0x158] sm:$0xff]
        %v1585 = vld [vmem:[#allocation10 + $0x160] sm:$0xff]
        %v1586 = vld [vmem:[#allocation10 + $0x168] sm:$0xff]
        %v1587 = vld [vmem:[#allocation10 + $0x170] sm:$0xff]
        %v1588 = vld [vmem:[#allocation10 + $0x178] sm:$0xff]
        %v1589 = vld [vmem:[#allocation10 + $0x180] sm:$0xff]
        %v1590 = vld [vmem:[#allocation10 + $0x188] sm:$0xff]
        %v1591 = vld [vmem:[#allocation10 + $0x190] sm:$0xff]
        %v1592 = vld [vmem:[#allocation10 + $0x198] sm:$0xff]
        %v1593 = vld [vmem:[#allocation10 + $0x1a0] sm:$0xff]
        %v1594 = vld [vmem:[#allocation10 + $0x1a8] sm:$0xff]
        %v1595 = vld [vmem:[#allocation10 + $0x1b0] sm:$0xff]
        %v1596 = vld [vmem:[#allocation10 + $0x1b8] sm:$0xff]
        %v1597 = vld [vmem:[#allocation10 + $0x1c0] sm:$0xff]
        %v1598 = vld [vmem:[#allocation10 + $0x1c8] sm:$0xff]
        %v1599 = vld [vmem:[#allocation10 + $0x1d0] sm:$0xff]
        %v1600 = vld [vmem:[#allocation10 + $0x1d8] sm:$0xff]
        %v1601 = vld [vmem:[#allocation10 + $0x1e0] sm:$0xff]
        %v1602 = vld [vmem:[#allocation10 + $0x1e8] sm:$0xff]
        %v1603 = vld [vmem:[#allocation10 + $0x1f0] sm:$0xff]
        %v1604 = vld [vmem:[#allocation10 + $0x1f8] sm:$0xff]
        %1605 = vmatprep.subr.mxu0 %v1572
        %1606 = vmatpush1.msra.mxu0 %v1571
        %1607 = vmatprep.subr.mxu0 %v1570
        %1608 = vmatpush1.msra.mxu0 %v1569
        %1609 = vmatprep.subr.mxu0 %v1568
        %1610 = vmatpush1.msra.mxu0 %v1567
        %1611 = vmatprep.subr.mxu0 %v1566
        %1612 = vmatpush1.msra.mxu0 %v1565
        %1613 = vmatprep.subr.mxu0 %v1564
        %1614 = vmatpush1.msra.mxu0 %v1563
        %1615 = vmatprep.subr.mxu0 %v1562
        %1616 = vmatpush1.msra.mxu0 %v1561
        %1617 = vmatprep.subr.mxu0 %v1560
        %1618 = vmatpush1.msra.mxu0 %v1559
        %1619 = vmatprep.subr.mxu0 %v1558
        %1620 = vmatpush1.msra.mxu0 %v1557
        %1621 = vmatprep.subr.mxu0 %v1556
        %1622 = vmatpush1.msra.mxu0 %v1555
        %1623 = vmatprep.subr.mxu0 %v1554
        %1624 = vmatpush1.msra.mxu0 %v1553
        %1625 = vmatprep.subr.mxu0 %v1552
        %1626 = vmatpush1.msra.mxu0 %v1551
        %1627 = vmatprep.subr.mxu0 %v1550
        %1628 = vmatpush1.msra.mxu0 %v1549
        %1629 = vmatprep.subr.mxu0 %v1548
        %1630 = vmatpush1.msra.mxu0 %v1547
        %1631 = vmatprep.subr.mxu0 %v1546
        %1632 = vmatpush1.msra.mxu0 %v1545
        %1633 = vmatprep.subr.mxu0 %v1544
        %1634 = vmatpush1.msra.mxu0 %v1543
        %1635 = vmatprep.subr.mxu0 %v1542
        %1636 = vmatpush1.msra.mxu0 %v1541
        %1637 = vmatprep.subr.mxu0 %v1604
        %1638 = vmatpush2.msra.mxu0 %v1603
        %1639 = vmatprep.subr.mxu0 %v1602
        %1640 = vmatpush2.msra.mxu0 %v1601
        %1641 = vmatprep.subr.mxu0 %v1600
        %1642 = vmatpush2.msra.mxu0 %v1599
        %1643 = vmatprep.subr.mxu0 %v1598
        %1644 = vmatpush2.msra.mxu0 %v1597
        %1645 = vmatprep.subr.mxu0 %v1596
        %1646 = vmatpush2.msra.mxu0 %v1595
        %1647 = vmatprep.subr.mxu0 %v1594
        %1648 = vmatpush2.msra.mxu0 %v1593
        %1649 = vmatprep.subr.mxu0 %v1592
        %1650 = vmatpush2.msra.mxu0 %v1591
        %1651 = vmatprep.subr.mxu0 %v1590
        %1652 = vmatpush2.msra.mxu0 %v1589
        %1653 = vmatprep.subr.mxu0 %v1588
        %1654 = vmatpush2.msra.mxu0 %v1587
        %1655 = vmatprep.subr.mxu0 %v1586
        %1656 = vmatpush2.msra.mxu0 %v1585
        %1657 = vmatprep.subr.mxu0 %v1584
        %1658 = vmatpush2.msra.mxu0 %v1583
        %1659 = vmatprep.subr.mxu0 %v1582
        %1660 = vmatpush2.msra.mxu0 %v1581
        %1661 = vmatprep.subr.mxu0 %v1580
        %1662 = vmatpush2.msra.mxu0 %v1579
        %1663 = vmatprep.subr.mxu0 %v1578
        %1664 = vmatpush2.msra.mxu0 %v1577
        %1665 = vmatprep.subr.mxu0 %v1576
        %1666 = vmatpush2.msra.mxu0 %v1575
        %1667 = vmatprep.subr.mxu0 %v1574
        %1668 = vmatpush2.msra.mxu0 %v1573
        %1669 = vmatprep.mubr.f32.mxu0 %v1538
        %1670 = vmatmul.mubr.f32.gmra.mxu0 %v1537
        %v1671 = vpop.f32.mrf.mxu0
        %v1672 = vadd.f32 0.0, %v1671
        %v1673 = vpop.f32.mrf.mxu0
        %v1674 = vadd.f32 0.0, %v1673
        %1675 = vmatprep.mubr.f32.mxu0 %v1540
        %1676 = vmatmul.mubr.f32.gmra.mxu0 %v1539
        %v1677 = vpop.f32.mrf.mxu0
        %v1678 = vadd.f32 0.0, %v1677
        %v1679 = vpop.f32.mrf.mxu0
        %v1680 = vadd.f32 0.0, %v1679
        %1681 = vdwg.mxu0
        %1682 = vmatprep.subr.mxu0 %v1504
        %1683 = vmatpush1.msra.mxu0 %v1503
        %1684 = vmatprep.subr.mxu0 %v1502
        %1685 = vmatpush1.msra.mxu0 %v1501
        %1686 = vmatprep.subr.mxu0 %v1500
        %1687 = vmatpush1.msra.mxu0 %v1499
        %1688 = vmatprep.subr.mxu0 %v1498
        %1689 = vmatpush1.msra.mxu0 %v1497
        %1690 = vmatprep.subr.mxu0 %v1496
        %1691 = vmatpush1.msra.mxu0 %v1495
        %1692 = vmatprep.subr.mxu0 %v1494
        %1693 = vmatpush1.msra.mxu0 %v1493
        %1694 = vmatprep.subr.mxu0 %v1492
        %1695 = vmatpush1.msra.mxu0 %v1491
        %1696 = vmatprep.subr.mxu0 %v1490
        %1697 = vmatpush1.msra.mxu0 %v1489
        %1698 = vmatprep.subr.mxu0 %v1488
        %1699 = vmatpush1.msra.mxu0 %v1487
        %1700 = vmatprep.subr.mxu0 %v1486
        %1701 = vmatpush1.msra.mxu0 %v1485
        %1702 = vmatprep.subr.mxu0 %v1484
        %1703 = vmatpush1.msra.mxu0 %v1483
        %1704 = vmatprep.subr.mxu0 %v1482
        %1705 = vmatpush1.msra.mxu0 %v1481
        %1706 = vmatprep.subr.mxu0 %v1480
        %1707 = vmatpush1.msra.mxu0 %v1479
        %1708 = vmatprep.subr.mxu0 %v1478
        %1709 = vmatpush1.msra.mxu0 %v1477
        %1710 = vmatprep.subr.mxu0 %v1476
        %1711 = vmatpush1.msra.mxu0 %v1475
        %1712 = vmatprep.subr.mxu0 %v1474
        %1713 = vmatpush1.msra.mxu0 %v1473
        %1714 = vmatprep.subr.mxu0 %v1536
        %1715 = vmatpush2.msra.mxu0 %v1535
        %1716 = vmatprep.subr.mxu0 %v1534
        %1717 = vmatpush2.msra.mxu0 %v1533
        %1718 = vmatprep.subr.mxu0 %v1532
        %1719 = vmatpush2.msra.mxu0 %v1531
        %1720 = vmatprep.subr.mxu0 %v1530
        %1721 = vmatpush2.msra.mxu0 %v1529
        %1722 = vmatprep.subr.mxu0 %v1528
        %1723 = vmatpush2.msra.mxu0 %v1527
        %1724 = vmatprep.subr.mxu0 %v1526
        %1725 = vmatpush2.msra.mxu0 %v1525
        %1726 = vmatprep.subr.mxu0 %v1524
        %1727 = vmatpush2.msra.mxu0 %v1523
        %1728 = vmatprep.subr.mxu0 %v1522
        %1729 = vmatpush2.msra.mxu0 %v1521
        %1730 = vmatprep.subr.mxu0 %v1520
        %1731 = vmatpush2.msra.mxu0 %v1519
        %1732 = vmatprep.subr.mxu0 %v1518
        %1733 = vmatpush2.msra.mxu0 %v1517
        %1734 = vmatprep.subr.mxu0 %v1516
        %1735 = vmatpush2.msra.mxu0 %v1515
        %1736 = vmatprep.subr.mxu0 %v1514
        %1737 = vmatpush2.msra.mxu0 %v1513
        %1738 = vmatprep.subr.mxu0 %v1512
        %1739 = vmatpush2.msra.mxu0 %v1511
        %1740 = vmatprep.subr.mxu0 %v1510
        %1741 = vmatpush2.msra.mxu0 %v1509
        %1742 = vmatprep.subr.mxu0 %v1508
        %1743 = vmatpush2.msra.mxu0 %v1507
        %1744 = vmatprep.subr.mxu0 %v1506
        %1745 = vmatpush2.msra.mxu0 %v1505
        %1746 = vmatprep.mubr.f32.mxu0 %v1470
        %1747 = vmatmul.mubr.f32.gmra.mxu0 %v1469
        %v1748 = vpop.f32.mrf.mxu0
        %v1749 = vadd.f32 %v1672, %v1748
        %v1750 = vpop.f32.mrf.mxu0
        %v1751 = vadd.f32 %v1674, %v1750
        %1752 = vmatprep.mubr.f32.mxu0 %v1472
        %1753 = vmatmul.mubr.f32.gmra.mxu0 %v1471
        %v1754 = vpop.f32.mrf.mxu0
        %v1755 = vadd.f32 %v1678, %v1754
        %v1756 = vpop.f32.mrf.mxu0
        %v1757 = vadd.f32 %v1680, %v1756
        %1758 = vdwg.mxu0
        %v1759 = vld [vmem:[#allocation3] sm:$0xfe]
        %v1760 = vld [vmem:[#allocation3 + $0x8] sm:$0xfe]
        %v1761 = vld [vmem:[#allocation3 + $0x10] sm:$0xff]
        %v1762 = vld [vmem:[#allocation3 + $0x18] sm:$0xff]
        %v1763 = vld [vmem:[#allocation3 + $0x20] sm:$0x1]
        %v1764 = vld [vmem:[#allocation3 + $0x28] sm:$0x1]
        %s1765 = scalar_lea.vmem %s6, 512
        %v1766 = vld [vmem:[%s1765] sm:$0xff]
        %v1767 = vld [vmem:[%s1765 + $0x8] sm:$0xff]
        %v1768 = vld [vmem:[%s1765 + $0x10] sm:$0xff]
        %v1769 = vld [vmem:[%s1765 + $0x18] sm:$0xff]
        %v1770 = vld [vmem:[%s1765 + $0x20] sm:$0xff]
        %v1771 = vld [vmem:[%s1765 + $0x28] sm:$0xff]
        %v1772 = vld [vmem:[%s1765 + $0x30] sm:$0xff]
        %v1773 = vld [vmem:[%s1765 + $0x38] sm:$0xff]
        %v1774 = vld [vmem:[%s1765 + $0x40] sm:$0xff]
        %v1775 = vld [vmem:[%s1765 + $0x48] sm:$0xff]
        %v1776 = vld [vmem:[%s1765 + $0x50] sm:$0xff]
        %v1777 = vld [vmem:[%s1765 + $0x58] sm:$0xff]
        %v1778 = vld [vmem:[%s1765 + $0x60] sm:$0xff]
        %v1779 = vld [vmem:[%s1765 + $0x68] sm:$0xff]
        %v1780 = vld [vmem:[%s1765 + $0x70] sm:$0xff]
        %v1781 = vld [vmem:[%s1765 + $0x78] sm:$0xff]
        %v1782 = vld [vmem:[%s1765 + $0x80] sm:$0xff]
        %v1783 = vld [vmem:[%s1765 + $0x88] sm:$0xff]
        %v1784 = vld [vmem:[%s1765 + $0x90] sm:$0xff]
        %v1785 = vld [vmem:[%s1765 + $0x98] sm:$0xff]
        %v1786 = vld [vmem:[%s1765 + $0xa0] sm:$0xff]
        %v1787 = vld [vmem:[%s1765 + $0xa8] sm:$0xff]
        %v1788 = vld [vmem:[%s1765 + $0xb0] sm:$0xff]
        %v1789 = vld [vmem:[%s1765 + $0xb8] sm:$0xff]
        %v1790 = vld [vmem:[%s1765 + $0xc0] sm:$0xff]
        %v1791 = vld [vmem:[%s1765 + $0xc8] sm:$0xff]
        %v1792 = vld [vmem:[%s1765 + $0xd0] sm:$0xff]
        %v1793 = vld [vmem:[%s1765 + $0xd8] sm:$0xff]
        %v1794 = vld [vmem:[%s1765 + $0xe0] sm:$0xff]
        %v1795 = vld [vmem:[%s1765 + $0xe8] sm:$0xff]
        %v1796 = vld [vmem:[%s1765 + $0xf0] sm:$0xff]
        %v1797 = vld [vmem:[%s1765 + $0xf8] sm:$0xff]
        %v1798 = vld [vmem:[%s1765 + $0x100] sm:$0xff]
        %v1799 = vld [vmem:[%s1765 + $0x108] sm:$0xff]
        %v1800 = vld [vmem:[%s1765 + $0x110] sm:$0xff]
        %v1801 = vld [vmem:[%s1765 + $0x118] sm:$0xff]
        %v1802 = vld [vmem:[%s1765 + $0x120] sm:$0xff]
        %v1803 = vld [vmem:[%s1765 + $0x128] sm:$0xff]
        %v1804 = vld [vmem:[%s1765 + $0x130] sm:$0xff]
        %v1805 = vld [vmem:[%s1765 + $0x138] sm:$0xff]
        %v1806 = vld [vmem:[%s1765 + $0x140] sm:$0xff]
        %v1807 = vld [vmem:[%s1765 + $0x148] sm:$0xff]
        %v1808 = vld [vmem:[%s1765 + $0x150] sm:$0xff]
        %v1809 = vld [vmem:[%s1765 + $0x158] sm:$0xff]
        %v1810 = vld [vmem:[%s1765 + $0x160] sm:$0xff]
        %v1811 = vld [vmem:[%s1765 + $0x168] sm:$0xff]
        %v1812 = vld [vmem:[%s1765 + $0x170] sm:$0xff]
        %v1813 = vld [vmem:[%s1765 + $0x178] sm:$0xff]
        %v1814 = vld [vmem:[%s1765 + $0x180] sm:$0xff]
        %v1815 = vld [vmem:[%s1765 + $0x188] sm:$0xff]
        %v1816 = vld [vmem:[%s1765 + $0x190] sm:$0xff]
        %v1817 = vld [vmem:[%s1765 + $0x198] sm:$0xff]
        %v1818 = vld [vmem:[%s1765 + $0x1a0] sm:$0xff]
        %v1819 = vld [vmem:[%s1765 + $0x1a8] sm:$0xff]
        %v1820 = vld [vmem:[%s1765 + $0x1b0] sm:$0xff]
        %v1821 = vld [vmem:[%s1765 + $0x1b8] sm:$0xff]
        %v1822 = vld [vmem:[%s1765 + $0x1c0] sm:$0xff]
        %v1823 = vld [vmem:[%s1765 + $0x1c8] sm:$0xff]
        %v1824 = vld [vmem:[%s1765 + $0x1d0] sm:$0xff]
        %v1825 = vld [vmem:[%s1765 + $0x1d8] sm:$0xff]
        %v1826 = vld [vmem:[%s1765 + $0x1e0] sm:$0xff]
        %v1827 = vld [vmem:[%s1765 + $0x1e8] sm:$0xff]
        %v1828 = vld [vmem:[%s1765 + $0x1f0] sm:$0xff]
        %v1829 = vld [vmem:[%s1765 + $0x1f8] sm:$0xff]
        %v1836 = vrot.slane %v1759, 1
        %v1837 = vrot.slane %v1761, 1
        %v1838 = vsel %vm658, %v1836, %v1837
        %v1839 = vrot.slane %v1760, 1
        %v1840 = vrot.slane %v1762, 1
        %v1841 = vsel %vm658, %v1839, %v1840
        %v1842 = vrot.slane %v1763, 1
        %v1843 = vsel %vm658, %v1837, %v1842
        %v1844 = vrot.slane %v1764, 1
        %v1845 = vsel %vm658, %v1840, %v1844
        %1850 = vmatprep.subr.mxu0 %v1797
        %1851 = vmatpush1.msra.mxu0 %v1796
        %1852 = vmatprep.subr.mxu0 %v1795
        %1853 = vmatpush1.msra.mxu0 %v1794
        %1854 = vmatprep.subr.mxu0 %v1793
        %1855 = vmatpush1.msra.mxu0 %v1792
        %1856 = vmatprep.subr.mxu0 %v1791
        %1857 = vmatpush1.msra.mxu0 %v1790
        %1858 = vmatprep.subr.mxu0 %v1789
        %1859 = vmatpush1.msra.mxu0 %v1788
        %1860 = vmatprep.subr.mxu0 %v1787
        %1861 = vmatpush1.msra.mxu0 %v1786
        %1862 = vmatprep.subr.mxu0 %v1785
        %1863 = vmatpush1.msra.mxu0 %v1784
        %1864 = vmatprep.subr.mxu0 %v1783
        %1865 = vmatpush1.msra.mxu0 %v1782
        %1866 = vmatprep.subr.mxu0 %v1781
        %1867 = vmatpush1.msra.mxu0 %v1780
        %1868 = vmatprep.subr.mxu0 %v1779
        %1869 = vmatpush1.msra.mxu0 %v1778
        %1870 = vmatprep.subr.mxu0 %v1777
        %1871 = vmatpush1.msra.mxu0 %v1776
        %1872 = vmatprep.subr.mxu0 %v1775
        %1873 = vmatpush1.msra.mxu0 %v1774
        %1874 = vmatprep.subr.mxu0 %v1773
        %1875 = vmatpush1.msra.mxu0 %v1772
        %1876 = vmatprep.subr.mxu0 %v1771
        %1877 = vmatpush1.msra.mxu0 %v1770
        %1878 = vmatprep.subr.mxu0 %v1769
        %1879 = vmatpush1.msra.mxu0 %v1768
        %1880 = vmatprep.subr.mxu0 %v1767
        %1881 = vmatpush1.msra.mxu0 %v1766
        %1882 = vmatprep.subr.mxu0 %v1829
        %1883 = vmatpush2.msra.mxu0 %v1828
        %1884 = vmatprep.subr.mxu0 %v1827
        %1885 = vmatpush2.msra.mxu0 %v1826
        %1886 = vmatprep.subr.mxu0 %v1825
        %1887 = vmatpush2.msra.mxu0 %v1824
        %1888 = vmatprep.subr.mxu0 %v1823
        %1889 = vmatpush2.msra.mxu0 %v1822
        %1890 = vmatprep.subr.mxu0 %v1821
        %1891 = vmatpush2.msra.mxu0 %v1820
        %1892 = vmatprep.subr.mxu0 %v1819
        %1893 = vmatpush2.msra.mxu0 %v1818
        %1894 = vmatprep.subr.mxu0 %v1817
        %1895 = vmatpush2.msra.mxu0 %v1816
        %1896 = vmatprep.subr.mxu0 %v1815
        %1897 = vmatpush2.msra.mxu0 %v1814
        %1898 = vmatprep.subr.mxu0 %v1813
        %1899 = vmatpush2.msra.mxu0 %v1812
        %1900 = vmatprep.subr.mxu0 %v1811
        %1901 = vmatpush2.msra.mxu0 %v1810
        %1902 = vmatprep.subr.mxu0 %v1809
        %1903 = vmatpush2.msra.mxu0 %v1808
        %1904 = vmatprep.subr.mxu0 %v1807
        %1905 = vmatpush2.msra.mxu0 %v1806
        %1906 = vmatprep.subr.mxu0 %v1805
        %1907 = vmatpush2.msra.mxu0 %v1804
        %1908 = vmatprep.subr.mxu0 %v1803
        %1909 = vmatpush2.msra.mxu0 %v1802
        %1910 = vmatprep.subr.mxu0 %v1801
        %1911 = vmatpush2.msra.mxu0 %v1800
        %1912 = vmatprep.subr.mxu0 %v1799
        %1913 = vmatpush2.msra.mxu0 %v1798
        %1914 = vmatprep.mubr.f32.mxu0 %v1841
        %1915 = vmatmul.mubr.f32.gmra.mxu0 %v1838
        %v1916 = vpop.f32.mrf.mxu0
        %v1917 = vadd.f32 0.0, %v1916
        %v1918 = vpop.f32.mrf.mxu0
        %v1919 = vadd.f32 0.0, %v1918
        %1920 = vmatprep.mubr.f32.mxu0 %v1845
        %1921 = vmatmul.mubr.f32.gmra.mxu0 %v1843
        %v1922 = vpop.f32.mrf.mxu0
        %v1923 = vadd.f32 0.0, %v1922
        %v1924 = vpop.f32.mrf.mxu0
        %v1925 = vadd.f32 0.0, %v1924
        %1926 = vdwg.mxu0
        %v1927 = vadd.f32 %v1749, %v1917
        %v1928 = vadd.f32 %v1751, %v1919
        %v1929 = vadd.f32 %v1755, %v1923
        %v1930 = vadd.f32 %v1757, %v1925
        %v1931 = vld [vmem:[#allocation4] sm:$0xfe]
        %v1932 = vld [vmem:[#allocation4 + $0x8] sm:$0xfe]
        %v1933 = vld [vmem:[#allocation4 + $0x10] sm:$0xff]
        %v1934 = vld [vmem:[#allocation4 + $0x18] sm:$0xff]
        %v1935 = vld [vmem:[#allocation4 + $0x20] sm:$0x1]
        %v1936 = vld [vmem:[#allocation4 + $0x28] sm:$0x1]
        %s1937 = scalar_lea.vmem [#allocation10], 512
        %v1938 = vld [vmem:[%s1937] sm:$0xff]
        %v1939 = vld [vmem:[%s1937 + $0x8] sm:$0xff]
        %v1940 = vld [vmem:[%s1937 + $0x10] sm:$0xff]
        %v1941 = vld [vmem:[%s1937 + $0x18] sm:$0xff]
        %v1942 = vld [vmem:[%s1937 + $0x20] sm:$0xff]
        %v1943 = vld [vmem:[%s1937 + $0x28] sm:$0xff]
        %v1944 = vld [vmem:[%s1937 + $0x30] sm:$0xff]
        %v1945 = vld [vmem:[%s1937 + $0x38] sm:$0xff]
        %v1946 = vld [vmem:[%s1937 + $0x40] sm:$0xff]
        %v1947 = vld [vmem:[%s1937 + $0x48] sm:$0xff]
        %v1948 = vld [vmem:[%s1937 + $0x50] sm:$0xff]
        %v1949 = vld [vmem:[%s1937 + $0x58] sm:$0xff]
        %v1950 = vld [vmem:[%s1937 + $0x60] sm:$0xff]
        %v1951 = vld [vmem:[%s1937 + $0x68] sm:$0xff]
        %v1952 = vld [vmem:[%s1937 + $0x70] sm:$0xff]
        %v1953 = vld [vmem:[%s1937 + $0x78] sm:$0xff]
        %v1954 = vld [vmem:[%s1937 + $0x80] sm:$0xff]
        %v1955 = vld [vmem:[%s1937 + $0x88] sm:$0xff]
        %v1956 = vld [vmem:[%s1937 + $0x90] sm:$0xff]
        %v1957 = vld [vmem:[%s1937 + $0x98] sm:$0xff]
        %v1958 = vld [vmem:[%s1937 + $0xa0] sm:$0xff]
        %v1959 = vld [vmem:[%s1937 + $0xa8] sm:$0xff]
        %v1960 = vld [vmem:[%s1937 + $0xb0] sm:$0xff]
        %v1961 = vld [vmem:[%s1937 + $0xb8] sm:$0xff]
        %v1962 = vld [vmem:[%s1937 + $0xc0] sm:$0xff]
        %v1963 = vld [vmem:[%s1937 + $0xc8] sm:$0xff]
        %v1964 = vld [vmem:[%s1937 + $0xd0] sm:$0xff]
        %v1965 = vld [vmem:[%s1937 + $0xd8] sm:$0xff]
        %v1966 = vld [vmem:[%s1937 + $0xe0] sm:$0xff]
        %v1967 = vld [vmem:[%s1937 + $0xe8] sm:$0xff]
        %v1968 = vld [vmem:[%s1937 + $0xf0] sm:$0xff]
        %v1969 = vld [vmem:[%s1937 + $0xf8] sm:$0xff]
        %v1970 = vld [vmem:[%s1937 + $0x100] sm:$0xff]
        %v1971 = vld [vmem:[%s1937 + $0x108] sm:$0xff]
        %v1972 = vld [vmem:[%s1937 + $0x110] sm:$0xff]
        %v1973 = vld [vmem:[%s1937 + $0x118] sm:$0xff]
        %v1974 = vld [vmem:[%s1937 + $0x120] sm:$0xff]
        %v1975 = vld [vmem:[%s1937 + $0x128] sm:$0xff]
        %v1976 = vld [vmem:[%s1937 + $0x130] sm:$0xff]
        %v1977 = vld [vmem:[%s1937 + $0x138] sm:$0xff]
        %v1978 = vld [vmem:[%s1937 + $0x140] sm:$0xff]
        %v1979 = vld [vmem:[%s1937 + $0x148] sm:$0xff]
        %v1980 = vld [vmem:[%s1937 + $0x150] sm:$0xff]
        %v1981 = vld [vmem:[%s1937 + $0x158] sm:$0xff]
        %v1982 = vld [vmem:[%s1937 + $0x160] sm:$0xff]
        %v1983 = vld [vmem:[%s1937 + $0x168] sm:$0xff]
        %v1984 = vld [vmem:[%s1937 + $0x170] sm:$0xff]
        %v1985 = vld [vmem:[%s1937 + $0x178] sm:$0xff]
        %v1986 = vld [vmem:[%s1937 + $0x180] sm:$0xff]
        %v1987 = vld [vmem:[%s1937 + $0x188] sm:$0xff]
        %v1988 = vld [vmem:[%s1937 + $0x190] sm:$0xff]
        %v1989 = vld [vmem:[%s1937 + $0x198] sm:$0xff]
        %v1990 = vld [vmem:[%s1937 + $0x1a0] sm:$0xff]
        %v1991 = vld [vmem:[%s1937 + $0x1a8] sm:$0xff]
        %v1992 = vld [vmem:[%s1937 + $0x1b0] sm:$0xff]
        %v1993 = vld [vmem:[%s1937 + $0x1b8] sm:$0xff]
        %v1994 = vld [vmem:[%s1937 + $0x1c0] sm:$0xff]
        %v1995 = vld [vmem:[%s1937 + $0x1c8] sm:$0xff]
        %v1996 = vld [vmem:[%s1937 + $0x1d0] sm:$0xff]
        %v1997 = vld [vmem:[%s1937 + $0x1d8] sm:$0xff]
        %v1998 = vld [vmem:[%s1937 + $0x1e0] sm:$0xff]
        %v1999 = vld [vmem:[%s1937 + $0x1e8] sm:$0xff]
        %v2000 = vld [vmem:[%s1937 + $0x1f0] sm:$0xff]
        %v2001 = vld [vmem:[%s1937 + $0x1f8] sm:$0xff]
        %v2008 = vrot.slane %v1931, 1
        %v2009 = vrot.slane %v1933, 1
        %v2010 = vsel %vm658, %v2008, %v2009
        %v2011 = vrot.slane %v1932, 1
        %v2012 = vrot.slane %v1934, 1
        %v2013 = vsel %vm658, %v2011, %v2012
        %v2014 = vrot.slane %v1935, 1
        %v2015 = vsel %vm658, %v2009, %v2014
        %v2016 = vrot.slane %v1936, 1
        %v2017 = vsel %vm658, %v2012, %v2016
        %2022 = vmatprep.subr.mxu0 %v1969
        %2023 = vmatpush1.msra.mxu0 %v1968
        %2024 = vmatprep.subr.mxu0 %v1967
        %2025 = vmatpush1.msra.mxu0 %v1966
        %2026 = vmatprep.subr.mxu0 %v1965
        %2027 = vmatpush1.msra.mxu0 %v1964
        %2028 = vmatprep.subr.mxu0 %v1963
        %2029 = vmatpush1.msra.mxu0 %v1962
        %2030 = vmatprep.subr.mxu0 %v1961
        %2031 = vmatpush1.msra.mxu0 %v1960
        %2032 = vmatprep.subr.mxu0 %v1959
        %2033 = vmatpush1.msra.mxu0 %v1958
        %2034 = vmatprep.subr.mxu0 %v1957
        %2035 = vmatpush1.msra.mxu0 %v1956
        %2036 = vmatprep.subr.mxu0 %v1955
        %2037 = vmatpush1.msra.mxu0 %v1954
        %2038 = vmatprep.subr.mxu0 %v1953
        %2039 = vmatpush1.msra.mxu0 %v1952
        %2040 = vmatprep.subr.mxu0 %v1951
        %2041 = vmatpush1.msra.mxu0 %v1950
        %2042 = vmatprep.subr.mxu0 %v1949
        %2043 = vmatpush1.msra.mxu0 %v1948
        %2044 = vmatprep.subr.mxu0 %v1947
        %2045 = vmatpush1.msra.mxu0 %v1946
        %2046 = vmatprep.subr.mxu0 %v1945
        %2047 = vmatpush1.msra.mxu0 %v1944
        %2048 = vmatprep.subr.mxu0 %v1943
        %2049 = vmatpush1.msra.mxu0 %v1942
        %2050 = vmatprep.subr.mxu0 %v1941
        %2051 = vmatpush1.msra.mxu0 %v1940
        %2052 = vmatprep.subr.mxu0 %v1939
        %2053 = vmatpush1.msra.mxu0 %v1938
        %2054 = vmatprep.subr.mxu0 %v2001
        %2055 = vmatpush2.msra.mxu0 %v2000
        %2056 = vmatprep.subr.mxu0 %v1999
        %2057 = vmatpush2.msra.mxu0 %v1998
        %2058 = vmatprep.subr.mxu0 %v1997
        %2059 = vmatpush2.msra.mxu0 %v1996
        %2060 = vmatprep.subr.mxu0 %v1995
        %2061 = vmatpush2.msra.mxu0 %v1994
        %2062 = vmatprep.subr.mxu0 %v1993
        %2063 = vmatpush2.msra.mxu0 %v1992
        %2064 = vmatprep.subr.mxu0 %v1991
        %2065 = vmatpush2.msra.mxu0 %v1990
        %2066 = vmatprep.subr.mxu0 %v1989
        %2067 = vmatpush2.msra.mxu0 %v1988
        %2068 = vmatprep.subr.mxu0 %v1987
        %2069 = vmatpush2.msra.mxu0 %v1986
        %2070 = vmatprep.subr.mxu0 %v1985
        %2071 = vmatpush2.msra.mxu0 %v1984
        %2072 = vmatprep.subr.mxu0 %v1983
        %2073 = vmatpush2.msra.mxu0 %v1982
        %2074 = vmatprep.subr.mxu0 %v1981
        %2075 = vmatpush2.msra.mxu0 %v1980
        %2076 = vmatprep.subr.mxu0 %v1979
        %2077 = vmatpush2.msra.mxu0 %v1978
        %2078 = vmatprep.subr.mxu0 %v1977
        %2079 = vmatpush2.msra.mxu0 %v1976
        %2080 = vmatprep.subr.mxu0 %v1975
        %2081 = vmatpush2.msra.mxu0 %v1974
        %2082 = vmatprep.subr.mxu0 %v1973
        %2083 = vmatpush2.msra.mxu0 %v1972
        %2084 = vmatprep.subr.mxu0 %v1971
        %2085 = vmatpush2.msra.mxu0 %v1970
        %2086 = vmatprep.mubr.f32.mxu0 %v2013
        %2087 = vmatmul.mubr.f32.gmra.mxu0 %v2010
        %v2088 = vpop.f32.mrf.mxu0
        %v2089 = vadd.f32 0.0, %v2088
        %v2090 = vpop.f32.mrf.mxu0
        %v2091 = vadd.f32 0.0, %v2090
        %2092 = vmatprep.mubr.f32.mxu0 %v2017
        %2093 = vmatmul.mubr.f32.gmra.mxu0 %v2015
        %v2094 = vpop.f32.mrf.mxu0
        %v2095 = vadd.f32 0.0, %v2094
        %v2096 = vpop.f32.mrf.mxu0
        %v2097 = vadd.f32 0.0, %v2096
        %2098 = vdwg.mxu0
        %v2099 = vadd.f32 %v1927, %v2089
        %v2100 = vadd.f32 %v1928, %v2091
        %v2101 = vadd.f32 %v1929, %v2095
        %v2102 = vadd.f32 %v1930, %v2097
        %v2103 = vld [vmem:[#allocation3] sm:$0xfc]
        %v2104 = vld [vmem:[#allocation3 + $0x8] sm:$0xfc]
        %v2105 = vld [vmem:[#allocation3 + $0x20] sm:$0x3]
        %v2106 = vld [vmem:[#allocation3 + $0x28] sm:$0x3]
        %s2107 = scalar_lea.vmem %s6, 1024
        %v2108 = vld [vmem:[%s2107] sm:$0xff]
        %v2109 = vld [vmem:[%s2107 + $0x8] sm:$0xff]
        %v2110 = vld [vmem:[%s2107 + $0x10] sm:$0xff]
        %v2111 = vld [vmem:[%s2107 + $0x18] sm:$0xff]
        %v2112 = vld [vmem:[%s2107 + $0x20] sm:$0xff]
        %v2113 = vld [vmem:[%s2107 + $0x28] sm:$0xff]
        %v2114 = vld [vmem:[%s2107 + $0x30] sm:$0xff]
        %v2115 = vld [vmem:[%s2107 + $0x38] sm:$0xff]
        %v2116 = vld [vmem:[%s2107 + $0x40] sm:$0xff]
        %v2117 = vld [vmem:[%s2107 + $0x48] sm:$0xff]
        %v2118 = vld [vmem:[%s2107 + $0x50] sm:$0xff]
        %v2119 = vld [vmem:[%s2107 + $0x58] sm:$0xff]
        %v2120 = vld [vmem:[%s2107 + $0x60] sm:$0xff]
        %v2121 = vld [vmem:[%s2107 + $0x68] sm:$0xff]
        %v2122 = vld [vmem:[%s2107 + $0x70] sm:$0xff]
        %v2123 = vld [vmem:[%s2107 + $0x78] sm:$0xff]
        %v2124 = vld [vmem:[%s2107 + $0x80] sm:$0xff]
        %v2125 = vld [vmem:[%s2107 + $0x88] sm:$0xff]
        %v2126 = vld [vmem:[%s2107 + $0x90] sm:$0xff]
        %v2127 = vld [vmem:[%s2107 + $0x98] sm:$0xff]
        %v2128 = vld [vmem:[%s2107 + $0xa0] sm:$0xff]
        %v2129 = vld [vmem:[%s2107 + $0xa8] sm:$0xff]
        %v2130 = vld [vmem:[%s2107 + $0xb0] sm:$0xff]
        %v2131 = vld [vmem:[%s2107 + $0xb8] sm:$0xff]
        %v2132 = vld [vmem:[%s2107 + $0xc0] sm:$0xff]
        %v2133 = vld [vmem:[%s2107 + $0xc8] sm:$0xff]
        %v2134 = vld [vmem:[%s2107 + $0xd0] sm:$0xff]
        %v2135 = vld [vmem:[%s2107 + $0xd8] sm:$0xff]
        %v2136 = vld [vmem:[%s2107 + $0xe0] sm:$0xff]
        %v2137 = vld [vmem:[%s2107 + $0xe8] sm:$0xff]
        %v2138 = vld [vmem:[%s2107 + $0xf0] sm:$0xff]
        %v2139 = vld [vmem:[%s2107 + $0xf8] sm:$0xff]
        %v2140 = vld [vmem:[%s2107 + $0x100] sm:$0xff]
        %v2141 = vld [vmem:[%s2107 + $0x108] sm:$0xff]
        %v2142 = vld [vmem:[%s2107 + $0x110] sm:$0xff]
        %v2143 = vld [vmem:[%s2107 + $0x118] sm:$0xff]
        %v2144 = vld [vmem:[%s2107 + $0x120] sm:$0xff]
        %v2145 = vld [vmem:[%s2107 + $0x128] sm:$0xff]
        %v2146 = vld [vmem:[%s2107 + $0x130] sm:$0xff]
        %v2147 = vld [vmem:[%s2107 + $0x138] sm:$0xff]
        %v2148 = vld [vmem:[%s2107 + $0x140] sm:$0xff]
        %v2149 = vld [vmem:[%s2107 + $0x148] sm:$0xff]
        %v2150 = vld [vmem:[%s2107 + $0x150] sm:$0xff]
        %v2151 = vld [vmem:[%s2107 + $0x158] sm:$0xff]
        %v2152 = vld [vmem:[%s2107 + $0x160] sm:$0xff]
        %v2153 = vld [vmem:[%s2107 + $0x168] sm:$0xff]
        %v2154 = vld [vmem:[%s2107 + $0x170] sm:$0xff]
        %v2155 = vld [vmem:[%s2107 + $0x178] sm:$0xff]
        %v2156 = vld [vmem:[%s2107 + $0x180] sm:$0xff]
        %v2157 = vld [vmem:[%s2107 + $0x188] sm:$0xff]
        %v2158 = vld [vmem:[%s2107 + $0x190] sm:$0xff]
        %v2159 = vld [vmem:[%s2107 + $0x198] sm:$0xff]
        %v2160 = vld [vmem:[%s2107 + $0x1a0] sm:$0xff]
        %v2161 = vld [vmem:[%s2107 + $0x1a8] sm:$0xff]
        %v2162 = vld [vmem:[%s2107 + $0x1b0] sm:$0xff]
        %v2163 = vld [vmem:[%s2107 + $0x1b8] sm:$0xff]
        %v2164 = vld [vmem:[%s2107 + $0x1c0] sm:$0xff]
        %v2165 = vld [vmem:[%s2107 + $0x1c8] sm:$0xff]
        %v2166 = vld [vmem:[%s2107 + $0x1d0] sm:$0xff]
        %v2167 = vld [vmem:[%s2107 + $0x1d8] sm:$0xff]
        %v2168 = vld [vmem:[%s2107 + $0x1e0] sm:$0xff]
        %v2169 = vld [vmem:[%s2107 + $0x1e8] sm:$0xff]
        %v2170 = vld [vmem:[%s2107 + $0x1f0] sm:$0xff]
        %v2171 = vld [vmem:[%s2107 + $0x1f8] sm:$0xff]
        %v2176 = vrot.slane %v2103, 2
        %v2177 = vrot.slane %v1761, 2
        %v2178 = vsel %vm900, %v2176, %v2177
        %v2179 = vrot.slane %v2104, 2
        %v2180 = vrot.slane %v1762, 2
        %v2181 = vsel %vm900, %v2179, %v2180
        %v2182 = vrot.slane %v2105, 2
        %v2183 = vsel %vm900, %v2177, %v2182
        %v2184 = vrot.slane %v2106, 2
        %v2185 = vsel %vm900, %v2180, %v2184
        %2190 = vmatprep.subr.mxu0 %v2139
        %2191 = vmatpush1.msra.mxu0 %v2138
        %2192 = vmatprep.subr.mxu0 %v2137
        %2193 = vmatpush1.msra.mxu0 %v2136
        %2194 = vmatprep.subr.mxu0 %v2135
        %2195 = vmatpush1.msra.mxu0 %v2134
        %2196 = vmatprep.subr.mxu0 %v2133
        %2197 = vmatpush1.msra.mxu0 %v2132
        %2198 = vmatprep.subr.mxu0 %v2131
        %2199 = vmatpush1.msra.mxu0 %v2130
        %2200 = vmatprep.subr.mxu0 %v2129
        %2201 = vmatpush1.msra.mxu0 %v2128
        %2202 = vmatprep.subr.mxu0 %v2127
        %2203 = vmatpush1.msra.mxu0 %v2126
        %2204 = vmatprep.subr.mxu0 %v2125
        %2205 = vmatpush1.msra.mxu0 %v2124
        %2206 = vmatprep.subr.mxu0 %v2123
        %2207 = vmatpush1.msra.mxu0 %v2122
        %2208 = vmatprep.subr.mxu0 %v2121
        %2209 = vmatpush1.msra.mxu0 %v2120
        %2210 = vmatprep.subr.mxu0 %v2119
        %2211 = vmatpush1.msra.mxu0 %v2118
        %2212 = vmatprep.subr.mxu0 %v2117
        %2213 = vmatpush1.msra.mxu0 %v2116
        %2214 = vmatprep.subr.mxu0 %v2115
        %2215 = vmatpush1.msra.mxu0 %v2114
        %2216 = vmatprep.subr.mxu0 %v2113
        %2217 = vmatpush1.msra.mxu0 %v2112
        %2218 = vmatprep.subr.mxu0 %v2111
        %2219 = vmatpush1.msra.mxu0 %v2110
        %2220 = vmatprep.subr.mxu0 %v2109
        %2221 = vmatpush1.msra.mxu0 %v2108
        %2222 = vmatprep.subr.mxu0 %v2171
        %2223 = vmatpush2.msra.mxu0 %v2170
        %2224 = vmatprep.subr.mxu0 %v2169
        %2225 = vmatpush2.msra.mxu0 %v2168
        %2226 = vmatprep.subr.mxu0 %v2167
        %2227 = vmatpush2.msra.mxu0 %v2166
        %2228 = vmatprep.subr.mxu0 %v2165
        %2229 = vmatpush2.msra.mxu0 %v2164
        %2230 = vmatprep.subr.mxu0 %v2163
        %2231 = vmatpush2.msra.mxu0 %v2162
        %2232 = vmatprep.subr.mxu0 %v2161
        %2233 = vmatpush2.msra.mxu0 %v2160
        %2234 = vmatprep.subr.mxu0 %v2159
        %2235 = vmatpush2.msra.mxu0 %v2158
        %2236 = vmatprep.subr.mxu0 %v2157
        %2237 = vmatpush2.msra.mxu0 %v2156
        %2238 = vmatprep.subr.mxu0 %v2155
        %2239 = vmatpush2.msra.mxu0 %v2154
        %2240 = vmatprep.subr.mxu0 %v2153
        %2241 = vmatpush2.msra.mxu0 %v2152
        %2242 = vmatprep.subr.mxu0 %v2151
        %2243 = vmatpush2.msra.mxu0 %v2150
        %2244 = vmatprep.subr.mxu0 %v2149
        %2245 = vmatpush2.msra.mxu0 %v2148
        %2246 = vmatprep.subr.mxu0 %v2147
        %2247 = vmatpush2.msra.mxu0 %v2146
        %2248 = vmatprep.subr.mxu0 %v2145
        %2249 = vmatpush2.msra.mxu0 %v2144
        %2250 = vmatprep.subr.mxu0 %v2143
        %2251 = vmatpush2.msra.mxu0 %v2142
        %2252 = vmatprep.subr.mxu0 %v2141
        %2253 = vmatpush2.msra.mxu0 %v2140
        %2254 = vmatprep.mubr.f32.mxu0 %v2181
        %2255 = vmatmul.mubr.f32.gmra.mxu0 %v2178
        %v2256 = vpop.f32.mrf.mxu0
        %v2257 = vadd.f32 0.0, %v2256
        %v2258 = vpop.f32.mrf.mxu0
        %v2259 = vadd.f32 0.0, %v2258
        %2260 = vmatprep.mubr.f32.mxu0 %v2185
        %2261 = vmatmul.mubr.f32.gmra.mxu0 %v2183
        %v2262 = vpop.f32.mrf.mxu0
        %v2263 = vadd.f32 0.0, %v2262
        %v2264 = vpop.f32.mrf.mxu0
        %v2265 = vadd.f32 0.0, %v2264
        %2266 = vdwg.mxu0
        %v2267 = vadd.f32 %v2099, %v2257
        %v2268 = vadd.f32 %v2100, %v2259
        %v2269 = vadd.f32 %v2101, %v2263
        %v2270 = vadd.f32 %v2102, %v2265
        %v2271 = vld [vmem:[#allocation4] sm:$0xfc]
        %v2272 = vld [vmem:[#allocation4 + $0x8] sm:$0xfc]
        %v2273 = vld [vmem:[#allocation4 + $0x20] sm:$0x3]
        %v2274 = vld [vmem:[#allocation4 + $0x28] sm:$0x3]
        %s2275 = scalar_lea.vmem [#allocation10], 1024
        %v2276 = vld [vmem:[%s2275] sm:$0xff]
        %v2277 = vld [vmem:[%s2275 + $0x8] sm:$0xff]
        %v2278 = vld [vmem:[%s2275 + $0x10] sm:$0xff]
        %v2279 = vld [vmem:[%s2275 + $0x18] sm:$0xff]
        %v2280 = vld [vmem:[%s2275 + $0x20] sm:$0xff]
        %v2281 = vld [vmem:[%s2275 + $0x28] sm:$0xff]
        %v2282 = vld [vmem:[%s2275 + $0x30] sm:$0xff]
        %v2283 = vld [vmem:[%s2275 + $0x38] sm:$0xff]
        %v2284 = vld [vmem:[%s2275 + $0x40] sm:$0xff]
        %v2285 = vld [vmem:[%s2275 + $0x48] sm:$0xff]
        %v2286 = vld [vmem:[%s2275 + $0x50] sm:$0xff]
        %v2287 = vld [vmem:[%s2275 + $0x58] sm:$0xff]
        %v2288 = vld [vmem:[%s2275 + $0x60] sm:$0xff]
        %v2289 = vld [vmem:[%s2275 + $0x68] sm:$0xff]
        %v2290 = vld [vmem:[%s2275 + $0x70] sm:$0xff]
        %v2291 = vld [vmem:[%s2275 + $0x78] sm:$0xff]
        %v2292 = vld [vmem:[%s2275 + $0x80] sm:$0xff]
        %v2293 = vld [vmem:[%s2275 + $0x88] sm:$0xff]
        %v2294 = vld [vmem:[%s2275 + $0x90] sm:$0xff]
        %v2295 = vld [vmem:[%s2275 + $0x98] sm:$0xff]
        %v2296 = vld [vmem:[%s2275 + $0xa0] sm:$0xff]
        %v2297 = vld [vmem:[%s2275 + $0xa8] sm:$0xff]
        %v2298 = vld [vmem:[%s2275 + $0xb0] sm:$0xff]
        %v2299 = vld [vmem:[%s2275 + $0xb8] sm:$0xff]
        %v2300 = vld [vmem:[%s2275 + $0xc0] sm:$0xff]
        %v2301 = vld [vmem:[%s2275 + $0xc8] sm:$0xff]
        %v2302 = vld [vmem:[%s2275 + $0xd0] sm:$0xff]
        %v2303 = vld [vmem:[%s2275 + $0xd8] sm:$0xff]
        %v2304 = vld [vmem:[%s2275 + $0xe0] sm:$0xff]
        %v2305 = vld [vmem:[%s2275 + $0xe8] sm:$0xff]
        %v2306 = vld [vmem:[%s2275 + $0xf0] sm:$0xff]
        %v2307 = vld [vmem:[%s2275 + $0xf8] sm:$0xff]
        %v2308 = vld [vmem:[%s2275 + $0x100] sm:$0xff]
        %v2309 = vld [vmem:[%s2275 + $0x108] sm:$0xff]
        %v2310 = vld [vmem:[%s2275 + $0x110] sm:$0xff]
        %v2311 = vld [vmem:[%s2275 + $0x118] sm:$0xff]
        %v2312 = vld [vmem:[%s2275 + $0x120] sm:$0xff]
        %v2313 = vld [vmem:[%s2275 + $0x128] sm:$0xff]
        %v2314 = vld [vmem:[%s2275 + $0x130] sm:$0xff]
        %v2315 = vld [vmem:[%s2275 + $0x138] sm:$0xff]
        %v2316 = vld [vmem:[%s2275 + $0x140] sm:$0xff]
        %v2317 = vld [vmem:[%s2275 + $0x148] sm:$0xff]
        %v2318 = vld [vmem:[%s2275 + $0x150] sm:$0xff]
        %v2319 = vld [vmem:[%s2275 + $0x158] sm:$0xff]
        %v2320 = vld [vmem:[%s2275 + $0x160] sm:$0xff]
        %v2321 = vld [vmem:[%s2275 + $0x168] sm:$0xff]
        %v2322 = vld [vmem:[%s2275 + $0x170] sm:$0xff]
        %v2323 = vld [vmem:[%s2275 + $0x178] sm:$0xff]
        %v2324 = vld [vmem:[%s2275 + $0x180] sm:$0xff]
        %v2325 = vld [vmem:[%s2275 + $0x188] sm:$0xff]
        %v2326 = vld [vmem:[%s2275 + $0x190] sm:$0xff]
        %v2327 = vld [vmem:[%s2275 + $0x198] sm:$0xff]
        %v2328 = vld [vmem:[%s2275 + $0x1a0] sm:$0xff]
        %v2329 = vld [vmem:[%s2275 + $0x1a8] sm:$0xff]
        %v2330 = vld [vmem:[%s2275 + $0x1b0] sm:$0xff]
        %v2331 = vld [vmem:[%s2275 + $0x1b8] sm:$0xff]
        %v2332 = vld [vmem:[%s2275 + $0x1c0] sm:$0xff]
        %v2333 = vld [vmem:[%s2275 + $0x1c8] sm:$0xff]
        %v2334 = vld [vmem:[%s2275 + $0x1d0] sm:$0xff]
        %v2335 = vld [vmem:[%s2275 + $0x1d8] sm:$0xff]
        %v2336 = vld [vmem:[%s2275 + $0x1e0] sm:$0xff]
        %v2337 = vld [vmem:[%s2275 + $0x1e8] sm:$0xff]
        %v2338 = vld [vmem:[%s2275 + $0x1f0] sm:$0xff]
        %v2339 = vld [vmem:[%s2275 + $0x1f8] sm:$0xff]
        %v2344 = vrot.slane %v2271, 2
        %v2345 = vrot.slane %v1933, 2
        %v2346 = vsel %vm900, %v2344, %v2345
        %v2347 = vrot.slane %v2272, 2
        %v2348 = vrot.slane %v1934, 2
        %v2349 = vsel %vm900, %v2347, %v2348
        %v2350 = vrot.slane %v2273, 2
        %v2351 = vsel %vm900, %v2345, %v2350
        %v2352 = vrot.slane %v2274, 2
        %v2353 = vsel %vm900, %v2348, %v2352
        %2358 = vmatprep.subr.mxu0 %v2307
        %2359 = vmatpush1.msra.mxu0 %v2306
        %2360 = vmatprep.subr.mxu0 %v2305
        %2361 = vmatpush1.msra.mxu0 %v2304
        %2362 = vmatprep.subr.mxu0 %v2303
        %2363 = vmatpush1.msra.mxu0 %v2302
        %2364 = vmatprep.subr.mxu0 %v2301
        %2365 = vmatpush1.msra.mxu0 %v2300
        %2366 = vmatprep.subr.mxu0 %v2299
        %2367 = vmatpush1.msra.mxu0 %v2298
        %2368 = vmatprep.subr.mxu0 %v2297
        %2369 = vmatpush1.msra.mxu0 %v2296
        %2370 = vmatprep.subr.mxu0 %v2295
        %2371 = vmatpush1.msra.mxu0 %v2294
        %2372 = vmatprep.subr.mxu0 %v2293
        %2373 = vmatpush1.msra.mxu0 %v2292
        %2374 = vmatprep.subr.mxu0 %v2291
        %2375 = vmatpush1.msra.mxu0 %v2290
        %2376 = vmatprep.subr.mxu0 %v2289
        %2377 = vmatpush1.msra.mxu0 %v2288
        %2378 = vmatprep.subr.mxu0 %v2287
        %2379 = vmatpush1.msra.mxu0 %v2286
        %2380 = vmatprep.subr.mxu0 %v2285
        %2381 = vmatpush1.msra.mxu0 %v2284
        %2382 = vmatprep.subr.mxu0 %v2283
        %2383 = vmatpush1.msra.mxu0 %v2282
        %2384 = vmatprep.subr.mxu0 %v2281
        %2385 = vmatpush1.msra.mxu0 %v2280
        %2386 = vmatprep.subr.mxu0 %v2279
        %2387 = vmatpush1.msra.mxu0 %v2278
        %2388 = vmatprep.subr.mxu0 %v2277
        %2389 = vmatpush1.msra.mxu0 %v2276
        %2390 = vmatprep.subr.mxu0 %v2339
        %2391 = vmatpush2.msra.mxu0 %v2338
        %2392 = vmatprep.subr.mxu0 %v2337
        %2393 = vmatpush2.msra.mxu0 %v2336
        %2394 = vmatprep.subr.mxu0 %v2335
        %2395 = vmatpush2.msra.mxu0 %v2334
        %2396 = vmatprep.subr.mxu0 %v2333
        %2397 = vmatpush2.msra.mxu0 %v2332
        %2398 = vmatprep.subr.mxu0 %v2331
        %2399 = vmatpush2.msra.mxu0 %v2330
        %2400 = vmatprep.subr.mxu0 %v2329
        %2401 = vmatpush2.msra.mxu0 %v2328
        %2402 = vmatprep.subr.mxu0 %v2327
        %2403 = vmatpush2.msra.mxu0 %v2326
        %2404 = vmatprep.subr.mxu0 %v2325
        %2405 = vmatpush2.msra.mxu0 %v2324
        %2406 = vmatprep.subr.mxu0 %v2323
        %2407 = vmatpush2.msra.mxu0 %v2322
        %2408 = vmatprep.subr.mxu0 %v2321
        %2409 = vmatpush2.msra.mxu0 %v2320
        %2410 = vmatprep.subr.mxu0 %v2319
        %2411 = vmatpush2.msra.mxu0 %v2318
        %2412 = vmatprep.subr.mxu0 %v2317
        %2413 = vmatpush2.msra.mxu0 %v2316
        %2414 = vmatprep.subr.mxu0 %v2315
        %2415 = vmatpush2.msra.mxu0 %v2314
        %2416 = vmatprep.subr.mxu0 %v2313
        %2417 = vmatpush2.msra.mxu0 %v2312
        %2418 = vmatprep.subr.mxu0 %v2311
        %2419 = vmatpush2.msra.mxu0 %v2310
        %2420 = vmatprep.subr.mxu0 %v2309
        %2421 = vmatpush2.msra.mxu0 %v2308
        %2422 = vmatprep.mubr.f32.mxu0 %v2349
        %2423 = vmatmul.mubr.f32.gmra.mxu0 %v2346
        %v2424 = vpop.f32.mrf.mxu0
        %v2425 = vadd.f32 0.0, %v2424
        %v2426 = vpop.f32.mrf.mxu0
        %v2427 = vadd.f32 0.0, %v2426
        %2428 = vmatprep.mubr.f32.mxu0 %v2353
        %2429 = vmatmul.mubr.f32.gmra.mxu0 %v2351
        %v2430 = vpop.f32.mrf.mxu0
        %v2431 = vadd.f32 0.0, %v2430
        %v2432 = vpop.f32.mrf.mxu0
        %v2433 = vadd.f32 0.0, %v2432
        %2434 = vdwg.mxu0
        %v2435 = vadd.f32 %v2267, %v2425
        %v2436 = vadd.f32 %v2268, %v2427
        %v2437 = vadd.f32 %v2269, %v2431
        %v2438 = vadd.f32 %v2270, %v2433
        %v2439 = vld [vmem:[%s8] sm:$0x3]
        %v2441 = vlaneseq
        %v2442 = vshrl.u32 %v2441, 7
        %v2443 = vsub.s32 0, %v2442
        %v2444 = vrot.slane %v2439, %v2443
        %v2445 = vlaneseq
        %v2446 = vshrl.u32 %v2445, 7
        %v2447 = vsub.s32 1, %v2446
        %v2448 = vrot.slane %v2439, %v2447
        %v2451 = vadd.f32 %v2435, %v2444
        %v2452 = vadd.f32 %v2436, %v2448
        %v2453 = vadd.f32 %v2437, %v2444
        %v2454 = vadd.f32 %v2438, %v2448
        %v2455 = vmax.f32 %v2451, 0.0
        %v2456 = vmax.f32 %v2452, 0.0
        %v2457 = vmax.f32 %v2453, 0.0
        %v2458 = vmax.f32 %v2454, 0.0
        %v2463 = vrot.slane %v2455, 7
        %v2464 = vrot.slane %v2456, 7
        %v2465 = vrot.slane %v2457, 7
        %v2466 = vsel %vm1189, %v2463, %v2465
        %v2467 = vrot.slane %v2458, 7
        %v2468 = vsel %vm1189, %v2464, %v2467
        %2475 = vst [vmem:[#allocation5] sm:$0xfe] %v2463
        %2476 = vst [vmem:[#allocation5 + $0x8] sm:$0xfe] %v2464
        %2477 = vst [vmem:[#allocation5 + $0x10] sm:$0xff] %v2466
        %2478 = vst [vmem:[#allocation5 + $0x18] sm:$0xff] %v2468
        %2479 = vst [vmem:[#allocation5 + $0x20] sm:$0x1] %v2465
        %2480 = vst [vmem:[#allocation5 + $0x28] sm:$0x1] %v2467
        %v2481 = vcombine.low %v2455, %v2456
        %v2483 = vunpack.c.l.s4 1966171168
        %v2484 = vunpack.c.0.s8 %v2483
        %v2485 = vlaneseq
        %v2486 = vshrl.u32 %v2485, 7
        %v2487 = vsub.s32 %v2484, %v2486
        %v2488 = vrot.slane %v2481, %v2487
        %v2489 = vcombine.high %v2488, %v2488
        %v2491 = vunpack.c.l.s4 1966171168
        %v2492 = vunpack.c.0.s8 %v2491
        %v2493 = vlaneseq
        %v2494 = vshrl.u32 %v2493, 7
        %v2495 = vsub.s32 %v2492, %v2494
        %v2496 = vrot.slane %v2489, %v2495
        %2498 = vst.msk [vmem:[#allocation5] ss:$8 sm:$0x3] %vm476, %v2496
        %2499 = vst.msk [vmem:[#allocation5] ss:$8 sm:$0x0] %vm476, %v2496
        %v2500 = vcombine.high %v2457, %v2458
        %v2502 = vunpack.c.l.s4 1966171168
        %v2503 = vunpack.c.0.s8 %v2502
        %v2504 = vlaneseq
        %v2505 = vshrl.u32 %v2504, 7
        %v2506 = vsub.s32 %v2503, %v2505
        %v2507 = vrot.slane %v2500, %v2506
        %v2509 = vunpack.c.l.s4 1966171168
        %v2510 = vunpack.c.0.s8 %v2509
        %v2511 = vlaneseq
        %v2512 = vshrl.u32 %v2511, 7
        %v2513 = vsub.s32 %v2510, %v2512
        %v2514 = vrot.slane %v2507, %v2513
        %v2515 = vcombine.high %v2514, %v2514
        %s2517 = scalar_lea.vmem [#allocation5], 33
        %2518 = vst.msk [vmem:[%s2517] ss:$8 sm:$0x3] %vm476, %v2515
        %2519 = vst.msk [vmem:[%s2517] ss:$8 sm:$0x0] %vm476, %v2515
        %v2520 = vld [vmem:[#allocation5] sm:$0xff]
        %v2521 = vld [vmem:[#allocation5 + $0x8] sm:$0xff]
        %v2522 = vld [vmem:[#allocation5 + $0x10] sm:$0xff]
        %v2523 = vld [vmem:[#allocation5 + $0x18] sm:$0xff]
        %v2524 = vld [vmem:[#allocation11] sm:$0xff]
        %v2525 = vld [vmem:[#allocation11 + $0x8] sm:$0xff]
        %v2526 = vld [vmem:[#allocation11 + $0x10] sm:$0xff]
        %v2527 = vld [vmem:[#allocation11 + $0x18] sm:$0xff]
        %v2528 = vld [vmem:[#allocation11 + $0x20] sm:$0xff]
        %v2529 = vld [vmem:[#allocation11 + $0x28] sm:$0xff]
        %v2530 = vld [vmem:[#allocation11 + $0x30] sm:$0xff]
        %v2531 = vld [vmem:[#allocation11 + $0x38] sm:$0xff]
        %v2532 = vld [vmem:[#allocation11 + $0x40] sm:$0xff]
        %v2533 = vld [vmem:[#allocation11 + $0x48] sm:$0xff]
        %v2534 = vld [vmem:[#allocation11 + $0x50] sm:$0xff]
        %v2535 = vld [vmem:[#allocation11 + $0x58] sm:$0xff]
        %v2536 = vld [vmem:[#allocation11 + $0x60] sm:$0xff]
        %v2537 = vld [vmem:[#allocation11 + $0x68] sm:$0xff]
        %v2538 = vld [vmem:[#allocation11 + $0x70] sm:$0xff]
        %v2539 = vld [vmem:[#allocation11 + $0x78] sm:$0xff]
        %v2540 = vld [vmem:[#allocation11 + $0x80] sm:$0xff]
        %v2541 = vld [vmem:[#allocation11 + $0x88] sm:$0xff]
        %v2542 = vld [vmem:[#allocation11 + $0x90] sm:$0xff]
        %v2543 = vld [vmem:[#allocation11 + $0x98] sm:$0xff]
        %v2544 = vld [vmem:[#allocation11 + $0xa0] sm:$0xff]
        %v2545 = vld [vmem:[#allocation11 + $0xa8] sm:$0xff]
        %v2546 = vld [vmem:[#allocation11 + $0xb0] sm:$0xff]
        %v2547 = vld [vmem:[#allocation11 + $0xb8] sm:$0xff]
        %v2548 = vld [vmem:[#allocation11 + $0xc0] sm:$0xff]
        %v2549 = vld [vmem:[#allocation11 + $0xc8] sm:$0xff]
        %v2550 = vld [vmem:[#allocation11 + $0xd0] sm:$0xff]
        %v2551 = vld [vmem:[#allocation11 + $0xd8] sm:$0xff]
        %v2552 = vld [vmem:[#allocation11 + $0xe0] sm:$0xff]
        %v2553 = vld [vmem:[#allocation11 + $0xe8] sm:$0xff]
        %v2554 = vld [vmem:[#allocation11 + $0xf0] sm:$0xff]
        %v2555 = vld [vmem:[#allocation11 + $0xf8] sm:$0xff]
        %v2556 = vld [vmem:[#allocation11 + $0x100] sm:$0xff]
        %v2557 = vld [vmem:[#allocation11 + $0x108] sm:$0xff]
        %v2558 = vld [vmem:[#allocation11 + $0x110] sm:$0xff]
        %v2559 = vld [vmem:[#allocation11 + $0x118] sm:$0xff]
        %v2560 = vld [vmem:[#allocation11 + $0x120] sm:$0xff]
        %v2561 = vld [vmem:[#allocation11 + $0x128] sm:$0xff]
        %v2562 = vld [vmem:[#allocation11 + $0x130] sm:$0xff]
        %v2563 = vld [vmem:[#allocation11 + $0x138] sm:$0xff]
        %v2564 = vld [vmem:[#allocation11 + $0x140] sm:$0xff]
        %v2565 = vld [vmem:[#allocation11 + $0x148] sm:$0xff]
        %v2566 = vld [vmem:[#allocation11 + $0x150] sm:$0xff]
        %v2567 = vld [vmem:[#allocation11 + $0x158] sm:$0xff]
        %v2568 = vld [vmem:[#allocation11 + $0x160] sm:$0xff]
        %v2569 = vld [vmem:[#allocation11 + $0x168] sm:$0xff]
        %v2570 = vld [vmem:[#allocation11 + $0x170] sm:$0xff]
        %v2571 = vld [vmem:[#allocation11 + $0x178] sm:$0xff]
        %v2572 = vld [vmem:[#allocation11 + $0x180] sm:$0xff]
        %v2573 = vld [vmem:[#allocation11 + $0x188] sm:$0xff]
        %v2574 = vld [vmem:[#allocation11 + $0x190] sm:$0xff]
        %v2575 = vld [vmem:[#allocation11 + $0x198] sm:$0xff]
        %v2576 = vld [vmem:[#allocation11 + $0x1a0] sm:$0xff]
        %v2577 = vld [vmem:[#allocation11 + $0x1a8] sm:$0xff]
        %v2578 = vld [vmem:[#allocation11 + $0x1b0] sm:$0xff]
        %v2579 = vld [vmem:[#allocation11 + $0x1b8] sm:$0xff]
        %v2580 = vld [vmem:[#allocation11 + $0x1c0] sm:$0xff]
        %v2581 = vld [vmem:[#allocation11 + $0x1c8] sm:$0xff]
        %v2582 = vld [vmem:[#allocation11 + $0x1d0] sm:$0xff]
        %v2583 = vld [vmem:[#allocation11 + $0x1d8] sm:$0xff]
        %v2584 = vld [vmem:[#allocation11 + $0x1e0] sm:$0xff]
        %v2585 = vld [vmem:[#allocation11 + $0x1e8] sm:$0xff]
        %v2586 = vld [vmem:[#allocation11 + $0x1f0] sm:$0xff]
        %v2587 = vld [vmem:[#allocation11 + $0x1f8] sm:$0xff]
        %v2588 = vld [vmem:[#allocation5] sm:$0xfe]
        %v2589 = vld [vmem:[#allocation5 + $0x8] sm:$0xfe]
        %v2590 = vld [vmem:[#allocation5 + $0x20] sm:$0x1]
        %v2591 = vld [vmem:[#allocation5 + $0x28] sm:$0x1]
        %s2592 = scalar_lea.vmem [#allocation11], 512
        %v2593 = vld [vmem:[%s2592] sm:$0xff]
        %v2594 = vld [vmem:[%s2592 + $0x8] sm:$0xff]
        %v2595 = vld [vmem:[%s2592 + $0x10] sm:$0xff]
        %v2596 = vld [vmem:[%s2592 + $0x18] sm:$0xff]
        %v2597 = vld [vmem:[%s2592 + $0x20] sm:$0xff]
        %v2598 = vld [vmem:[%s2592 + $0x28] sm:$0xff]
        %v2599 = vld [vmem:[%s2592 + $0x30] sm:$0xff]
        %v2600 = vld [vmem:[%s2592 + $0x38] sm:$0xff]
        %v2601 = vld [vmem:[%s2592 + $0x40] sm:$0xff]
        %v2602 = vld [vmem:[%s2592 + $0x48] sm:$0xff]
        %v2603 = vld [vmem:[%s2592 + $0x50] sm:$0xff]
        %v2604 = vld [vmem:[%s2592 + $0x58] sm:$0xff]
        %v2605 = vld [vmem:[%s2592 + $0x60] sm:$0xff]
        %v2606 = vld [vmem:[%s2592 + $0x68] sm:$0xff]
        %v2607 = vld [vmem:[%s2592 + $0x70] sm:$0xff]
        %v2608 = vld [vmem:[%s2592 + $0x78] sm:$0xff]
        %v2609 = vld [vmem:[%s2592 + $0x80] sm:$0xff]
        %v2610 = vld [vmem:[%s2592 + $0x88] sm:$0xff]
        %v2611 = vld [vmem:[%s2592 + $0x90] sm:$0xff]
        %v2612 = vld [vmem:[%s2592 + $0x98] sm:$0xff]
        %v2613 = vld [vmem:[%s2592 + $0xa0] sm:$0xff]
        %v2614 = vld [vmem:[%s2592 + $0xa8] sm:$0xff]
        %v2615 = vld [vmem:[%s2592 + $0xb0] sm:$0xff]
        %v2616 = vld [vmem:[%s2592 + $0xb8] sm:$0xff]
        %v2617 = vld [vmem:[%s2592 + $0xc0] sm:$0xff]
        %v2618 = vld [vmem:[%s2592 + $0xc8] sm:$0xff]
        %v2619 = vld [vmem:[%s2592 + $0xd0] sm:$0xff]
        %v2620 = vld [vmem:[%s2592 + $0xd8] sm:$0xff]
        %v2621 = vld [vmem:[%s2592 + $0xe0] sm:$0xff]
        %v2622 = vld [vmem:[%s2592 + $0xe8] sm:$0xff]
        %v2623 = vld [vmem:[%s2592 + $0xf0] sm:$0xff]
        %v2624 = vld [vmem:[%s2592 + $0xf8] sm:$0xff]
        %v2625 = vld [vmem:[%s2592 + $0x100] sm:$0xff]
        %v2626 = vld [vmem:[%s2592 + $0x108] sm:$0xff]
        %v2627 = vld [vmem:[%s2592 + $0x110] sm:$0xff]
        %v2628 = vld [vmem:[%s2592 + $0x118] sm:$0xff]
        %v2629 = vld [vmem:[%s2592 + $0x120] sm:$0xff]
        %v2630 = vld [vmem:[%s2592 + $0x128] sm:$0xff]
        %v2631 = vld [vmem:[%s2592 + $0x130] sm:$0xff]
        %v2632 = vld [vmem:[%s2592 + $0x138] sm:$0xff]
        %v2633 = vld [vmem:[%s2592 + $0x140] sm:$0xff]
        %v2634 = vld [vmem:[%s2592 + $0x148] sm:$0xff]
        %v2635 = vld [vmem:[%s2592 + $0x150] sm:$0xff]
        %v2636 = vld [vmem:[%s2592 + $0x158] sm:$0xff]
        %v2637 = vld [vmem:[%s2592 + $0x160] sm:$0xff]
        %v2638 = vld [vmem:[%s2592 + $0x168] sm:$0xff]
        %v2639 = vld [vmem:[%s2592 + $0x170] sm:$0xff]
        %v2640 = vld [vmem:[%s2592 + $0x178] sm:$0xff]
        %v2641 = vld [vmem:[%s2592 + $0x180] sm:$0xff]
        %v2642 = vld [vmem:[%s2592 + $0x188] sm:$0xff]
        %v2643 = vld [vmem:[%s2592 + $0x190] sm:$0xff]
        %v2644 = vld [vmem:[%s2592 + $0x198] sm:$0xff]
        %v2645 = vld [vmem:[%s2592 + $0x1a0] sm:$0xff]
        %v2646 = vld [vmem:[%s2592 + $0x1a8] sm:$0xff]
        %v2647 = vld [vmem:[%s2592 + $0x1b0] sm:$0xff]
        %v2648 = vld [vmem:[%s2592 + $0x1b8] sm:$0xff]
        %v2649 = vld [vmem:[%s2592 + $0x1c0] sm:$0xff]
        %v2650 = vld [vmem:[%s2592 + $0x1c8] sm:$0xff]
        %v2651 = vld [vmem:[%s2592 + $0x1d0] sm:$0xff]
        %v2652 = vld [vmem:[%s2592 + $0x1d8] sm:$0xff]
        %v2653 = vld [vmem:[%s2592 + $0x1e0] sm:$0xff]
        %v2654 = vld [vmem:[%s2592 + $0x1e8] sm:$0xff]
        %v2655 = vld [vmem:[%s2592 + $0x1f0] sm:$0xff]
        %v2656 = vld [vmem:[%s2592 + $0x1f8] sm:$0xff]
        %v2663 = vrot.slane %v2588, 1
        %v2664 = vrot.slane %v2522, 1
        %v2665 = vsel %vm658, %v2663, %v2664
        %v2666 = vrot.slane %v2589, 1
        %v2667 = vrot.slane %v2523, 1
        %v2668 = vsel %vm658, %v2666, %v2667
        %v2669 = vrot.slane %v2590, 1
        %v2670 = vsel %vm658, %v2664, %v2669
        %v2671 = vrot.slane %v2591, 1
        %v2672 = vsel %vm658, %v2667, %v2671
        %2677 = vmatprep.subr.mxu0 %v2624
        %2678 = vmatpush1.msra.mxu0 %v2623
        %2679 = vmatprep.subr.mxu0 %v2622
        %2680 = vmatpush1.msra.mxu0 %v2621
        %2681 = vmatprep.subr.mxu0 %v2620
        %2682 = vmatpush1.msra.mxu0 %v2619
        %2683 = vmatprep.subr.mxu0 %v2618
        %2684 = vmatpush1.msra.mxu0 %v2617
        %2685 = vmatprep.subr.mxu0 %v2616
        %2686 = vmatpush1.msra.mxu0 %v2615
        %2687 = vmatprep.subr.mxu0 %v2614
        %2688 = vmatpush1.msra.mxu0 %v2613
        %2689 = vmatprep.subr.mxu0 %v2612
        %2690 = vmatpush1.msra.mxu0 %v2611
        %2691 = vmatprep.subr.mxu0 %v2610
        %2692 = vmatpush1.msra.mxu0 %v2609
        %2693 = vmatprep.subr.mxu0 %v2608
        %2694 = vmatpush1.msra.mxu0 %v2607
        %2695 = vmatprep.subr.mxu0 %v2606
        %2696 = vmatpush1.msra.mxu0 %v2605
        %2697 = vmatprep.subr.mxu0 %v2604
        %2698 = vmatpush1.msra.mxu0 %v2603
        %2699 = vmatprep.subr.mxu0 %v2602
        %2700 = vmatpush1.msra.mxu0 %v2601
        %2701 = vmatprep.subr.mxu0 %v2600
        %2702 = vmatpush1.msra.mxu0 %v2599
        %2703 = vmatprep.subr.mxu0 %v2598
        %2704 = vmatpush1.msra.mxu0 %v2597
        %2705 = vmatprep.subr.mxu0 %v2596
        %2706 = vmatpush1.msra.mxu0 %v2595
        %2707 = vmatprep.subr.mxu0 %v2594
        %2708 = vmatpush1.msra.mxu0 %v2593
        %2709 = vmatprep.subr.mxu0 %v2656
        %2710 = vmatpush2.msra.mxu0 %v2655
        %2711 = vmatprep.subr.mxu0 %v2654
        %2712 = vmatpush2.msra.mxu0 %v2653
        %2713 = vmatprep.subr.mxu0 %v2652
        %2714 = vmatpush2.msra.mxu0 %v2651
        %2715 = vmatprep.subr.mxu0 %v2650
        %2716 = vmatpush2.msra.mxu0 %v2649
        %2717 = vmatprep.subr.mxu0 %v2648
        %2718 = vmatpush2.msra.mxu0 %v2647
        %2719 = vmatprep.subr.mxu0 %v2646
        %2720 = vmatpush2.msra.mxu0 %v2645
        %2721 = vmatprep.subr.mxu0 %v2644
        %2722 = vmatpush2.msra.mxu0 %v2643
        %2723 = vmatprep.subr.mxu0 %v2642
        %2724 = vmatpush2.msra.mxu0 %v2641
        %2725 = vmatprep.subr.mxu0 %v2640
        %2726 = vmatpush2.msra.mxu0 %v2639
        %2727 = vmatprep.subr.mxu0 %v2638
        %2728 = vmatpush2.msra.mxu0 %v2637
        %2729 = vmatprep.subr.mxu0 %v2636
        %2730 = vmatpush2.msra.mxu0 %v2635
        %2731 = vmatprep.subr.mxu0 %v2634
        %2732 = vmatpush2.msra.mxu0 %v2633
        %2733 = vmatprep.subr.mxu0 %v2632
        %2734 = vmatpush2.msra.mxu0 %v2631
        %2735 = vmatprep.subr.mxu0 %v2630
        %2736 = vmatpush2.msra.mxu0 %v2629
        %2737 = vmatprep.subr.mxu0 %v2628
        %2738 = vmatpush2.msra.mxu0 %v2627
        %2739 = vmatprep.subr.mxu0 %v2626
        %2740 = vmatpush2.msra.mxu0 %v2625
        %2741 = vmatprep.mubr.f32.mxu0 %v2668
        %2742 = vmatmul.mubr.f32.gmra.mxu0 %v2665
        %v2743 = vpop.f32.mrf.mxu0
        %v2744 = vadd.f32 0.0, %v2743
        %v2745 = vpop.f32.mrf.mxu0
        %v2746 = vadd.f32 0.0, %v2745
        %2747 = vmatprep.mubr.f32.mxu0 %v2672
        %2748 = vmatmul.mubr.f32.gmra.mxu0 %v2670
        %v2749 = vpop.f32.mrf.mxu0
        %v2750 = vadd.f32 0.0, %v2749
        %v2751 = vpop.f32.mrf.mxu0
        %v2752 = vadd.f32 0.0, %v2751
        %2753 = vdwg.mxu0
        %2754 = vmatprep.subr.mxu0 %v2555
        %2755 = vmatpush1.msra.mxu0 %v2554
        %2756 = vmatprep.subr.mxu0 %v2553
        %2757 = vmatpush1.msra.mxu0 %v2552
        %2758 = vmatprep.subr.mxu0 %v2551
        %2759 = vmatpush1.msra.mxu0 %v2550
        %2760 = vmatprep.subr.mxu0 %v2549
        %2761 = vmatpush1.msra.mxu0 %v2548
        %2762 = vmatprep.subr.mxu0 %v2547
        %2763 = vmatpush1.msra.mxu0 %v2546
        %2764 = vmatprep.subr.mxu0 %v2545
        %2765 = vmatpush1.msra.mxu0 %v2544
        %2766 = vmatprep.subr.mxu0 %v2543
        %2767 = vmatpush1.msra.mxu0 %v2542
        %2768 = vmatprep.subr.mxu0 %v2541
        %2769 = vmatpush1.msra.mxu0 %v2540
        %2770 = vmatprep.subr.mxu0 %v2539
        %2771 = vmatpush1.msra.mxu0 %v2538
        %2772 = vmatprep.subr.mxu0 %v2537
        %2773 = vmatpush1.msra.mxu0 %v2536
        %2774 = vmatprep.subr.mxu0 %v2535
        %2775 = vmatpush1.msra.mxu0 %v2534
        %2776 = vmatprep.subr.mxu0 %v2533
        %2777 = vmatpush1.msra.mxu0 %v2532
        %2778 = vmatprep.subr.mxu0 %v2531
        %2779 = vmatpush1.msra.mxu0 %v2530
        %2780 = vmatprep.subr.mxu0 %v2529
        %2781 = vmatpush1.msra.mxu0 %v2528
        %2782 = vmatprep.subr.mxu0 %v2527
        %2783 = vmatpush1.msra.mxu0 %v2526
        %2784 = vmatprep.subr.mxu0 %v2525
        %2785 = vmatpush1.msra.mxu0 %v2524
        %2786 = vmatprep.subr.mxu0 %v2587
        %2787 = vmatpush2.msra.mxu0 %v2586
        %2788 = vmatprep.subr.mxu0 %v2585
        %2789 = vmatpush2.msra.mxu0 %v2584
        %2790 = vmatprep.subr.mxu0 %v2583
        %2791 = vmatpush2.msra.mxu0 %v2582
        %2792 = vmatprep.subr.mxu0 %v2581
        %2793 = vmatpush2.msra.mxu0 %v2580
        %2794 = vmatprep.subr.mxu0 %v2579
        %2795 = vmatpush2.msra.mxu0 %v2578
        %2796 = vmatprep.subr.mxu0 %v2577
        %2797 = vmatpush2.msra.mxu0 %v2576
        %2798 = vmatprep.subr.mxu0 %v2575
        %2799 = vmatpush2.msra.mxu0 %v2574
        %2800 = vmatprep.subr.mxu0 %v2573
        %2801 = vmatpush2.msra.mxu0 %v2572
        %2802 = vmatprep.subr.mxu0 %v2571
        %2803 = vmatpush2.msra.mxu0 %v2570
        %2804 = vmatprep.subr.mxu0 %v2569
        %2805 = vmatpush2.msra.mxu0 %v2568
        %2806 = vmatprep.subr.mxu0 %v2567
        %2807 = vmatpush2.msra.mxu0 %v2566
        %2808 = vmatprep.subr.mxu0 %v2565
        %2809 = vmatpush2.msra.mxu0 %v2564
        %2810 = vmatprep.subr.mxu0 %v2563
        %2811 = vmatpush2.msra.mxu0 %v2562
        %2812 = vmatprep.subr.mxu0 %v2561
        %2813 = vmatpush2.msra.mxu0 %v2560
        %2814 = vmatprep.subr.mxu0 %v2559
        %2815 = vmatpush2.msra.mxu0 %v2558
        %2816 = vmatprep.subr.mxu0 %v2557
        %2817 = vmatpush2.msra.mxu0 %v2556
        %2818 = vmatprep.mubr.f32.mxu0 %v2521
        %2819 = vmatmul.mubr.f32.gmra.mxu0 %v2520
        %v2820 = vpop.f32.mrf.mxu0
        %v2821 = vadd.f32 %v2744, %v2820
        %v2822 = vpop.f32.mrf.mxu0
        %v2823 = vadd.f32 %v2746, %v2822
        %2824 = vmatprep.mubr.f32.mxu0 %v2523
        %2825 = vmatmul.mubr.f32.gmra.mxu0 %v2522
        %v2826 = vpop.f32.mrf.mxu0
        %v2827 = vadd.f32 %v2750, %v2826
        %v2828 = vpop.f32.mrf.mxu0
        %v2829 = vadd.f32 %v2752, %v2828
        %2830 = vdwg.mxu0
        %v2831 = vld [vmem:[#allocation5] sm:$0xfc]
        %v2832 = vld [vmem:[#allocation5 + $0x8] sm:$0xfc]
        %v2833 = vld [vmem:[#allocation5 + $0x20] sm:$0x3]
        %v2834 = vld [vmem:[#allocation5 + $0x28] sm:$0x3]
        %s2835 = scalar_lea.vmem [#allocation11], 1024
        %v2836 = vld [vmem:[%s2835] sm:$0xff]
        %v2837 = vld [vmem:[%s2835 + $0x8] sm:$0xff]
        %v2838 = vld [vmem:[%s2835 + $0x10] sm:$0xff]
        %v2839 = vld [vmem:[%s2835 + $0x18] sm:$0xff]
        %v2840 = vld [vmem:[%s2835 + $0x20] sm:$0xff]
        %v2841 = vld [vmem:[%s2835 + $0x28] sm:$0xff]
        %v2842 = vld [vmem:[%s2835 + $0x30] sm:$0xff]
        %v2843 = vld [vmem:[%s2835 + $0x38] sm:$0xff]
        %v2844 = vld [vmem:[%s2835 + $0x40] sm:$0xff]
        %v2845 = vld [vmem:[%s2835 + $0x48] sm:$0xff]
        %v2846 = vld [vmem:[%s2835 + $0x50] sm:$0xff]
        %v2847 = vld [vmem:[%s2835 + $0x58] sm:$0xff]
        %v2848 = vld [vmem:[%s2835 + $0x60] sm:$0xff]
        %v2849 = vld [vmem:[%s2835 + $0x68] sm:$0xff]
        %v2850 = vld [vmem:[%s2835 + $0x70] sm:$0xff]
        %v2851 = vld [vmem:[%s2835 + $0x78] sm:$0xff]
        %v2852 = vld [vmem:[%s2835 + $0x80] sm:$0xff]
        %v2853 = vld [vmem:[%s2835 + $0x88] sm:$0xff]
        %v2854 = vld [vmem:[%s2835 + $0x90] sm:$0xff]
        %v2855 = vld [vmem:[%s2835 + $0x98] sm:$0xff]
        %v2856 = vld [vmem:[%s2835 + $0xa0] sm:$0xff]
        %v2857 = vld [vmem:[%s2835 + $0xa8] sm:$0xff]
        %v2858 = vld [vmem:[%s2835 + $0xb0] sm:$0xff]
        %v2859 = vld [vmem:[%s2835 + $0xb8] sm:$0xff]
        %v2860 = vld [vmem:[%s2835 + $0xc0] sm:$0xff]
        %v2861 = vld [vmem:[%s2835 + $0xc8] sm:$0xff]
        %v2862 = vld [vmem:[%s2835 + $0xd0] sm:$0xff]
        %v2863 = vld [vmem:[%s2835 + $0xd8] sm:$0xff]
        %v2864 = vld [vmem:[%s2835 + $0xe0] sm:$0xff]
        %v2865 = vld [vmem:[%s2835 + $0xe8] sm:$0xff]
        %v2866 = vld [vmem:[%s2835 + $0xf0] sm:$0xff]
        %v2867 = vld [vmem:[%s2835 + $0xf8] sm:$0xff]
        %v2868 = vld [vmem:[%s2835 + $0x100] sm:$0xff]
        %v2869 = vld [vmem:[%s2835 + $0x108] sm:$0xff]
        %v2870 = vld [vmem:[%s2835 + $0x110] sm:$0xff]
        %v2871 = vld [vmem:[%s2835 + $0x118] sm:$0xff]
        %v2872 = vld [vmem:[%s2835 + $0x120] sm:$0xff]
        %v2873 = vld [vmem:[%s2835 + $0x128] sm:$0xff]
        %v2874 = vld [vmem:[%s2835 + $0x130] sm:$0xff]
        %v2875 = vld [vmem:[%s2835 + $0x138] sm:$0xff]
        %v2876 = vld [vmem:[%s2835 + $0x140] sm:$0xff]
        %v2877 = vld [vmem:[%s2835 + $0x148] sm:$0xff]
        %v2878 = vld [vmem:[%s2835 + $0x150] sm:$0xff]
        %v2879 = vld [vmem:[%s2835 + $0x158] sm:$0xff]
        %v2880 = vld [vmem:[%s2835 + $0x160] sm:$0xff]
        %v2881 = vld [vmem:[%s2835 + $0x168] sm:$0xff]
        %v2882 = vld [vmem:[%s2835 + $0x170] sm:$0xff]
        %v2883 = vld [vmem:[%s2835 + $0x178] sm:$0xff]
        %v2884 = vld [vmem:[%s2835 + $0x180] sm:$0xff]
        %v2885 = vld [vmem:[%s2835 + $0x188] sm:$0xff]
        %v2886 = vld [vmem:[%s2835 + $0x190] sm:$0xff]
        %v2887 = vld [vmem:[%s2835 + $0x198] sm:$0xff]
        %v2888 = vld [vmem:[%s2835 + $0x1a0] sm:$0xff]
        %v2889 = vld [vmem:[%s2835 + $0x1a8] sm:$0xff]
        %v2890 = vld [vmem:[%s2835 + $0x1b0] sm:$0xff]
        %v2891 = vld [vmem:[%s2835 + $0x1b8] sm:$0xff]
        %v2892 = vld [vmem:[%s2835 + $0x1c0] sm:$0xff]
        %v2893 = vld [vmem:[%s2835 + $0x1c8] sm:$0xff]
        %v2894 = vld [vmem:[%s2835 + $0x1d0] sm:$0xff]
        %v2895 = vld [vmem:[%s2835 + $0x1d8] sm:$0xff]
        %v2896 = vld [vmem:[%s2835 + $0x1e0] sm:$0xff]
        %v2897 = vld [vmem:[%s2835 + $0x1e8] sm:$0xff]
        %v2898 = vld [vmem:[%s2835 + $0x1f0] sm:$0xff]
        %v2899 = vld [vmem:[%s2835 + $0x1f8] sm:$0xff]
        %v2904 = vrot.slane %v2831, 2
        %v2905 = vrot.slane %v2522, 2
        %v2906 = vsel %vm900, %v2904, %v2905
        %v2907 = vrot.slane %v2832, 2
        %v2908 = vrot.slane %v2523, 2
        %v2909 = vsel %vm900, %v2907, %v2908
        %v2910 = vrot.slane %v2833, 2
        %v2911 = vsel %vm900, %v2905, %v2910
        %v2912 = vrot.slane %v2834, 2
        %v2913 = vsel %vm900, %v2908, %v2912
        %2918 = vmatprep.subr.mxu0 %v2867
        %2919 = vmatpush1.msra.mxu0 %v2866
        %2920 = vmatprep.subr.mxu0 %v2865
        %2921 = vmatpush1.msra.mxu0 %v2864
        %2922 = vmatprep.subr.mxu0 %v2863
        %2923 = vmatpush1.msra.mxu0 %v2862
        %2924 = vmatprep.subr.mxu0 %v2861
        %2925 = vmatpush1.msra.mxu0 %v2860
        %2926 = vmatprep.subr.mxu0 %v2859
        %2927 = vmatpush1.msra.mxu0 %v2858
        %2928 = vmatprep.subr.mxu0 %v2857
        %2929 = vmatpush1.msra.mxu0 %v2856
        %2930 = vmatprep.subr.mxu0 %v2855
        %2931 = vmatpush1.msra.mxu0 %v2854
        %2932 = vmatprep.subr.mxu0 %v2853
        %2933 = vmatpush1.msra.mxu0 %v2852
        %2934 = vmatprep.subr.mxu0 %v2851
        %2935 = vmatpush1.msra.mxu0 %v2850
        %2936 = vmatprep.subr.mxu0 %v2849
        %2937 = vmatpush1.msra.mxu0 %v2848
        %2938 = vmatprep.subr.mxu0 %v2847
        %2939 = vmatpush1.msra.mxu0 %v2846
        %2940 = vmatprep.subr.mxu0 %v2845
        %2941 = vmatpush1.msra.mxu0 %v2844
        %2942 = vmatprep.subr.mxu0 %v2843
        %2943 = vmatpush1.msra.mxu0 %v2842
        %2944 = vmatprep.subr.mxu0 %v2841
        %2945 = vmatpush1.msra.mxu0 %v2840
        %2946 = vmatprep.subr.mxu0 %v2839
        %2947 = vmatpush1.msra.mxu0 %v2838
        %2948 = vmatprep.subr.mxu0 %v2837
        %2949 = vmatpush1.msra.mxu0 %v2836
        %2950 = vmatprep.subr.mxu0 %v2899
        %2951 = vmatpush2.msra.mxu0 %v2898
        %2952 = vmatprep.subr.mxu0 %v2897
        %2953 = vmatpush2.msra.mxu0 %v2896
        %2954 = vmatprep.subr.mxu0 %v2895
        %2955 = vmatpush2.msra.mxu0 %v2894
        %2956 = vmatprep.subr.mxu0 %v2893
        %2957 = vmatpush2.msra.mxu0 %v2892
        %2958 = vmatprep.subr.mxu0 %v2891
        %2959 = vmatpush2.msra.mxu0 %v2890
        %2960 = vmatprep.subr.mxu0 %v2889
        %2961 = vmatpush2.msra.mxu0 %v2888
        %2962 = vmatprep.subr.mxu0 %v2887
        %2963 = vmatpush2.msra.mxu0 %v2886
        %2964 = vmatprep.subr.mxu0 %v2885
        %2965 = vmatpush2.msra.mxu0 %v2884
        %2966 = vmatprep.subr.mxu0 %v2883
        %2967 = vmatpush2.msra.mxu0 %v2882
        %2968 = vmatprep.subr.mxu0 %v2881
        %2969 = vmatpush2.msra.mxu0 %v2880
        %2970 = vmatprep.subr.mxu0 %v2879
        %2971 = vmatpush2.msra.mxu0 %v2878
        %2972 = vmatprep.subr.mxu0 %v2877
        %2973 = vmatpush2.msra.mxu0 %v2876
        %2974 = vmatprep.subr.mxu0 %v2875
        %2975 = vmatpush2.msra.mxu0 %v2874
        %2976 = vmatprep.subr.mxu0 %v2873
        %2977 = vmatpush2.msra.mxu0 %v2872
        %2978 = vmatprep.subr.mxu0 %v2871
        %2979 = vmatpush2.msra.mxu0 %v2870
        %2980 = vmatprep.subr.mxu0 %v2869
        %2981 = vmatpush2.msra.mxu0 %v2868
        %2982 = vmatprep.mubr.f32.mxu0 %v2909
        %2983 = vmatmul.mubr.f32.gmra.mxu0 %v2906
        %v2984 = vpop.f32.mrf.mxu0
        %v2985 = vadd.f32 0.0, %v2984
        %v2986 = vpop.f32.mrf.mxu0
        %v2987 = vadd.f32 0.0, %v2986
        %2988 = vmatprep.mubr.f32.mxu0 %v2913
        %2989 = vmatmul.mubr.f32.gmra.mxu0 %v2911
        %v2990 = vpop.f32.mrf.mxu0
        %v2991 = vadd.f32 0.0, %v2990
        %v2992 = vpop.f32.mrf.mxu0
        %v2993 = vadd.f32 0.0, %v2992
        %2994 = vdwg.mxu0
        %v2995 = vadd.f32 %v2821, %v2985
        %v2996 = vadd.f32 %v2823, %v2987
        %v2997 = vadd.f32 %v2827, %v2991
        %v2998 = vadd.f32 %v2829, %v2993
        %v2999 = vld [vmem:[%s10] sm:$0x3]
        %v3001 = vlaneseq
        %v3002 = vshrl.u32 %v3001, 7
        %v3003 = vsub.s32 0, %v3002
        %v3004 = vrot.slane %v2999, %v3003
        %v3005 = vlaneseq
        %v3006 = vshrl.u32 %v3005, 7
        %v3007 = vsub.s32 1, %v3006
        %v3008 = vrot.slane %v2999, %v3007
        %v3011 = vadd.f32 %v2995, %v3004
        %v3012 = vadd.f32 %v2996, %v3008
        %v3013 = vadd.f32 %v2997, %v3004
        %v3014 = vadd.f32 %v2998, %v3008
        %v3015 = vmax.f32 %v3011, 0.0
        %v3016 = vmax.f32 %v3012, 0.0
        %v3017 = vmax.f32 %v3013, 0.0
        %v3018 = vmax.f32 %v3014, 0.0
        %v3019 = vadd.f32 %v2455, %v3015
        %v3020 = vadd.f32 %v2456, %v3016
        %v3021 = vadd.f32 %v2457, %v3017
        %v3022 = vadd.f32 %v2458, %v3018
        %3023 = vst [vmem:[%s465] sm:$0xff] %v3019
        %3024 = vst [vmem:[%s465 + $0x8] sm:$0xff] %v3020
        %3025 = vst [vmem:[%s465 + $0x10] sm:$0xff] %v3021
        %3026 = vst [vmem:[%s465 + $0x18] sm:$0xff] %v3022
        %p3027 = scmp.lt.s32.totalorder %s25, 1
        %s3028 = scalar_select %p3027, %s25, 1
        %s3029 = smul.addr %s3028, 4
        %s3030 = smul.addr %s3029, 8
        %s3031 = scalar_lea.vmem %s11, %s3030
        // Predicated region
        $region81: #{upconv_block_apply.1} parent=63 // pred_check
          %p3032 = pneg %p284
        $region82: #{upconv_block_apply.1} parent=63 // pred_check_branch
          %3034 = sbr.rel (%p3032) target = $region84
        $region83: #{upconv_block_apply.1} parent=63 // pred_region
          _
        $region84: #{upconv_block_apply.1} parent=63 // pred_fallthru
          _
      $region64: #{upconv_block_apply.1} parent=5 // pred_fallthru
        _
      %p3035 = scmp.le.s32.totalorder 2, %s20
      // Predicated region
      $region85: #{upconv_block_apply.1} parent=5 // pred_check
        %p3036 = pneg %p3035
      $region86: #{upconv_block_apply.1} parent=5 // pred_check_branch
        %3038 = sbr.rel (%p3036) target = $region88
      $region87: #{upconv_block_apply.1} parent=5 // pred_region
        %s3039 = ssub.s32 %s20, 2
        // Predicated region
        $region89: #{upconv_block_apply.1} parent=87 // pred_check
          %p3040 = pneg %p290
        $region90: #{upconv_block_apply.1} parent=87 // pred_check_branch
          %3042 = sbr.rel (%p3040) target = $region92
        $region91: #{upconv_block_apply.1} parent=87 // pred_region
          %p3043 = scmp.lt.s32.totalorder %s26, 1
          %s3044 = scalar_select %p3043, %s26, 1
          %s3045 = smul.addr %s3044, 4
          %s3046 = smul.addr %s3045, 8
          %s3047 = scalar_lea.vmem %s11, %s3046
        $region92: #{upconv_block_apply.1} parent=87 // pred_fallthru
          _
      $region88: #{upconv_block_apply.1} parent=5 // pred_fallthru
        _
    $region6: #{upconv_block_apply.1} parent=1 // loop_footer
      %s24 = sadd.s32 1, %s20
    $region7: #{upconv_block_apply.1} parent=1 // loop_footer_branch
      %19 = sbr.rel target = $region3
    $region8: #{upconv_block_apply.1} parent=1 // loop_exit
      _
    %3048 = vsyncpa [#allocation7], 1
    %s3049 = scalar_lea.sflag [#allocation7], 1
    %3050 = vsyncpa %s3049, 1
    %3051 = vsyncpa [#allocation9], 1
    %3052 = vsyncpa [#allocation12], 1

</llo_original>
